<compile_context>
chip_gen: v7x
topology: tpu7x:2x2x1
jax: 0.10.0
libtpu: 0.0.40
codegen_flags: <defaults>
</compile_context>

<pallas_src>
import math
import functools

import jax
import jax.numpy as jnp
from jax.experimental import pallas as pl
from jax.experimental.pallas import tpu as pltpu

# ----------------------------- configuration -----------------------------
B = 2                     # batch
C_IN = 3                  # image channels
H_IMG = W_IMG = 16        # image spatial
PATCH = 4                 # patch-embed stride (stand-in for mobilenet's /32)
HF = WF = H_IMG // PATCH  # feature map spatial (4x4)
C_FEAT = 128              # feature channels (stand-in for 1280, lane-dense)
HIDDEN_RPN = 128          # ProposalModule hidden_dim (stand-in for 256)
NUM_ANCHORS = 9
RPN_OUT = 6 * NUM_ANCHORS          # 54
RPN_OUT_PAD = 128                  # lane-dense padded RPN head output
NUM_CLASSES = 8           # (stand-in for 20)
HIDDEN_CLS = 128          # region_classification hidden_dim (stand-in for 256)
N_GT = 2                  # GT boxes per image
ANC_PER_IMG = HF * WF * NUM_ANCHORS
PATCH_K = C_IN * PATCH * PATCH     # 48

VMEM = pl.BlockSpec(memory_space=pltpu.MemorySpace.VMEM)
SMEM = pl.BlockSpec(memory_space=pltpu.MemorySpace.SMEM)


# ------------------------------ Pallas kernels ----------------------------
def rpn_fused_kernel(xpad_ref, wp_ref, bp_ref, w1_ref, b1_ref, w2_ref, b2_ref,
                     fpad_ref, pred_ref):
    # Fused stand-in feature extractor + ProposalModule.base for ONE image.
    #  - xpad_ref : [1, HF+2, WF+2, PATCH_K]  zero-padded 4x4x3 patches (f32)
    #  - fpad_ref : [1, HF+2, WF+2, C_FEAT]   zero-padded feature map (output)
    #  - pred_ref : [1, HF, WF, RPN_OUT_PAD]  RPN head predictions (output)
    # The padded feature map is built directly in the output VMEM buffer; the
    # conv3x3 reads its 9 shifted windows back out of it (in-kernel im2col).
    col = jax.lax.broadcasted_iota(jnp.int32, (WF + 2, 1), 0)
    bias_mask = jnp.where((col >= 1) & (col <= WF), 1.0, 0.0)        # [WF+2, 1]
    zeros_row = jnp.zeros((WF + 2, C_FEAT), jnp.float32)

    # --- patch embed: one bf16 matmul per padded feature row (borders stay 0) ---
    fpad_ref[0, 0, :, :] = zeros_row
    fpad_ref[0, HF + 1, :, :] = zeros_row
    for r in range(1, HF + 1):
        xr = xpad_ref[0, r, :, :].astype(jnp.bfloat16)               # [WF+2, PATCH_K]
        fpad_ref[0, r, :, :] = (
            jnp.dot(xr, wp_ref[...], preferred_element_type=jnp.float32)
            + bp_ref[...] * bias_mask)                               # bias only interior

    # --- ProposalModule.base: Conv3x3 -> Dropout -> LeakyReLU -> Conv1x1 ---
    # TODO(synk): Dropout(p=0.3) is identity here (eval semantics, no RNG mask).
    for h in range(HF):
        # lane-concat the 9 shifted taps -> one K=9*C_FEAT matmul per row
        taps = [fpad_ref[0, h + dy, dx:dx + WF, :]
                for dy in range(3) for dx in range(3)]               # 9 x [WF, C_FEAT]
        xcat = jnp.concatenate(taps, axis=-1).astype(jnp.bfloat16)   # [WF, 9*C_FEAT]
        hid = (jnp.dot(xcat, w1_ref[...], preferred_element_type=jnp.float32)
               + b1_ref[...])
        hid = jnp.where(hid > 0, hid, 0.01 * hid)                    # LeakyReLU(0.01), f32
        out = (jnp.dot(hid.astype(jnp.bfloat16), w2_ref[...],
                       preferred_element_type=jnp.float32) + b2_ref[...])
        pred_ref[0, h, :, :] = out                                   # lane-dense 128 store


def head_loss_kernel(conf_ref, off_ref, gtoff_ref, roi_ref, lbl_ref,
                     w1, b1, w2, b2, w3, b3, w4, b4, o_ref,
                     *, batch_size, m_pos, w_conf, w_reg):
    # Fused second stage + all three losses (single launch, single SMEM scalar out).
    # region_classification: Linear/ReLU x3 -> Linear (dropouts are identity).
    x = roi_ref[...].astype(jnp.bfloat16)
    h = jnp.maximum(jnp.dot(x, w1[...], preferred_element_type=jnp.float32)
                    + b1[...], 0.0)
    h = jnp.maximum(jnp.dot(h.astype(jnp.bfloat16), w2[...],
                            preferred_element_type=jnp.float32) + b2[...], 0.0)
    h = jnp.maximum(jnp.dot(h.astype(jnp.bfloat16), w3[...],
                            preferred_element_type=jnp.float32) + b3[...], 0.0)
    logits = (jnp.dot(h.astype(jnp.bfloat16), w4[...],
                      preferred_element_type=jnp.float32) + b4[...])   # [M, NUM_CLASSES]

    # F.cross_entropy(sum) / M — labels read from SMEM (scalar path).
    mx = jnp.max(logits, axis=-1, keepdims=True)
    lse = mx + jnp.log(jnp.sum(jnp.exp(logits - mx), axis=-1, keepdims=True))
    row = jax.lax.broadcasted_iota(jnp.int32, logits.shape, 0)
    col = jax.lax.broadcasted_iota(jnp.int32, logits.shape, 1)
    onehot = jnp.zeros(logits.shape, jnp.float32)
    for i in range(m_pos):
        onehot = onehot + jnp.where((row == i) & (col == lbl_ref[i]), 1.0, 0.0)
    cls_loss = (jnp.sum(lse) - jnp.sum(logits * onehot)) / float(m_pos)

    # ConfScoreRegression: BCE-with-logits(sum) / batch_size, GT built in-kernel.
    s = conf_ref[...]                                      # [2M, 2]
    crow = jax.lax.broadcasted_iota(jnp.int32, s.shape, 0)
    ccol = jax.lax.broadcasted_iota(jnp.int32, s.shape, 1)
    gt = jnp.where((crow < m_pos) & (ccol == 0), 1.0,
                   jnp.where((crow >= m_pos) & (ccol == 1), 1.0, 0.0))
    bce = jnp.maximum(s, 0.0) - s * gt + jnp.log1p(jnp.exp(-jnp.abs(s)))
    conf_loss = jnp.sum(bce) / batch_size

    # BboxRegression: smooth_l1(sum) / batch_size.
    d = off_ref[...] - gtoff_ref[...]
    ad = jnp.abs(d)
    reg_loss = jnp.sum(jnp.where(ad < 1.0, 0.5 * d * d, ad - 0.5)) / batch_size

    o_ref[0, 0] = w_conf * conf_loss + w_reg * reg_loss + cls_loss


# ------------------------------ Pallas wrappers ----------------------------
def rpn_fused(patches_pad, params):
    # patches_pad: [B, HF+2, WF+2, PATCH_K] f32 (zero border rows)
    # returns: padded features [B, HF+2, WF+2, C_FEAT] f32,
    #          RPN predictions [B, HF, WF, RPN_OUT_PAD] f32
    bsz = patches_pad.shape[0]
    return pl.pallas_call(
        rpn_fused_kernel,
        out_shape=(
            jax.ShapeDtypeStruct((bsz, HF + 2, WF + 2, C_FEAT), jnp.float32),
            jax.ShapeDtypeStruct((bsz, HF, WF, RPN_OUT_PAD), jnp.float32),
        ),
        grid=(bsz,),
        in_specs=[
            pl.BlockSpec((1, HF + 2, WF + 2, PATCH_K), lambda b: (b, 0, 0, 0)),
            pl.BlockSpec((PATCH_K, C_FEAT), lambda b: (0, 0)),
            pl.BlockSpec((1, C_FEAT), lambda b: (0, 0)),
            pl.BlockSpec((9 * C_FEAT, HIDDEN_RPN), lambda b: (0, 0)),
            pl.BlockSpec((1, HIDDEN_RPN), lambda b: (0, 0)),
            pl.BlockSpec((HIDDEN_RPN, RPN_OUT_PAD), lambda b: (0, 0)),
            pl.BlockSpec((1, RPN_OUT_PAD), lambda b: (0, 0)),
        ],
        out_specs=[
            pl.BlockSpec((1, HF + 2, WF + 2, C_FEAT), lambda b: (b, 0, 0, 0)),
            pl.BlockSpec((1, HF, WF, RPN_OUT_PAD), lambda b: (b, 0, 0, 0)),
        ],
        compiler_params=pltpu.CompilerParams(dimension_semantics=("parallel",)),
    )(patches_pad, params['wp'], params['bp'],
      params['rpn_w1'], params['rpn_b1'], params['rpn_w2'], params['rpn_b2'])


def fused_region_cls_and_losses(conf_scores, offsets, gt_offsets, roi_feature,
                                gt_class, params, batch_size, m):
    kernel = functools.partial(head_loss_kernel, batch_size=float(batch_size),
                               m_pos=int(m), w_conf=1.0, w_reg=5.0)
    out = pl.pallas_call(
        kernel,
        out_shape=jax.ShapeDtypeStruct((1, 1), jnp.float32),
        in_specs=[VMEM, VMEM, VMEM, VMEM, SMEM] + [VMEM] * 8,
        out_specs=SMEM,
    )(conf_scores, offsets, gt_offsets, roi_feature, gt_class,
      params['cls_w1'], params['cls_b1'], params['cls_w2'], params['cls_b2'],
      params['cls_w3'], params['cls_b3'], params['cls_w4'], params['cls_b4'])
    return out[0, 0]


# ------------------------------ JAX glue ---------------------------------
def generate_anchors(anchor_list, bsz):
    # (h, w, a) ordering so the flat anchor index matches the NHWC predictions.
    ys = jnp.arange(HF, dtype=jnp.float32) + 0.5
    xs = jnp.arange(WF, dtype=jnp.float32) + 0.5
    yy, xx = jnp.meshgrid(ys, xs, indexing='ij')               # [HF, WF]
    aw = anchor_list[:, 0][None, None, :]
    ah = anchor_list[:, 1][None, None, :]
    x1 = xx[..., None] - aw / 2
    y1 = yy[..., None] - ah / 2
    x2 = xx[..., None] + aw / 2
    y2 = yy[..., None] + ah / 2
    anc = jnp.stack([x1, y1, x2, y2], axis=-1)                 # [HF, WF, A, 4]
    return jnp.broadcast_to(anc[None], (bsz, HF, WF, NUM_ANCHORS, 4))


def iou(boxes1, boxes2):
    # boxes1 [B, K, 4], boxes2 [B, N, 4] -> [B, K, N]
    b1 = boxes1[:, :, None, :]
    b2 = boxes2[:, None, :, :]
    ix1 = jnp.maximum(b1[..., 0], b2[..., 0])
    iy1 = jnp.maximum(b1[..., 1], b2[..., 1])
    ix2 = jnp.minimum(b1[..., 2], b2[..., 2])
    iy2 = jnp.minimum(b1[..., 3], b2[..., 3])
    inter = jnp.clip(ix2 - ix1, 0) * jnp.clip(iy2 - iy1, 0)
    a1 = (b1[..., 2] - b1[..., 0]) * (b1[..., 3] - b1[..., 1])
    a2 = (b2[..., 2] - b2[..., 0]) * (b2[..., 3] - b2[..., 1])
    return inter / (a1 + a2 - inter + 1e-8)


def box_to_offsets(gt, anc):
    aw, ah = anc[:, 2] - anc[:, 0], anc[:, 3] - anc[:, 1]
    ax, ay = (anc[:, 0] + anc[:, 2]) / 2, (anc[:, 1] + anc[:, 3]) / 2
    gw = jnp.maximum(gt[:, 2] - gt[:, 0], 1e-6)   # clamp keeps log finite for degenerate boxes
    gh = jnp.maximum(gt[:, 3] - gt[:, 1], 1e-6)
    gx, gy = (gt[:, 0] + gt[:, 2]) / 2, (gt[:, 1] + gt[:, 3]) / 2
    return jnp.stack([(gx - ax) / aw, (gy - ay) / ah,
                      jnp.log(gw / aw), jnp.log(gh / ah)], axis=-1)


def generate_proposal(anc, off):
    # FasterRCNN parameterization
    aw, ah = anc[:, 2] - anc[:, 0], anc[:, 3] - anc[:, 1]
    ax, ay = (anc[:, 0] + anc[:, 2]) / 2, (anc[:, 1] + anc[:, 3]) / 2
    px, py = ax + off[:, 0] * aw, ay + off[:, 1] * ah
    pw, ph = aw * jnp.exp(off[:, 2]), ah * jnp.exp(off[:, 3])
    return jnp.stack([px - pw / 2, py - ph / 2, px + pw / 2, py + ph / 2], axis=-1)


def roi_align_mean(feats_nhwc, rois):
    # TODO(synk): torchvision.ops.roi_align replaced by a plain-JAX bilinear
    # gather (2x2 bin centers, sampling_ratio=1) followed by the AvgPool2d(2);
    # the data-dependent per-RoI gather stays in JAX at this tiny M.
    bsz, h, w, c = feats_nhwc.shape

    def one(roi):
        bi = roi[0].astype(jnp.int32)
        x1, y1, x2, y2 = roi[1], roi[2], roi[3], roi[4]
        bw, bh = (x2 - x1) / 2.0, (y2 - y1) / 2.0
        cx = x1 + (jnp.arange(2, dtype=jnp.float32) + 0.5) * bw
        cy = y1 + (jnp.arange(2, dtype=jnp.float32) + 0.5) * bh
        gy, gx = jnp.meshgrid(cy, cx, indexing='ij')
        px, py = gx - 0.5, gy - 0.5
        x0 = jnp.clip(jnp.floor(px), 0, w - 1)
        y0 = jnp.clip(jnp.floor(py), 0, h - 1)
        x1i = jnp.clip(x0 + 1, 0, w - 1)
        y1i = jnp.clip(y0 + 1, 0, h - 1)
        lx = jnp.clip(px - x0, 0.0, 1.0)
        ly = jnp.clip(py - y0, 0.0, 1.0)

        def g(yi, xi):
            return feats_nhwc[bi, yi.astype(jnp.int32), xi.astype(jnp.int32), :]

        v = (g(y0, x0) * ((1 - ly) * (1 - lx))[..., None]
             + g(y0, x1i) * ((1 - ly) * lx)[..., None]
             + g(y1i, x0) * (ly * (1 - lx))[..., None]
             + g(y1i, x1i) * (ly * lx)[..., None])
        return jnp.mean(v, axis=(0, 1))                        # AvgPool2d(2) -> [C]

    return jax.vmap(one)(rois)                                 # [M, C]


# ------------------------- full forward (training loss) -------------------
def two_stage_detector_forward(params, images, bboxes):
    bsz = images.shape[0]

    # --- RPN: patch-embed backbone + proposal head, ONE fused Pallas call ---
    # TODO(synk): pretrained MobileNetV2 backbone replaced by a deterministic
    # Pallas patch-embedding projection (no checkpoint loading).
    patches = images.reshape(bsz, C_IN, HF, PATCH, WF, PATCH)
    patches = jnp.transpose(patches, (0, 2, 4, 1, 3, 5)).reshape(bsz, HF, WF, PATCH_K)
    patches_pad = jnp.pad(patches, ((0, 0), (1, 1), (1, 1), (0, 0)))     # zero border rows
    feats_pad, preds = rpn_fused(patches_pad, params)
    features = feats_pad[:, 1:1 + HF, 1:1 + WF, :]                       # NHWC [B,HF,WF,C]

    # --- anchors / matching (plain JAX) ---
    anc = generate_anchors(params['anchor_list'], bsz)               # [B, HF, WF, A, 4]
    anc_flat = anc.reshape(bsz, ANC_PER_IMG, 4)
    iou_mat = iou(anc_flat, bboxes[..., :4])                         # [B, K, N]
    # TODO(synk): ReferenceOnActivatedAnchors' dynamic pos/neg sampling is
    # replaced by fixed-size best/worst-IoU matching (JAX needs static shapes).
    pos_local = jnp.argmax(iou_mat, axis=1)                          # [B, N_GT]
    neg_local = jnp.argmin(iou_mat, axis=1)                          # [B, N_GT]
    batch_ids = jnp.arange(bsz)[:, None]
    pos_idx = (batch_ids * ANC_PER_IMG + pos_local).reshape(-1)
    neg_idx = (batch_ids * ANC_PER_IMG + neg_local).reshape(-1)
    pos_coord = anc_flat.reshape(-1, 4)[pos_idx]                     # [M, 4]
    gt_boxes = bboxes[..., :4].reshape(-1, 4)
    gt_class = bboxes[..., 4].reshape(-1).astype(jnp.int32)          # [M]
    gt_offsets = box_to_offsets(gt_boxes, pos_coord)                 # [M, 4]
    m = pos_idx.shape[0]

    # --- slice RPN predictions at matched anchors (plain-JAX gathers) ---
    preds_flat = preds[..., :RPN_OUT].reshape(-1, 6)                 # [(B*HF*WF*A), 6]
    anchor_idx = jnp.concatenate([pos_idx, neg_idx], axis=0)
    conf_scores = preds_flat[anchor_idx][:, :2]                      # [2M, 2]
    offsets = preds_flat[pos_idx][:, 2:]                             # [M, 4]
    proposals = generate_proposal(pos_coord, offsets)                # [M, 4]

    # --- second stage: RoI pooling (NHWC features, plain-JAX bilinear gather) ---
    batch_index = (pos_idx // ANC_PER_IMG).astype(jnp.float32)[:, None]
    proposals_index = jnp.concatenate([batch_index, proposals], axis=1)   # [M, 5]
    roi_feature = roi_align_mean(features, proposals_index)          # [M, C_FEAT]

    # --- fused region classification MLP + (conf, reg, cls) losses: ONE launch ---
    total_loss = fused_region_cls_and_losses(conf_scores, offsets, gt_offsets,
                                             roi_feature, gt_class, params, bsz, m)
    return total_loss


# ------------------------------ parameters --------------------------------
def _init_linear(key, fan_in, fan_out, pad_out=None):
    kw, kb = jax.random.split(key)
    s = 1.0 / math.sqrt(fan_in)
    w = jax.random.uniform(kw, (fan_in, fan_out), jnp.float32, -s, s)
    b = jax.random.uniform(kb, (1, fan_out), jnp.float32, -s, s)
    if pad_out is not None and pad_out > fan_out:                  # lane-dense padding
        w = jnp.pad(w, ((0, 0), (0, pad_out - fan_out)))
        b = jnp.pad(b, ((0, 0), (0, pad_out - fan_out)))
    return w.astype(jnp.bfloat16), b                               # bf16 weights, f32 bias


def init_params(key):
    keys = jax.random.split(key, 8)
    p = {}
    p['anchor_list'] = jnp.array([[1, 1], [2, 2], [3, 3], [4, 4], [5, 5],
                                  [2, 3], [3, 2], [3, 5], [5, 3]], jnp.float32)
    # stand-in feature extractor (patch embed)
    p['wp'], p['bp'] = _init_linear(keys[0], PATCH_K, C_FEAT)
    # ProposalModule: conv3x3 stored as im2col matrix [9*C_FEAT, HIDDEN]
    # (K index = tap*C + c, tap = dy*3 + dx); conv1x1 padded to 128 lanes.
    p['rpn_w1'], p['rpn_b1'] = _init_linear(keys[1], 9 * C_FEAT, HIDDEN_RPN)
    p['rpn_w2'], p['rpn_b2'] = _init_linear(keys[2], HIDDEN_RPN, RPN_OUT,
                                            pad_out=RPN_OUT_PAD)
    # region_classification MLP
    p['cls_w1'], p['cls_b1'] = _init_linear(keys[3], C_FEAT, HIDDEN_CLS * 2)
    p['cls_w2'], p['cls_b2'] = _init_linear(keys[4], HIDDEN_CLS * 2, HIDDEN_CLS)
    p['cls_w3'], p['cls_b3'] = _init_linear(keys[5], HIDDEN_CLS, HIDDEN_CLS // 2)
    p['cls_w4'], p['cls_b4'] = _init_linear(keys[6], HIDDEN_CLS // 2, NUM_CLASSES)
    return p


# ------------------------------ main ---------------------------------------
if __name__ == "__main__":
    key = jax.random.PRNGKey(0)
    k_img, k_par = jax.random.split(key)
    images = jax.random.normal(k_img, (B, C_IN, H_IMG, W_IMG), jnp.float32)
    # GT bboxes in feature-map coordinates: [B, N_GT, 5] = (x1, y1, x2, y2, class)
    bboxes = jnp.array(
        [[[0.5, 0.5, 2.5, 2.5, 3.0], [1.0, 2.0, 3.5, 3.8, 5.0]],
         [[0.2, 0.7, 1.8, 3.2, 1.0], [2.0, 0.5, 3.9, 2.5, 7.0]]], jnp.float32)

    params = init_params(k_par)
    loss = jax.jit(two_stage_detector_forward)(params, images, bboxes)
    jax.block_until_ready(loss)
    assert jnp.isfinite(loss), "loss is not finite"
    print("KERNEL_OK")
</pallas_src>

<mosaic_0001>
module attributes {stable_mosaic.version = 11 : i64} {
  func.func @rpn_fused_kernel(%arg0: i32, %arg1: memref<1x6x6x48xf32, #tpu.memory_space<vmem>>, %arg2: memref<48x128xbf16, #tpu.memory_space<vmem>>, %arg3: memref<1x128xf32, #tpu.memory_space<vmem>>, %arg4: memref<1152x128xbf16, #tpu.memory_space<vmem>>, %arg5: memref<1x128xf32, #tpu.memory_space<vmem>>, %arg6: memref<128x128xbf16, #tpu.memory_space<vmem>>, %arg7: memref<1x128xf32, #tpu.memory_space<vmem>>, %arg8: memref<1x6x6x128xf32, #tpu.memory_space<vmem>>, %arg9: memref<1x4x4x128xf32, #tpu.memory_space<vmem>>) attributes {dimension_semantics = [#tpu.dimension_semantics<parallel>], iteration_bounds = array<i64: 2>, scalar_prefetch = 0 : i64, scratch_operands = 0 : i64, tpu.core_type = #tpu.core_type<tc>, window_params = [{transform_indices = @transform_0, window_bounds = array<i64: 1, 6, 6, 48>}, {pipeline_mode = #tpu.pipeline_mode<synchronous>, transform_indices = @transform_1, window_bounds = array<i64: 48, 128>}, {pipeline_mode = #tpu.pipeline_mode<synchronous>, transform_indices = @transform_2, window_bounds = array<i64: 1, 128>}, {pipeline_mode = #tpu.pipeline_mode<synchronous>, transform_indices = @transform_3, window_bounds = array<i64: 1152, 128>}, {pipeline_mode = #tpu.pipeline_mode<synchronous>, transform_indices = @transform_4, window_bounds = array<i64: 1, 128>}, {pipeline_mode = #tpu.pipeline_mode<synchronous>, transform_indices = @transform_5, window_bounds = array<i64: 128, 128>}, {pipeline_mode = #tpu.pipeline_mode<synchronous>, transform_indices = @transform_6, window_bounds = array<i64: 1, 128>}, {transform_indices = @transform_7, window_bounds = array<i64: 1, 6, 6, 128>}, {transform_indices = @transform_8, window_bounds = array<i64: 1, 4, 4, 128>}]} {
    %0 = tpu.iota {dimensions = array<i32: 0>} : vector<6x1xi32>
    %c1_i32 = arith.constant 1 : i32
    %1 = vector.broadcast %c1_i32 : i32 to vector<6x1xi32>
    %2 = arith.cmpi sge, %0, %1 : vector<6x1xi32>
    %c4_i32 = arith.constant 4 : i32
    %3 = vector.broadcast %c4_i32 : i32 to vector<6x1xi32>
    %4 = arith.cmpi sle, %0, %3 : vector<6x1xi32>
    %5 = arith.andi %2, %4 : vector<6x1xi1>
    %cst = arith.constant 1.000000e+00 : f32
    %cst_0 = arith.constant 0.000000e+00 : f32
    %6 = vector.broadcast %cst : f32 to vector<6x1xf32>
    %7 = vector.broadcast %cst_0 : f32 to vector<6x1xf32>
    %8 = arith.select %5, %6, %7 : vector<6x1xi1>, vector<6x1xf32>
    %cst_1 = arith.constant 0.000000e+00 : f32
    %9 = vector.broadcast %cst_1 : f32 to vector<6x128xf32>
    %c0 = arith.constant 0 : index
    %c0_2 = arith.constant 0 : index
    %c0_3 = arith.constant 0 : index
    %c0_4 = arith.constant 0 : index
    %10 = vector.load %arg8[%c0, %c0_2, %c0_3, %c0_4] : memref<1x6x6x128xf32, #tpu.memory_space<vmem>>, vector<1x1x6x128xf32>
    %11 = vector.shape_cast %10 : vector<1x1x6x128xf32> to vector<6x128xf32>
    %12 = vector.shape_cast %9 : vector<6x128xf32> to vector<1x1x6x128xf32>
    tpu.vector_store %arg8[%c0, %c0_2, %c0_3, %c0_4], %12 {strides = array<i32>} : memref<1x6x6x128xf32, #tpu.memory_space<vmem>>, vector<1x1x6x128xf32>,
    %c0_5 = arith.constant 0 : index
    %c5 = arith.constant 5 : index
    %c0_6 = arith.constant 0 : index
    %c0_7 = arith.constant 0 : index
    %13 = vector.load %arg8[%c0_5, %c5, %c0_6, %c0_7] : memref<1x6x6x128xf32, #tpu.memory_space<vmem>>, vector<1x1x6x128xf32>
    %14 = vector.shape_cast %13 : vector<1x1x6x128xf32> to vector<6x128xf32>
    %15 = vector.shape_cast %9 : vector<6x128xf32> to vector<1x1x6x128xf32>
    tpu.vector_store %arg8[%c0_5, %c5, %c0_6, %c0_7], %15 {strides = array<i32>} : memref<1x6x6x128xf32, #tpu.memory_space<vmem>>, vector<1x1x6x128xf32>,
    %c0_8 = arith.constant 0 : index
    %c1 = arith.constant 1 : index
    %c0_9 = arith.constant 0 : index
    %c0_10 = arith.constant 0 : index
    %16 = vector.load %arg1[%c0_8, %c1, %c0_9, %c0_10] : memref<1x6x6x48xf32, #tpu.memory_space<vmem>>, vector<1x1x6x48xf32>
    %17 = vector.shape_cast %16 : vector<1x1x6x48xf32> to vector<6x48xf32>
    %18 = arith.truncf %17 : vector<6x48xf32> to vector<6x48xbf16>
    %c0_11 = arith.constant 0 : index
    %c0_12 = arith.constant 0 : index
    %19 = vector.load %arg2[%c0_11, %c0_12] : memref<48x128xbf16, #tpu.memory_space<vmem>>, vector<48x128xbf16>
    %cst_13 = arith.constant dense<0.000000e+00> : vector<6x128xf32>
    %20 = tpu.matmul %18, %19, %cst_13 {dimension_numbers = #tpu.dot_dimension_numbers<[1], [0], [0], [1], [0, 0, 1, 1], [], []>} : vector<6x48xbf16>, vector<48x128xbf16>, vector<6x128xf32> -> vector<6x128xf32>
    %c0_14 = arith.constant 0 : index
    %c0_15 = arith.constant 0 : index
    %21 = vector.load %arg3[%c0_14, %c0_15] : memref<1x128xf32, #tpu.memory_space<vmem>>, vector<1x128xf32>
    %22 = vector.broadcast %21 : vector<1x128xf32> to vector<6x128xf32>
    %23 = vector.broadcast %8 : vector<6x1xf32> to vector<6x128xf32>
    %24 = arith.mulf %22, %23 : vector<6x128xf32>
    %25 = arith.addf %20, %24 : vector<6x128xf32>
    %c0_16 = arith.constant 0 : index
    %c1_17 = arith.constant 1 : index
    %c0_18 = arith.constant 0 : index
    %c0_19 = arith.constant 0 : index
    %26 = vector.load %arg8[%c0_16, %c1_17, %c0_18, %c0_19] : memref<1x6x6x128xf32, #tpu.memory_space<vmem>>, vector<1x1x6x128xf32>
    %27 = vector.shape_cast %26 : vector<1x1x6x128xf32> to vector<6x128xf32>
    %28 = vector.shape_cast %25 : vector<6x128xf32> to vector<1x1x6x128xf32>
    tpu.vector_store %arg8[%c0_16, %c1_17, %c0_18, %c0_19], %28 {strides = array<i32>} : memref<1x6x6x128xf32, #tpu.memory_space<vmem>>, vector<1x1x6x128xf32>,
    %c0_20 = arith.constant 0 : index
    %c2 = arith.constant 2 : index
    %c0_21 = arith.constant 0 : index
    %c0_22 = arith.constant 0 : index
    %29 = vector.load %arg1[%c0_20, %c2, %c0_21, %c0_22] : memref<1x6x6x48xf32, #tpu.memory_space<vmem>>, vector<1x1x6x48xf32>
    %30 = vector.shape_cast %29 : vector<1x1x6x48xf32> to vector<6x48xf32>
    %31 = arith.truncf %30 : vector<6x48xf32> to vector<6x48xbf16>
    %c0_23 = arith.constant 0 : index
    %c0_24 = arith.constant 0 : index
    %32 = vector.load %arg2[%c0_23, %c0_24] : memref<48x128xbf16, #tpu.memory_space<vmem>>, vector<48x128xbf16>
    %cst_25 = arith.constant dense<0.000000e+00> : vector<6x128xf32>
    %33 = tpu.matmul %31, %32, %cst_25 {dimension_numbers = #tpu.dot_dimension_numbers<[1], [0], [0], [1], [0, 0, 1, 1], [], []>} : vector<6x48xbf16>, vector<48x128xbf16>, vector<6x128xf32> -> vector<6x128xf32>
    %c0_26 = arith.constant 0 : index
    %c0_27 = arith.constant 0 : index
    %34 = vector.load %arg3[%c0_26, %c0_27] : memref<1x128xf32, #tpu.memory_space<vmem>>, vector<1x128xf32>
    %35 = vector.broadcast %34 : vector<1x128xf32> to vector<6x128xf32>
    %36 = vector.broadcast %8 : vector<6x1xf32> to vector<6x128xf32>
    %37 = arith.mulf %35, %36 : vector<6x128xf32>
    %38 = arith.addf %33, %37 : vector<6x128xf32>
    %c0_28 = arith.constant 0 : index
    %c2_29 = arith.constant 2 : index
    %c0_30 = arith.constant 0 : index
    %c0_31 = arith.constant 0 : index
    %39 = vector.load %arg8[%c0_28, %c2_29, %c0_30, %c0_31] : memref<1x6x6x128xf32, #tpu.memory_space<vmem>>, vector<1x1x6x128xf32>
    %40 = vector.shape_cast %39 : vector<1x1x6x128xf32> to vector<6x128xf32>
    %41 = vector.shape_cast %38 : vector<6x128xf32> to vector<1x1x6x128xf32>
    tpu.vector_store %arg8[%c0_28, %c2_29, %c0_30, %c0_31], %41 {strides = array<i32>} : memref<1x6x6x128xf32, #tpu.memory_space<vmem>>, vector<1x1x6x128xf32>,
    %c0_32 = arith.constant 0 : index
    %c3 = arith.constant 3 : index
    %c0_33 = arith.constant 0 : index
    %c0_34 = arith.constant 0 : index
    %42 = vector.load %arg1[%c0_32, %c3, %c0_33, %c0_34] : memref<1x6x6x48xf32, #tpu.memory_space<vmem>>, vector<1x1x6x48xf32>
    %43 = vector.shape_cast %42 : vector<1x1x6x48xf32> to vector<6x48xf32>
    %44 = arith.truncf %43 : vector<6x48xf32> to vector<6x48xbf16>
    %c0_35 = arith.constant 0 : index
    %c0_36 = arith.constant 0 : index
    %45 = vector.load %arg2[%c0_35, %c0_36] : memref<48x128xbf16, #tpu.memory_space<vmem>>, vector<48x128xbf16>
    %cst_37 = arith.constant dense<0.000000e+00> : vector<6x128xf32>
    %46 = tpu.matmul %44, %45, %cst_37 {dimension_numbers = #tpu.dot_dimension_numbers<[1], [0], [0], [1], [0, 0, 1, 1], [], []>} : vector<6x48xbf16>, vector<48x128xbf16>, vector<6x128xf32> -> vector<6x128xf32>
    %c0_38 = arith.constant 0 : index
    %c0_39 = arith.constant 0 : index
    %47 = vector.load %arg3[%c0_38, %c0_39] : memref<1x128xf32, #tpu.memory_space<vmem>>, vector<1x128xf32>
    %48 = vector.broadcast %47 : vector<1x128xf32> to vector<6x128xf32>
    %49 = vector.broadcast %8 : vector<6x1xf32> to vector<6x128xf32>
    %50 = arith.mulf %48, %49 : vector<6x128xf32>
    %51 = arith.addf %46, %50 : vector<6x128xf32>
    %c0_40 = arith.constant 0 : index
    %c3_41 = arith.constant 3 : index
    %c0_42 = arith.constant 0 : index
    %c0_43 = arith.constant 0 : index
    %52 = vector.load %arg8[%c0_40, %c3_41, %c0_42, %c0_43] : memref<1x6x6x128xf32, #tpu.memory_space<vmem>>, vector<1x1x6x128xf32>
    %53 = vector.shape_cast %52 : vector<1x1x6x128xf32> to vector<6x128xf32>
    %54 = vector.shape_cast %51 : vector<6x128xf32> to vector<1x1x6x128xf32>
    tpu.vector_store %arg8[%c0_40, %c3_41, %c0_42, %c0_43], %54 {strides = array<i32>} : memref<1x6x6x128xf32, #tpu.memory_space<vmem>>, vector<1x1x6x128xf32>,
    %c0_44 = arith.constant 0 : index
    %c4 = arith.constant 4 : index
    %c0_45 = arith.constant 0 : index
    %c0_46 = arith.constant 0 : index
    %55 = vector.load %arg1[%c0_44, %c4, %c0_45, %c0_46] : memref<1x6x6x48xf32, #tpu.memory_space<vmem>>, vector<1x1x6x48xf32>
    %56 = vector.shape_cast %55 : vector<1x1x6x48xf32> to vector<6x48xf32>
    %57 = arith.truncf %56 : vector<6x48xf32> to vector<6x48xbf16>
    %c0_47 = arith.constant 0 : index
    %c0_48 = arith.constant 0 : index
    %58 = vector.load %arg2[%c0_47, %c0_48] : memref<48x128xbf16, #tpu.memory_space<vmem>>, vector<48x128xbf16>
    %cst_49 = arith.constant dense<0.000000e+00> : vector<6x128xf32>
    %59 = tpu.matmul %57, %58, %cst_49 {dimension_numbers = #tpu.dot_dimension_numbers<[1], [0], [0], [1], [0, 0, 1, 1], [], []>} : vector<6x48xbf16>, vector<48x128xbf16>, vector<6x128xf32> -> vector<6x128xf32>
    %c0_50 = arith.constant 0 : index
    %c0_51 = arith.constant 0 : index
    %60 = vector.load %arg3[%c0_50, %c0_51] : memref<1x128xf32, #tpu.memory_space<vmem>>, vector<1x128xf32>
    %61 = vector.broadcast %60 : vector<1x128xf32> to vector<6x128xf32>
    %62 = vector.broadcast %8 : vector<6x1xf32> to vector<6x128xf32>
    %63 = arith.mulf %61, %62 : vector<6x128xf32>
    %64 = arith.addf %59, %63 : vector<6x128xf32>
    %c0_52 = arith.constant 0 : index
    %c4_53 = arith.constant 4 : index
    %c0_54 = arith.constant 0 : index
    %c0_55 = arith.constant 0 : index
    %65 = vector.load %arg8[%c0_52, %c4_53, %c0_54, %c0_55] : memref<1x6x6x128xf32, #tpu.memory_space<vmem>>, vector<1x1x6x128xf32>
    %66 = vector.shape_cast %65 : vector<1x1x6x128xf32> to vector<6x128xf32>
    %67 = vector.shape_cast %64 : vector<6x128xf32> to vector<1x1x6x128xf32>
    tpu.vector_store %arg8[%c0_52, %c4_53, %c0_54, %c0_55], %67 {strides = array<i32>} : memref<1x6x6x128xf32, #tpu.memory_space<vmem>>, vector<1x1x6x128xf32>,
    %c0_56 = arith.constant 0 : index
    %c0_57 = arith.constant 0 : index
    %c0_58 = arith.constant 0 : index
    %c0_59 = arith.constant 0 : index
    %68 = vector.load %arg8[%c0_56, %c0_57, %c0_58, %c0_59] : memref<1x6x6x128xf32, #tpu.memory_space<vmem>>, vector<1x1x4x128xf32>
    %69 = vector.shape_cast %68 : vector<1x1x4x128xf32> to vector<4x128xf32>
    %c0_60 = arith.constant 0 : index
    %c0_61 = arith.constant 0 : index
    %c1_62 = arith.constant 1 : index
    %c0_63 = arith.constant 0 : index
    %70 = vector.load %arg8[%c0_60, %c0_61, %c1_62, %c0_63] : memref<1x6x6x128xf32, #tpu.memory_space<vmem>>, vector<1x1x4x128xf32>
    %71 = vector.shape_cast %70 : vector<1x1x4x128xf32> to vector<4x128xf32>
    %c0_64 = arith.constant 0 : index
    %c0_65 = arith.constant 0 : index
    %c2_66 = arith.constant 2 : index
    %c0_67 = arith.constant 0 : index
    %72 = vector.load %arg8[%c0_64, %c0_65, %c2_66, %c0_67] : memref<1x6x6x128xf32, #tpu.memory_space<vmem>>, vector<1x1x4x128xf32>
    %73 = vector.shape_cast %72 : vector<1x1x4x128xf32> to vector<4x128xf32>
    %c0_68 = arith.constant 0 : index
    %c1_69 = arith.constant 1 : index
    %c0_70 = arith.constant 0 : index
    %c0_71 = arith.constant 0 : index
    %74 = vector.load %arg8[%c0_68, %c1_69, %c0_70, %c0_71] : memref<1x6x6x128xf32, #tpu.memory_space<vmem>>, vector<1x1x4x128xf32>
    %75 = vector.shape_cast %74 : vector<1x1x4x128xf32> to vector<4x128xf32>
    %c0_72 = arith.constant 0 : index
    %c1_73 = arith.constant 1 : index
    %c1_74 = arith.constant 1 : index
    %c0_75 = arith.constant 0 : index
    %76 = vector.load %arg8[%c0_72, %c1_73, %c1_74, %c0_75] : memref<1x6x6x128xf32, #tpu.memory_space<vmem>>, vector<1x1x4x128xf32>
    %77 = vector.shape_cast %76 : vector<1x1x4x128xf32> to vector<4x128xf32>
    %c0_76 = arith.constant 0 : index
    %c1_77 = arith.constant 1 : index
    %c2_78 = arith.constant 2 : index
    %c0_79 = arith.constant 0 : index
    %78 = vector.load %arg8[%c0_76, %c1_77, %c2_78, %c0_79] : memref<1x6x6x128xf32, #tpu.memory_space<vmem>>, vector<1x1x4x128xf32>
    %79 = vector.shape_cast %78 : vector<1x1x4x128xf32> to vector<4x128xf32>
    %c0_80 = arith.constant 0 : index
    %c2_81 = arith.constant 2 : index
    %c0_82 = arith.constant 0 : index
    %c0_83 = arith.constant 0 : index
    %80 = vector.load %arg8[%c0_80, %c2_81, %c0_82, %c0_83] : memref<1x6x6x128xf32, #tpu.memory_space<vmem>>, vector<1x1x4x128xf32>
    %81 = vector.shape_cast %80 : vector<1x1x4x128xf32> to vector<4x128xf32>
    %c0_84 = arith.constant 0 : index
    %c2_85 = arith.constant 2 : index
    %c1_86 = arith.constant 1 : index
    %c0_87 = arith.constant 0 : index
    %82 = vector.load %arg8[%c0_84, %c2_85, %c1_86, %c0_87] : memref<1x6x6x128xf32, #tpu.memory_space<vmem>>, vector<1x1x4x128xf32>
    %83 = vector.shape_cast %82 : vector<1x1x4x128xf32> to vector<4x128xf32>
    %c0_88 = arith.constant 0 : index
    %c2_89 = arith.constant 2 : index
    %c2_90 = arith.constant 2 : index
    %c0_91 = arith.constant 0 : index
    %84 = vector.load %arg8[%c0_88, %c2_89, %c2_90, %c0_91] : memref<1x6x6x128xf32, #tpu.memory_space<vmem>>, vector<1x1x4x128xf32>
    %85 = vector.shape_cast %84 : vector<1x1x4x128xf32> to vector<4x128xf32>
    %86 = tpu.concatenate %69, %71, %73, %75, %77, %79, %81, %83, %85 in 1 : vector<4x128xf32>, vector<4x128xf32>, vector<4x128xf32>, vector<4x128xf32>, vector<4x128xf32>, vector<4x128xf32>, vector<4x128xf32>, vector<4x128xf32>, vector<4x128xf32> -> vector<4x1152xf32>
    %87 = arith.truncf %86 : vector<4x1152xf32> to vector<4x1152xbf16>
    %c0_92 = arith.constant 0 : index
    %c0_93 = arith.constant 0 : index
    %88 = vector.load %arg4[%c0_92, %c0_93] : memref<1152x128xbf16, #tpu.memory_space<vmem>>, vector<1152x128xbf16>
    %cst_94 = arith.constant dense<0.000000e+00> : vector<4x128xf32>
    %89 = tpu.matmul %87, %88, %cst_94 {dimension_numbers = #tpu.dot_dimension_numbers<[1], [0], [0], [1], [0, 0, 1, 1], [], []>} : vector<4x1152xbf16>, vector<1152x128xbf16>, vector<4x128xf32> -> vector<4x128xf32>
    %c0_95 = arith.constant 0 : index
    %c0_96 = arith.constant 0 : index
    %90 = vector.load %arg5[%c0_95, %c0_96] : memref<1x128xf32, #tpu.memory_space<vmem>>, vector<1x128xf32>
    %91 = vector.broadcast %90 : vector<1x128xf32> to vector<4x128xf32>
    %92 = arith.addf %89, %91 : vector<4x128xf32>
    %cst_97 = arith.constant 0.000000e+00 : f32
    %93 = vector.broadcast %cst_97 : f32 to vector<4x128xf32>
    %94 = arith.cmpf ogt, %92, %93 : vector<4x128xf32>
    %cst_98 = arith.constant 0.00999999977 : f32
    %95 = vector.broadcast %cst_98 : f32 to vector<4x128xf32>
    %96 = arith.mulf %95, %92 : vector<4x128xf32>
    %97 = arith.select %94, %92, %96 : vector<4x128xi1>, vector<4x128xf32>
    %98 = arith.truncf %97 : vector<4x128xf32> to vector<4x128xbf16>
    %c0_99 = arith.constant 0 : index
    %c0_100 = arith.constant 0 : index
    %99 = vector.load %arg6[%c0_99, %c0_100] : memref<128x128xbf16, #tpu.memory_space<vmem>>, vector<128x128xbf16>
    %cst_101 = arith.constant dense<0.000000e+00> : vector<4x128xf32>
    %100 = tpu.matmul %98, %99, %cst_101 {dimension_numbers = #tpu.dot_dimension_numbers<[1], [0], [0], [1], [0, 0, 1, 1], [], []>} : vector<4x128xbf16>, vector<128x128xbf16>, vector<4x128xf32> -> vector<4x128xf32>
    %c0_102 = arith.constant 0 : index
    %c0_103 = arith.constant 0 : index
    %101 = vector.load %arg7[%c0_102, %c0_103] : memref<1x128xf32, #tpu.memory_space<vmem>>, vector<1x128xf32>
    %102 = vector.broadcast %101 : vector<1x128xf32> to vector<4x128xf32>
    %103 = arith.addf %100, %102 : vector<4x128xf32>
    %c0_104 = arith.constant 0 : index
    %c0_105 = arith.constant 0 : index
    %c0_106 = arith.constant 0 : index
    %c0_107 = arith.constant 0 : index
    %104 = vector.load %arg9[%c0_104, %c0_105, %c0_106, %c0_107] : memref<1x4x4x128xf32, #tpu.memory_space<vmem>>, vector<1x1x4x128xf32>
    %105 = vector.shape_cast %104 : vector<1x1x4x128xf32> to vector<4x128xf32>
    %106 = vector.shape_cast %103 : vector<4x128xf32> to vector<1x1x4x128xf32>
    tpu.vector_store %arg9[%c0_104, %c0_105, %c0_106, %c0_107], %106 {strides = array<i32>} : memref<1x4x4x128xf32, #tpu.memory_space<vmem>>, vector<1x1x4x128xf32>,
    %c0_108 = arith.constant 0 : index
    %c1_109 = arith.constant 1 : index
    %c0_110 = arith.constant 0 : index
    %c0_111 = arith.constant 0 : index
    %107 = vector.load %arg8[%c0_108, %c1_109, %c0_110, %c0_111] : memref<1x6x6x128xf32, #tpu.memory_space<vmem>>, vector<1x1x4x128xf32>
    %108 = vector.shape_cast %107 : vector<1x1x4x128xf32> to vector<4x128xf32>
    %c0_112 = arith.constant 0 : index
    %c1_113 = arith.constant 1 : index
    %c1_114 = arith.constant 1 : index
    %c0_115 = arith.constant 0 : index
    %109 = vector.load %arg8[%c0_112, %c1_113, %c1_114, %c0_115] : memref<1x6x6x128xf32, #tpu.memory_space<vmem>>, vector<1x1x4x128xf32>
    %110 = vector.shape_cast %109 : vector<1x1x4x128xf32> to vector<4x128xf32>
    %c0_116 = arith.constant 0 : index
    %c1_117 = arith.constant 1 : index
    %c2_118 = arith.constant 2 : index
    %c0_119 = arith.constant 0 : index
    %111 = vector.load %arg8[%c0_116, %c1_117, %c2_118, %c0_119] : memref<1x6x6x128xf32, #tpu.memory_space<vmem>>, vector<1x1x4x128xf32>
    %112 = vector.shape_cast %111 : vector<1x1x4x128xf32> to vector<4x128xf32>
    %c0_120 = arith.constant 0 : index
    %c2_121 = arith.constant 2 : index
    %c0_122 = arith.constant 0 : index
    %c0_123 = arith.constant 0 : index
    %113 = vector.load %arg8[%c0_120, %c2_121, %c0_122, %c0_123] : memref<1x6x6x128xf32, #tpu.memory_space<vmem>>, vector<1x1x4x128xf32>
    %114 = vector.shape_cast %113 : vector<1x1x4x128xf32> to vector<4x128xf32>
    %c0_124 = arith.constant 0 : index
    %c2_125 = arith.constant 2 : index
    %c1_126 = arith.constant 1 : index
    %c0_127 = arith.constant 0 : index
    %115 = vector.load %arg8[%c0_124, %c2_125, %c1_126, %c0_127] : memref<1x6x6x128xf32, #tpu.memory_space<vmem>>, vector<1x1x4x128xf32>
    %116 = vector.shape_cast %115 : vector<1x1x4x128xf32> to vector<4x128xf32>
    %c0_128 = arith.constant 0 : index
    %c2_129 = arith.constant 2 : index
    %c2_130 = arith.constant 2 : index
    %c0_131 = arith.constant 0 : index
    %117 = vector.load %arg8[%c0_128, %c2_129, %c2_130, %c0_131] : memref<1x6x6x128xf32, #tpu.memory_space<vmem>>, vector<1x1x4x128xf32>
    %118 = vector.shape_cast %117 : vector<1x1x4x128xf32> to vector<4x128xf32>
    %c0_132 = arith.constant 0 : index
    %c3_133 = arith.constant 3 : index
    %c0_134 = arith.constant 0 : index
    %c0_135 = arith.constant 0 : index
    %119 = vector.load %arg8[%c0_132, %c3_133, %c0_134, %c0_135] : memref<1x6x6x128xf32, #tpu.memory_space<vmem>>, vector<1x1x4x128xf32>
    %120 = vector.shape_cast %119 : vector<1x1x4x128xf32> to vector<4x128xf32>
    %c0_136 = arith.constant 0 : index
    %c3_137 = arith.constant 3 : index
    %c1_138 = arith.constant 1 : index
    %c0_139 = arith.constant 0 : index
    %121 = vector.load %arg8[%c0_136, %c3_137, %c1_138, %c0_139] : memref<1x6x6x128xf32, #tpu.memory_space<vmem>>, vector<1x1x4x128xf32>
    %122 = vector.shape_cast %121 : vector<1x1x4x128xf32> to vector<4x128xf32>
    %c0_140 = arith.constant 0 : index
    %c3_141 = arith.constant 3 : index
    %c2_142 = arith.constant 2 : index
    %c0_143 = arith.constant 0 : index
    %123 = vector.load %arg8[%c0_140, %c3_141, %c2_142, %c0_143] : memref<1x6x6x128xf32, #tpu.memory_space<vmem>>, vector<1x1x4x128xf32>
    %124 = vector.shape_cast %123 : vector<1x1x4x128xf32> to vector<4x128xf32>
    %125 = tpu.concatenate %108, %110, %112, %114, %116, %118, %120, %122, %124 in 1 : vector<4x128xf32>, vector<4x128xf32>, vector<4x128xf32>, vector<4x128xf32>, vector<4x128xf32>, vector<4x128xf32>, vector<4x128xf32>, vector<4x128xf32>, vector<4x128xf32> -> vector<4x1152xf32>
    %126 = arith.truncf %125 : vector<4x1152xf32> to vector<4x1152xbf16>
    %c0_144 = arith.constant 0 : index
    %c0_145 = arith.constant 0 : index
    %127 = vector.load %arg4[%c0_144, %c0_145] : memref<1152x128xbf16, #tpu.memory_space<vmem>>, vector<1152x128xbf16>
    %cst_146 = arith.constant dense<0.000000e+00> : vector<4x128xf32>
    %128 = tpu.matmul %126, %127, %cst_146 {dimension_numbers = #tpu.dot_dimension_numbers<[1], [0], [0], [1], [0, 0, 1, 1], [], []>} : vector<4x1152xbf16>, vector<1152x128xbf16>, vector<4x128xf32> -> vector<4x128xf32>
    %c0_147 = arith.constant 0 : index
    %c0_148 = arith.constant 0 : index
    %129 = vector.load %arg5[%c0_147, %c0_148] : memref<1x128xf32, #tpu.memory_space<vmem>>, vector<1x128xf32>
    %130 = vector.broadcast %129 : vector<1x128xf32> to vector<4x128xf32>
    %131 = arith.addf %128, %130 : vector<4x128xf32>
    %cst_149 = arith.constant 0.000000e+00 : f32
    %132 = vector.broadcast %cst_149 : f32 to vector<4x128xf32>
    %133 = arith.cmpf ogt, %131, %132 : vector<4x128xf32>
    %cst_150 = arith.constant 0.00999999977 : f32
    %134 = vector.broadcast %cst_150 : f32 to vector<4x128xf32>
    %135 = arith.mulf %134, %131 : vector<4x128xf32>
    %136 = arith.select %133, %131, %135 : vector<4x128xi1>, vector<4x128xf32>
    %137 = arith.truncf %136 : vector<4x128xf32> to vector<4x128xbf16>
    %c0_151 = arith.constant 0 : index
    %c0_152 = arith.constant 0 : index
    %138 = vector.load %arg6[%c0_151, %c0_152] : memref<128x128xbf16, #tpu.memory_space<vmem>>, vector<128x128xbf16>
    %cst_153 = arith.constant dense<0.000000e+00> : vector<4x128xf32>
    %139 = tpu.matmul %137, %138, %cst_153 {dimension_numbers = #tpu.dot_dimension_numbers<[1], [0], [0], [1], [0, 0, 1, 1], [], []>} : vector<4x128xbf16>, vector<128x128xbf16>, vector<4x128xf32> -> vector<4x128xf32>
    %c0_154 = arith.constant 0 : index
    %c0_155 = arith.constant 0 : index
    %140 = vector.load %arg7[%c0_154, %c0_155] : memref<1x128xf32, #tpu.memory_space<vmem>>, vector<1x128xf32>
    %141 = vector.broadcast %140 : vector<1x128xf32> to vector<4x128xf32>
    %142 = arith.addf %139, %141 : vector<4x128xf32>
    %c0_156 = arith.constant 0 : index
    %c1_157 = arith.constant 1 : index
    %c0_158 = arith.constant 0 : index
    %c0_159 = arith.constant 0 : index
    %143 = vector.load %arg9[%c0_156, %c1_157, %c0_158, %c0_159] : memref<1x4x4x128xf32, #tpu.memory_space<vmem>>, vector<1x1x4x128xf32>
    %144 = vector.shape_cast %143 : vector<1x1x4x128xf32> to vector<4x128xf32>
    %145 = vector.shape_cast %142 : vector<4x128xf32> to vector<1x1x4x128xf32>
    tpu.vector_store %arg9[%c0_156, %c1_157, %c0_158, %c0_159], %145 {strides = array<i32>} : memref<1x4x4x128xf32, #tpu.memory_space<vmem>>, vector<1x1x4x128xf32>,
    %c0_160 = arith.constant 0 : index
    %c2_161 = arith.constant 2 : index
    %c0_162 = arith.constant 0 : index
    %c0_163 = arith.constant 0 : index
    %146 = vector.load %arg8[%c0_160, %c2_161, %c0_162, %c0_163] : memref<1x6x6x128xf32, #tpu.memory_space<vmem>>, vector<1x1x4x128xf32>
    %147 = vector.shape_cast %146 : vector<1x1x4x128xf32> to vector<4x128xf32>
    %c0_164 = arith.constant 0 : index
    %c2_165 = arith.constant 2 : index
    %c1_166 = arith.constant 1 : index
    %c0_167 = arith.constant 0 : index
    %148 = vector.load %arg8[%c0_164, %c2_165, %c1_166, %c0_167] : memref<1x6x6x128xf32, #tpu.memory_space<vmem>>, vector<1x1x4x128xf32>
    %149 = vector.shape_cast %148 : vector<1x1x4x128xf32> to vector<4x128xf32>
    %c0_168 = arith.constant 0 : index
    %c2_169 = arith.constant 2 : index
    %c2_170 = arith.constant 2 : index
    %c0_171 = arith.constant 0 : index
    %150 = vector.load %arg8[%c0_168, %c2_169, %c2_170, %c0_171] : memref<1x6x6x128xf32, #tpu.memory_space<vmem>>, vector<1x1x4x128xf32>
    %151 = vector.shape_cast %150 : vector<1x1x4x128xf32> to vector<4x128xf32>
    %c0_172 = arith.constant 0 : index
    %c3_173 = arith.constant 3 : index
    %c0_174 = arith.constant 0 : index
    %c0_175 = arith.constant 0 : index
    %152 = vector.load %arg8[%c0_172, %c3_173, %c0_174, %c0_175] : memref<1x6x6x128xf32, #tpu.memory_space<vmem>>, vector<1x1x4x128xf32>
    %153 = vector.shape_cast %152 : vector<1x1x4x128xf32> to vector<4x128xf32>
    %c0_176 = arith.constant 0 : index
    %c3_177 = arith.constant 3 : index
    %c1_178 = arith.constant 1 : index
    %c0_179 = arith.constant 0 : index
    %154 = vector.load %arg8[%c0_176, %c3_177, %c1_178, %c0_179] : memref<1x6x6x128xf32, #tpu.memory_space<vmem>>, vector<1x1x4x128xf32>
    %155 = vector.shape_cast %154 : vector<1x1x4x128xf32> to vector<4x128xf32>
    %c0_180 = arith.constant 0 : index
    %c3_181 = arith.constant 3 : index
    %c2_182 = arith.constant 2 : index
    %c0_183 = arith.constant 0 : index
    %156 = vector.load %arg8[%c0_180, %c3_181, %c2_182, %c0_183] : memref<1x6x6x128xf32, #tpu.memory_space<vmem>>, vector<1x1x4x128xf32>
    %157 = vector.shape_cast %156 : vector<1x1x4x128xf32> to vector<4x128xf32>
    %c0_184 = arith.constant 0 : index
    %c4_185 = arith.constant 4 : index
    %c0_186 = arith.constant 0 : index
    %c0_187 = arith.constant 0 : index
    %158 = vector.load %arg8[%c0_184, %c4_185, %c0_186, %c0_187] : memref<1x6x6x128xf32, #tpu.memory_space<vmem>>, vector<1x1x4x128xf32>
    %159 = vector.shape_cast %158 : vector<1x1x4x128xf32> to vector<4x128xf32>
    %c0_188 = arith.constant 0 : index
    %c4_189 = arith.constant 4 : index
    %c1_190 = arith.constant 1 : index
    %c0_191 = arith.constant 0 : index
    %160 = vector.load %arg8[%c0_188, %c4_189, %c1_190, %c0_191] : memref<1x6x6x128xf32, #tpu.memory_space<vmem>>, vector<1x1x4x128xf32>
    %161 = vector.shape_cast %160 : vector<1x1x4x128xf32> to vector<4x128xf32>
    %c0_192 = arith.constant 0 : index
    %c4_193 = arith.constant 4 : index
    %c2_194 = arith.constant 2 : index
    %c0_195 = arith.constant 0 : index
    %162 = vector.load %arg8[%c0_192, %c4_193, %c2_194, %c0_195] : memref<1x6x6x128xf32, #tpu.memory_space<vmem>>, vector<1x1x4x128xf32>
    %163 = vector.shape_cast %162 : vector<1x1x4x128xf32> to vector<4x128xf32>
    %164 = tpu.concatenate %147, %149, %151, %153, %155, %157, %159, %161, %163 in 1 : vector<4x128xf32>, vector<4x128xf32>, vector<4x128xf32>, vector<4x128xf32>, vector<4x128xf32>, vector<4x128xf32>, vector<4x128xf32>, vector<4x128xf32>, vector<4x128xf32> -> vector<4x1152xf32>
    %165 = arith.truncf %164 : vector<4x1152xf32> to vector<4x1152xbf16>
    %c0_196 = arith.constant 0 : index
    %c0_197 = arith.constant 0 : index
    %166 = vector.load %arg4[%c0_196, %c0_197] : memref<1152x128xbf16, #tpu.memory_space<vmem>>, vector<1152x128xbf16>
    %cst_198 = arith.constant dense<0.000000e+00> : vector<4x128xf32>
    %167 = tpu.matmul %165, %166, %cst_198 {dimension_numbers = #tpu.dot_dimension_numbers<[1], [0], [0], [1], [0, 0, 1, 1], [], []>} : vector<4x1152xbf16>, vector<1152x128xbf16>, vector<4x128xf32> -> vector<4x128xf32>
    %c0_199 = arith.constant 0 : index
    %c0_200 = arith.constant 0 : index
    %168 = vector.load %arg5[%c0_199, %c0_200] : memref<1x128xf32, #tpu.memory_space<vmem>>, vector<1x128xf32>
    %169 = vector.broadcast %168 : vector<1x128xf32> to vector<4x128xf32>
    %170 = arith.addf %167, %169 : vector<4x128xf32>
    %cst_201 = arith.constant 0.000000e+00 : f32
    %171 = vector.broadcast %cst_201 : f32 to vector<4x128xf32>
    %172 = arith.cmpf ogt, %170, %171 : vector<4x128xf32>
    %cst_202 = arith.constant 0.00999999977 : f32
    %173 = vector.broadcast %cst_202 : f32 to vector<4x128xf32>
    %174 = arith.mulf %173, %170 : vector<4x128xf32>
    %175 = arith.select %172, %170, %174 : vector<4x128xi1>, vector<4x128xf32>
    %176 = arith.truncf %175 : vector<4x128xf32> to vector<4x128xbf16>
    %c0_203 = arith.constant 0 : index
    %c0_204 = arith.constant 0 : index
    %177 = vector.load %arg6[%c0_203, %c0_204] : memref<128x128xbf16, #tpu.memory_space<vmem>>, vector<128x128xbf16>
    %cst_205 = arith.constant dense<0.000000e+00> : vector<4x128xf32>
    %178 = tpu.matmul %176, %177, %cst_205 {dimension_numbers = #tpu.dot_dimension_numbers<[1], [0], [0], [1], [0, 0, 1, 1], [], []>} : vector<4x128xbf16>, vector<128x128xbf16>, vector<4x128xf32> -> vector<4x128xf32>
    %c0_206 = arith.constant 0 : index
    %c0_207 = arith.constant 0 : index
    %179 = vector.load %arg7[%c0_206, %c0_207] : memref<1x128xf32, #tpu.memory_space<vmem>>, vector<1x128xf32>
    %180 = vector.broadcast %179 : vector<1x128xf32> to vector<4x128xf32>
    %181 = arith.addf %178, %180 : vector<4x128xf32>
    %c0_208 = arith.constant 0 : index
    %c2_209 = arith.constant 2 : index
    %c0_210 = arith.constant 0 : index
    %c0_211 = arith.constant 0 : index
    %182 = vector.load %arg9[%c0_208, %c2_209, %c0_210, %c0_211] : memref<1x4x4x128xf32, #tpu.memory_space<vmem>>, vector<1x1x4x128xf32>
    %183 = vector.shape_cast %182 : vector<1x1x4x128xf32> to vector<4x128xf32>
    %184 = vector.shape_cast %181 : vector<4x128xf32> to vector<1x1x4x128xf32>
    tpu.vector_store %arg9[%c0_208, %c2_209, %c0_210, %c0_211], %184 {strides = array<i32>} : memref<1x4x4x128xf32, #tpu.memory_space<vmem>>, vector<1x1x4x128xf32>,
    %c0_212 = arith.constant 0 : index
    %c3_213 = arith.constant 3 : index
    %c0_214 = arith.constant 0 : index
    %c0_215 = arith.constant 0 : index
    %185 = vector.load %arg8[%c0_212, %c3_213, %c0_214, %c0_215] : memref<1x6x6x128xf32, #tpu.memory_space<vmem>>, vector<1x1x4x128xf32>
    %186 = vector.shape_cast %185 : vector<1x1x4x128xf32> to vector<4x128xf32>
    %c0_216 = arith.constant 0 : index
    %c3_217 = arith.constant 3 : index
    %c1_218 = arith.constant 1 : index
    %c0_219 = arith.constant 0 : index
    %187 = vector.load %arg8[%c0_216, %c3_217, %c1_218, %c0_219] : memref<1x6x6x128xf32, #tpu.memory_space<vmem>>, vector<1x1x4x128xf32>
    %188 = vector.shape_cast %187 : vector<1x1x4x128xf32> to vector<4x128xf32>
    %c0_220 = arith.constant 0 : index
    %c3_221 = arith.constant 3 : index
    %c2_222 = arith.constant 2 : index
    %c0_223 = arith.constant 0 : index
    %189 = vector.load %arg8[%c0_220, %c3_221, %c2_222, %c0_223] : memref<1x6x6x128xf32, #tpu.memory_space<vmem>>, vector<1x1x4x128xf32>
    %190 = vector.shape_cast %189 : vector<1x1x4x128xf32> to vector<4x128xf32>
    %c0_224 = arith.constant 0 : index
    %c4_225 = arith.constant 4 : index
    %c0_226 = arith.constant 0 : index
    %c0_227 = arith.constant 0 : index
    %191 = vector.load %arg8[%c0_224, %c4_225, %c0_226, %c0_227] : memref<1x6x6x128xf32, #tpu.memory_space<vmem>>, vector<1x1x4x128xf32>
    %192 = vector.shape_cast %191 : vector<1x1x4x128xf32> to vector<4x128xf32>
    %c0_228 = arith.constant 0 : index
    %c4_229 = arith.constant 4 : index
    %c1_230 = arith.constant 1 : index
    %c0_231 = arith.constant 0 : index
    %193 = vector.load %arg8[%c0_228, %c4_229, %c1_230, %c0_231] : memref<1x6x6x128xf32, #tpu.memory_space<vmem>>, vector<1x1x4x128xf32>
    %194 = vector.shape_cast %193 : vector<1x1x4x128xf32> to vector<4x128xf32>
    %c0_232 = arith.constant 0 : index
    %c4_233 = arith.constant 4 : index
    %c2_234 = arith.constant 2 : index
    %c0_235 = arith.constant 0 : index
    %195 = vector.load %arg8[%c0_232, %c4_233, %c2_234, %c0_235] : memref<1x6x6x128xf32, #tpu.memory_space<vmem>>, vector<1x1x4x128xf32>
    %196 = vector.shape_cast %195 : vector<1x1x4x128xf32> to vector<4x128xf32>
    %c0_236 = arith.constant 0 : index
    %c5_237 = arith.constant 5 : index
    %c0_238 = arith.constant 0 : index
    %c0_239 = arith.constant 0 : index
    %197 = vector.load %arg8[%c0_236, %c5_237, %c0_238, %c0_239] : memref<1x6x6x128xf32, #tpu.memory_space<vmem>>, vector<1x1x4x128xf32>
    %198 = vector.shape_cast %197 : vector<1x1x4x128xf32> to vector<4x128xf32>
    %c0_240 = arith.constant 0 : index
    %c5_241 = arith.constant 5 : index
    %c1_242 = arith.constant 1 : index
    %c0_243 = arith.constant 0 : index
    %199 = vector.load %arg8[%c0_240, %c5_241, %c1_242, %c0_243] : memref<1x6x6x128xf32, #tpu.memory_space<vmem>>, vector<1x1x4x128xf32>
    %200 = vector.shape_cast %199 : vector<1x1x4x128xf32> to vector<4x128xf32>
    %c0_244 = arith.constant 0 : index
    %c5_245 = arith.constant 5 : index
    %c2_246 = arith.constant 2 : index
    %c0_247 = arith.constant 0 : index
    %201 = vector.load %arg8[%c0_244, %c5_245, %c2_246, %c0_247] : memref<1x6x6x128xf32, #tpu.memory_space<vmem>>, vector<1x1x4x128xf32>
    %202 = vector.shape_cast %201 : vector<1x1x4x128xf32> to vector<4x128xf32>
    %203 = tpu.concatenate %186, %188, %190, %192, %194, %196, %198, %200, %202 in 1 : vector<4x128xf32>, vector<4x128xf32>, vector<4x128xf32>, vector<4x128xf32>, vector<4x128xf32>, vector<4x128xf32>, vector<4x128xf32>, vector<4x128xf32>, vector<4x128xf32> -> vector<4x1152xf32>
    %204 = arith.truncf %203 : vector<4x1152xf32> to vector<4x1152xbf16>
    %c0_248 = arith.constant 0 : index
    %c0_249 = arith.constant 0 : index
    %205 = vector.load %arg4[%c0_248, %c0_249] : memref<1152x128xbf16, #tpu.memory_space<vmem>>, vector<1152x128xbf16>
    %cst_250 = arith.constant dense<0.000000e+00> : vector<4x128xf32>
    %206 = tpu.matmul %204, %205, %cst_250 {dimension_numbers = #tpu.dot_dimension_numbers<[1], [0], [0], [1], [0, 0, 1, 1], [], []>} : vector<4x1152xbf16>, vector<1152x128xbf16>, vector<4x128xf32> -> vector<4x128xf32>
    %c0_251 = arith.constant 0 : index
    %c0_252 = arith.constant 0 : index
    %207 = vector.load %arg5[%c0_251, %c0_252] : memref<1x128xf32, #tpu.memory_space<vmem>>, vector<1x128xf32>
    %208 = vector.broadcast %207 : vector<1x128xf32> to vector<4x128xf32>
    %209 = arith.addf %206, %208 : vector<4x128xf32>
    %cst_253 = arith.constant 0.000000e+00 : f32
    %210 = vector.broadcast %cst_253 : f32 to vector<4x128xf32>
    %211 = arith.cmpf ogt, %209, %210 : vector<4x128xf32>
    %cst_254 = arith.constant 0.00999999977 : f32
    %212 = vector.broadcast %cst_254 : f32 to vector<4x128xf32>
    %213 = arith.mulf %212, %209 : vector<4x128xf32>
    %214 = arith.select %211, %209, %213 : vector<4x128xi1>, vector<4x128xf32>
    %215 = arith.truncf %214 : vector<4x128xf32> to vector<4x128xbf16>
    %c0_255 = arith.constant 0 : index
    %c0_256 = arith.constant 0 : index
    %216 = vector.load %arg6[%c0_255, %c0_256] : memref<128x128xbf16, #tpu.memory_space<vmem>>, vector<128x128xbf16>
    %cst_257 = arith.constant dense<0.000000e+00> : vector<4x128xf32>
    %217 = tpu.matmul %215, %216, %cst_257 {dimension_numbers = #tpu.dot_dimension_numbers<[1], [0], [0], [1], [0, 0, 1, 1], [], []>} : vector<4x128xbf16>, vector<128x128xbf16>, vector<4x128xf32> -> vector<4x128xf32>
    %c0_258 = arith.constant 0 : index
    %c0_259 = arith.constant 0 : index
    %218 = vector.load %arg7[%c0_258, %c0_259] : memref<1x128xf32, #tpu.memory_space<vmem>>, vector<1x128xf32>
    %219 = vector.broadcast %218 : vector<1x128xf32> to vector<4x128xf32>
    %220 = arith.addf %217, %219 : vector<4x128xf32>
    %c0_260 = arith.constant 0 : index
    %c3_261 = arith.constant 3 : index
    %c0_262 = arith.constant 0 : index
    %c0_263 = arith.constant 0 : index
    %221 = vector.load %arg9[%c0_260, %c3_261, %c0_262, %c0_263] : memref<1x4x4x128xf32, #tpu.memory_space<vmem>>, vector<1x1x4x128xf32>
    %222 = vector.shape_cast %221 : vector<1x1x4x128xf32> to vector<4x128xf32>
    %223 = vector.shape_cast %220 : vector<4x128xf32> to vector<1x1x4x128xf32>
    tpu.vector_store %arg9[%c0_260, %c3_261, %c0_262, %c0_263], %223 {strides = array<i32>} : memref<1x4x4x128xf32, #tpu.memory_space<vmem>>, vector<1x1x4x128xf32>,
    return
  }
  func.func @transform_0(%arg0: i32) -> (i32, i32, i32, i32) {
    %c0_i32 = arith.constant 0 : i32
    %c0_i32_0 = arith.constant 0 : i32
    %c0_i32_1 = arith.constant 0 : i32
    %c0_i32_2 = arith.constant 0 : i32
    return %arg0, %c0_i32, %c0_i32_0, %c0_i32_1 : i32, i32, i32, i32
  }
  func.func @transform_1(%arg0: i32) -> (i32, i32) {
    %c0_i32 = arith.constant 0 : i32
    %c0_i32_0 = arith.constant 0 : i32
    %c0_i32_1 = arith.constant 0 : i32
    return %c0_i32, %c0_i32_0 : i32, i32
  }
  func.func @transform_2(%arg0: i32) -> (i32, i32) {
    %c0_i32 = arith.constant 0 : i32
    %c0_i32_0 = arith.constant 0 : i32
    %c0_i32_1 = arith.constant 0 : i32
    return %c0_i32, %c0_i32_0 : i32, i32
  }
  func.func @transform_3(%arg0: i32) -> (i32, i32) {
    %c0_i32 = arith.constant 0 : i32
    %c0_i32_0 = arith.constant 0 : i32
    %c0_i32_1 = arith.constant 0 : i32
    return %c0_i32, %c0_i32_0 : i32, i32
  }
  func.func @transform_4(%arg0: i32) -> (i32, i32) {
    %c0_i32 = arith.constant 0 : i32
    %c0_i32_0 = arith.constant 0 : i32
    %c0_i32_1 = arith.constant 0 : i32
    return %c0_i32, %c0_i32_0 : i32, i32
  }
  func.func @transform_5(%arg0: i32) -> (i32, i32) {
    %c0_i32 = arith.constant 0 : i32
    %c0_i32_0 = arith.constant 0 : i32
    %c0_i32_1 = arith.constant 0 : i32
    return %c0_i32, %c0_i32_0 : i32, i32
  }
  func.func @transform_6(%arg0: i32) -> (i32, i32) {
    %c0_i32 = arith.constant 0 : i32
    %c0_i32_0 = arith.constant 0 : i32
    %c0_i32_1 = arith.constant 0 : i32
    return %c0_i32, %c0_i32_0 : i32, i32
  }
  func.func @transform_7(%arg0: i32) -> (i32, i32, i32, i32) {
    %c0_i32 = arith.constant 0 : i32
    %c0_i32_0 = arith.constant 0 : i32
    %c0_i32_1 = arith.constant 0 : i32
    %c0_i32_2 = arith.constant 0 : i32
    return %arg0, %c0_i32, %c0_i32_0, %c0_i32_1 : i32, i32, i32, i32
  }
  func.func @transform_8(%arg0: i32) -> (i32, i32, i32, i32) {
    %c0_i32 = arith.constant 0 : i32
    %c0_i32_0 = arith.constant 0 : i32
    %c0_i32_1 = arith.constant 0 : i32
    %c0_i32_2 = arith.constant 0 : i32
    return %arg0, %c0_i32, %c0_i32_0, %c0_i32_1 : i32, i32, i32, i32
  }
}

module attributes {stable_mosaic.version = 11 : i64} {
  func.func @head_loss_kernel(%arg0: memref<8x2xf32, #tpu.memory_space<vmem>>, %arg1: memref<4x4xf32, #tpu.memory_space<vmem>>, %arg2: memref<4x4xf32, #tpu.memory_space<vmem>>, %arg3: memref<4x128xf32, #tpu.memory_space<vmem>>, %arg4: memref<4xi32, #tpu.memory_space<smem>>, %arg5: memref<128x256xbf16, #tpu.memory_space<vmem>>, %arg6: memref<1x256xf32, #tpu.memory_space<vmem>>, %arg7: memref<256x128xbf16, #tpu.memory_space<vmem>>, %arg8: memref<1x128xf32, #tpu.memory_space<vmem>>, %arg9: memref<128x64xbf16, #tpu.memory_space<vmem>>, %arg10: memref<1x64xf32, #tpu.memory_space<vmem>>, %arg11: memref<64x8xbf16, #tpu.memory_space<vmem>>, %arg12: memref<1x8xf32, #tpu.memory_space<vmem>>, %arg13: memref<1x1xf32, #tpu.memory_space<smem>>) attributes {dimension_semantics = [], scalar_prefetch = 0 : i64, scratch_operands = 0 : i64, tpu.core_type = #tpu.core_type<tc>} {
    %c0 = arith.constant 0 : index
    %c0_0 = arith.constant 0 : index
    %0 = vector.load %arg3[%c0, %c0_0] : memref<4x128xf32, #tpu.memory_space<vmem>>, vector<4x128xf32>
    %1 = arith.truncf %0 : vector<4x128xf32> to vector<4x128xbf16>
    %c0_1 = arith.constant 0 : index
    %c0_2 = arith.constant 0 : index
    %2 = vector.load %arg5[%c0_1, %c0_2] : memref<128x256xbf16, #tpu.memory_space<vmem>>, vector<128x256xbf16>
    %cst = arith.constant dense<0.000000e+00> : vector<4x256xf32>
    %3 = tpu.matmul %1, %2, %cst {dimension_numbers = #tpu.dot_dimension_numbers<[1], [0], [0], [1], [0, 0, 1, 1], [], []>} : vector<4x128xbf16>, vector<128x256xbf16>, vector<4x256xf32> -> vector<4x256xf32>
    %c0_3 = arith.constant 0 : index
    %c0_4 = arith.constant 0 : index
    %4 = vector.load %arg6[%c0_3, %c0_4] : memref<1x256xf32, #tpu.memory_space<vmem>>, vector<1x256xf32>
    %5 = vector.broadcast %4 : vector<1x256xf32> to vector<4x256xf32>
    %6 = arith.addf %3, %5 : vector<4x256xf32>
    %cst_5 = arith.constant 0.000000e+00 : f32
    %7 = vector.broadcast %cst_5 : f32 to vector<4x256xf32>
    %8 = arith.maximumf %6, %7 : vector<4x256xf32>
    %9 = arith.truncf %8 : vector<4x256xf32> to vector<4x256xbf16>
    %c0_6 = arith.constant 0 : index
    %c0_7 = arith.constant 0 : index
    %10 = vector.load %arg7[%c0_6, %c0_7] : memref<256x128xbf16, #tpu.memory_space<vmem>>, vector<256x128xbf16>
    %cst_8 = arith.constant dense<0.000000e+00> : vector<4x128xf32>
    %11 = tpu.matmul %9, %10, %cst_8 {dimension_numbers = #tpu.dot_dimension_numbers<[1], [0], [0], [1], [0, 0, 1, 1], [], []>} : vector<4x256xbf16>, vector<256x128xbf16>, vector<4x128xf32> -> vector<4x128xf32>
    %c0_9 = arith.constant 0 : index
    %c0_10 = arith.constant 0 : index
    %12 = vector.load %arg8[%c0_9, %c0_10] : memref<1x128xf32, #tpu.memory_space<vmem>>, vector<1x128xf32>
    %13 = vector.broadcast %12 : vector<1x128xf32> to vector<4x128xf32>
    %14 = arith.addf %11, %13 : vector<4x128xf32>
    %cst_11 = arith.constant 0.000000e+00 : f32
    %15 = vector.broadcast %cst_11 : f32 to vector<4x128xf32>
    %16 = arith.maximumf %14, %15 : vector<4x128xf32>
    %17 = arith.truncf %16 : vector<4x128xf32> to vector<4x128xbf16>
    %c0_12 = arith.constant 0 : index
    %c0_13 = arith.constant 0 : index
    %18 = vector.load %arg9[%c0_12, %c0_13] : memref<128x64xbf16, #tpu.memory_space<vmem>>, vector<128x64xbf16>
    %cst_14 = arith.constant dense<0.000000e+00> : vector<4x64xf32>
    %19 = tpu.matmul %17, %18, %cst_14 {dimension_numbers = #tpu.dot_dimension_numbers<[1], [0], [0], [1], [0, 0, 1, 1], [], []>} : vector<4x128xbf16>, vector<128x64xbf16>, vector<4x64xf32> -> vector<4x64xf32>
    %c0_15 = arith.constant 0 : index
    %c0_16 = arith.constant 0 : index
    %20 = vector.load %arg10[%c0_15, %c0_16] : memref<1x64xf32, #tpu.memory_space<vmem>>, vector<1x64xf32>
    %21 = vector.broadcast %20 : vector<1x64xf32> to vector<4x64xf32>
    %22 = arith.addf %19, %21 : vector<4x64xf32>
    %cst_17 = arith.constant 0.000000e+00 : f32
    %23 = vector.broadcast %cst_17 : f32 to vector<4x64xf32>
    %24 = arith.maximumf %22, %23 : vector<4x64xf32>
    %25 = arith.truncf %24 : vector<4x64xf32> to vector<4x64xbf16>
    %c0_18 = arith.constant 0 : index
    %c0_19 = arith.constant 0 : index
    %26 = vector.load %arg11[%c0_18, %c0_19] : memref<64x8xbf16, #tpu.memory_space<vmem>>, vector<64x8xbf16>
    %cst_20 = arith.constant dense<0.000000e+00> : vector<4x8xf32>
    %27 = tpu.matmul %25, %26, %cst_20 {dimension_numbers = #tpu.dot_dimension_numbers<[1], [0], [0], [1], [0, 0, 1, 1], [], []>} : vector<4x64xbf16>, vector<64x8xbf16>, vector<4x8xf32> -> vector<4x8xf32>
    %c0_21 = arith.constant 0 : index
    %c0_22 = arith.constant 0 : index
    %28 = vector.load %arg12[%c0_21, %c0_22] : memref<1x8xf32, #tpu.memory_space<vmem>>, vector<1x8xf32>
    %29 = vector.broadcast %28 : vector<1x8xf32> to vector<4x8xf32>
    %30 = arith.addf %27, %29 : vector<4x8xf32>
    %cst_23 = arith.constant dense<0xFF800000> : vector<4xf32>
    %31 = vector.multi_reduction <maximumf>, %30, %cst_23 [1] : vector<4x8xf32> to vector<4xf32>
    %32 = vector.shape_cast %31 : vector<4xf32> to vector<4x1xf32>
    %33 = vector.broadcast %32 : vector<4x1xf32> to vector<4x8xf32>
    %34 = arith.subf %30, %33 : vector<4x8xf32>
    %35 = math.exp %34 : vector<4x8xf32>
    %cst_24 = arith.constant dense<0.000000e+00> : vector<4xf32>
    %36 = vector.multi_reduction <add>, %35, %cst_24 [1] : vector<4x8xf32> to vector<4xf32>
    %37 = vector.shape_cast %36 : vector<4xf32> to vector<4x1xf32>
    %38 = math.log %37 : vector<4x1xf32>
    %39 = arith.addf %32, %38 : vector<4x1xf32>
    %40 = tpu.iota {dimensions = array<i32: 0>} : vector<4x8xi32>
    %41 = tpu.iota {dimensions = array<i32: 1>} : vector<4x8xi32>
    %cst_25 = arith.constant 0.000000e+00 : f32
    %42 = vector.broadcast %cst_25 : f32 to vector<4x8xf32>
    %c0_i32 = arith.constant 0 : i32
    %43 = vector.broadcast %c0_i32 : i32 to vector<4x8xi32>
    %44 = arith.cmpi eq, %40, %43 : vector<4x8xi32>
    %c0_26 = arith.constant 0 : index
    %45 = memref.load %arg4[%c0_26] : memref<4xi32, #tpu.memory_space<smem>>
    %46 = vector.broadcast %45 : i32 to vector<4x8xi32>
    %47 = arith.cmpi eq, %41, %46 : vector<4x8xi32>
    %48 = arith.andi %44, %47 : vector<4x8xi1>
    %cst_27 = arith.constant 1.000000e+00 : f32
    %cst_28 = arith.constant 0.000000e+00 : f32
    %49 = vector.broadcast %cst_27 : f32 to vector<4x8xf32>
    %50 = vector.broadcast %cst_28 : f32 to vector<4x8xf32>
    %51 = arith.select %48, %49, %50 : vector<4x8xi1>, vector<4x8xf32>
    %52 = arith.addf %42, %51 : vector<4x8xf32>
    %c1_i32 = arith.constant 1 : i32
    %53 = vector.broadcast %c1_i32 : i32 to vector<4x8xi32>
    %54 = arith.cmpi eq, %40, %53 : vector<4x8xi32>
    %c1 = arith.constant 1 : index
    %55 = memref.load %arg4[%c1] : memref<4xi32, #tpu.memory_space<smem>>
    %56 = vector.broadcast %55 : i32 to vector<4x8xi32>
    %57 = arith.cmpi eq, %41, %56 : vector<4x8xi32>
    %58 = arith.andi %54, %57 : vector<4x8xi1>
    %cst_29 = arith.constant 1.000000e+00 : f32
    %cst_30 = arith.constant 0.000000e+00 : f32
    %59 = vector.broadcast %cst_29 : f32 to vector<4x8xf32>
    %60 = vector.broadcast %cst_30 : f32 to vector<4x8xf32>
    %61 = arith.select %58, %59, %60 : vector<4x8xi1>, vector<4x8xf32>
    %62 = arith.addf %52, %61 : vector<4x8xf32>
    %c2_i32 = arith.constant 2 : i32
    %63 = vector.broadcast %c2_i32 : i32 to vector<4x8xi32>
    %64 = arith.cmpi eq, %40, %63 : vector<4x8xi32>
    %c2 = arith.constant 2 : index
    %65 = memref.load %arg4[%c2] : memref<4xi32, #tpu.memory_space<smem>>
    %66 = vector.broadcast %65 : i32 to vector<4x8xi32>
    %67 = arith.cmpi eq, %41, %66 : vector<4x8xi32>
    %68 = arith.andi %64, %67 : vector<4x8xi1>
    %cst_31 = arith.constant 1.000000e+00 : f32
    %cst_32 = arith.constant 0.000000e+00 : f32
    %69 = vector.broadcast %cst_31 : f32 to vector<4x8xf32>
    %70 = vector.broadcast %cst_32 : f32 to vector<4x8xf32>
    %71 = arith.select %68, %69, %70 : vector<4x8xi1>, vector<4x8xf32>
    %72 = arith.addf %62, %71 : vector<4x8xf32>
    %c3_i32 = arith.constant 3 : i32
    %73 = vector.broadcast %c3_i32 : i32 to vector<4x8xi32>
    %74 = arith.cmpi eq, %40, %73 : vector<4x8xi32>
    %c3 = arith.constant 3 : index
    %75 = memref.load %arg4[%c3] : memref<4xi32, #tpu.memory_space<smem>>
    %76 = vector.broadcast %75 : i32 to vector<4x8xi32>
    %77 = arith.cmpi eq, %41, %76 : vector<4x8xi32>
    %78 = arith.andi %74, %77 : vector<4x8xi1>
    %cst_33 = arith.constant 1.000000e+00 : f32
    %cst_34 = arith.constant 0.000000e+00 : f32
    %79 = vector.broadcast %cst_33 : f32 to vector<4x8xf32>
    %80 = vector.broadcast %cst_34 : f32 to vector<4x8xf32>
    %81 = arith.select %78, %79, %80 : vector<4x8xi1>, vector<4x8xf32>
    %82 = arith.addf %72, %81 : vector<4x8xf32>
    %83 = vector.shape_cast %39 : vector<4x1xf32> to vector<1x4x1xf32>
    %cst_35 = arith.constant dense<0.000000e+00> : vector<1xf32>
    %84 = vector.multi_reduction <add>, %83, %cst_35 [1, 2] : vector<1x4x1xf32> to vector<1xf32>
    %85 = vector.shape_cast %84 : vector<1xf32> to vector<1x1x1xf32>
    %86 = vector.extract %85[0, 0, 0] : f32 from vector<1x1x1xf32>
    %87 = arith.mulf %30, %82 : vector<4x8xf32>
    %88 = vector.shape_cast %87 : vector<4x8xf32> to vector<1x4x8xf32>
    %cst_36 = arith.constant dense<0.000000e+00> : vector<1xf32>
    %89 = vector.multi_reduction <add>, %88, %cst_36 [1, 2] : vector<1x4x8xf32> to vector<1xf32>
    %90 = vector.shape_cast %89 : vector<1xf32> to vector<1x1x1xf32>
    %91 = vector.extract %90[0, 0, 0] : f32 from vector<1x1x1xf32>
    %92 = arith.subf %86, %91 : f32
    %cst_37 = arith.constant 4.000000e+00 : f32
    %93 = arith.divf %92, %cst_37 : f32
    %c0_38 = arith.constant 0 : index
    %c0_39 = arith.constant 0 : index
    %94 = vector.load %arg0[%c0_38, %c0_39] : memref<8x2xf32, #tpu.memory_space<vmem>>, vector<8x2xf32>
    %95 = tpu.iota {dimensions = array<i32: 0>} : vector<8x2xi32>
    %96 = tpu.iota {dimensions = array<i32: 1>} : vector<8x2xi32>
    %c4_i32 = arith.constant 4 : i32
    %97 = vector.broadcast %c4_i32 : i32 to vector<8x2xi32>
    %98 = arith.cmpi slt, %95, %97 : vector<8x2xi32>
    %c0_i32_40 = arith.constant 0 : i32
    %99 = vector.broadcast %c0_i32_40 : i32 to vector<8x2xi32>
    %100 = arith.cmpi eq, %96, %99 : vector<8x2xi32>
    %101 = arith.andi %98, %100 : vector<8x2xi1>
    %c4_i32_41 = arith.constant 4 : i32
    %102 = vector.broadcast %c4_i32_41 : i32 to vector<8x2xi32>
    %103 = arith.cmpi sge, %95, %102 : vector<8x2xi32>
    %c1_i32_42 = arith.constant 1 : i32
    %104 = vector.broadcast %c1_i32_42 : i32 to vector<8x2xi32>
    %105 = arith.cmpi eq, %96, %104 : vector<8x2xi32>
    %106 = arith.andi %103, %105 : vector<8x2xi1>
    %cst_43 = arith.constant 1.000000e+00 : f32
    %cst_44 = arith.constant 0.000000e+00 : f32
    %107 = vector.broadcast %cst_43 : f32 to vector<8x2xf32>
    %108 = vector.broadcast %cst_44 : f32 to vector<8x2xf32>
    %109 = arith.select %106, %107, %108 : vector<8x2xi1>, vector<8x2xf32>
    %cst_45 = arith.constant 1.000000e+00 : f32
    %110 = vector.broadcast %cst_45 : f32 to vector<8x2xf32>
    %111 = arith.select %101, %110, %109 : vector<8x2xi1>, vector<8x2xf32>
    %cst_46 = arith.constant 0.000000e+00 : f32
    %112 = vector.broadcast %cst_46 : f32 to vector<8x2xf32>
    %113 = arith.maximumf %94, %112 : vector<8x2xf32>
    %114 = arith.mulf %94, %111 : vector<8x2xf32>
    %115 = arith.subf %113, %114 : vector<8x2xf32>
    %116 = math.absf %94 : vector<8x2xf32>
    %cst_47 = arith.constant 0.000000e+00 : f32
    %117 = vector.broadcast %cst_47 : f32 to vector<8x2xf32>
    %118 = arith.subf %117, %116 : vector<8x2xf32>
    %119 = math.exp %118 : vector<8x2xf32>
    %120 = math.log1p %119 : vector<8x2xf32>
    %121 = arith.addf %115, %120 : vector<8x2xf32>
    %122 = vector.shape_cast %121 : vector<8x2xf32> to vector<1x8x2xf32>
    %cst_48 = arith.constant dense<0.000000e+00> : vector<1xf32>
    %123 = vector.multi_reduction <add>, %122, %cst_48 [1, 2] : vector<1x8x2xf32> to vector<1xf32>
    %124 = vector.shape_cast %123 : vector<1xf32> to vector<1x1x1xf32>
    %125 = vector.extract %124[0, 0, 0] : f32 from vector<1x1x1xf32>
    %cst_49 = arith.constant 2.000000e+00 : f32
    %126 = arith.divf %125, %cst_49 : f32
    %c0_50 = arith.constant 0 : index
    %c0_51 = arith.constant 0 : index
    %127 = vector.load %arg1[%c0_50, %c0_51] : memref<4x4xf32, #tpu.memory_space<vmem>>, vector<4x4xf32>
    %c0_52 = arith.constant 0 : index
    %c0_53 = arith.constant 0 : index
    %128 = vector.load %arg2[%c0_52, %c0_53] : memref<4x4xf32, #tpu.memory_space<vmem>>, vector<4x4xf32>
    %129 = arith.subf %127, %128 : vector<4x4xf32>
    %130 = math.absf %129 : vector<4x4xf32>
    %cst_54 = arith.constant 1.000000e+00 : f32
    %131 = vector.broadcast %cst_54 : f32 to vector<4x4xf32>
    %132 = arith.cmpf olt, %130, %131 : vector<4x4xf32>
    %cst_55 = arith.constant 5.000000e-01 : f32
    %133 = vector.broadcast %cst_55 : f32 to vector<4x4xf32>
    %134 = arith.mulf %133, %129 : vector<4x4xf32>
    %135 = arith.mulf %134, %129 : vector<4x4xf32>
    %cst_56 = arith.constant 5.000000e-01 : f32
    %136 = vector.broadcast %cst_56 : f32 to vector<4x4xf32>
    %137 = arith.subf %130, %136 : vector<4x4xf32>
    %138 = arith.select %132, %135, %137 : vector<4x4xi1>, vector<4x4xf32>
    %139 = vector.shape_cast %138 : vector<4x4xf32> to vector<1x4x4xf32>
    %cst_57 = arith.constant dense<0.000000e+00> : vector<1xf32>
    %140 = vector.multi_reduction <add>, %139, %cst_57 [1, 2] : vector<1x4x4xf32> to vector<1xf32>
    %141 = vector.shape_cast %140 : vector<1xf32> to vector<1x1x1xf32>
    %142 = vector.extract %141[0, 0, 0] : f32 from vector<1x1x1xf32>
    %cst_58 = arith.constant 2.000000e+00 : f32
    %143 = arith.divf %142, %cst_58 : f32
    %cst_59 = arith.constant 1.000000e+00 : f32
    %144 = arith.mulf %cst_59, %126 : f32
    %cst_60 = arith.constant 5.000000e+00 : f32
    %145 = arith.mulf %cst_60, %143 : f32
    %146 = arith.addf %144, %145 : f32
    %147 = arith.addf %146, %93 : f32
    %c0_61 = arith.constant 0 : index
    %c0_62 = arith.constant 0 : index
    %148 = memref.load %arg13[%c0_61, %c0_62] : memref<1x1xf32, #tpu.memory_space<smem>>
    memref.store %147, %arg13[%c0_61, %c0_62] : memref<1x1xf32, #tpu.memory_space<smem>>
    return
  }
}

</mosaic_0001>

<llo_original>
// kernel: two_stage_detector_forward.3
$region0: #{two_stage_detector_forward.3}
  #allocation0 [shape = 'u32[]', space=smem, size = 0x4, offset = 0x4, fixed_abs, tag = 'smem constant byte address 0x4 - core index']
  #allocation1 [shape = 'u32[144,128]{1,0:T(1,128)}', space=vmem, size = 0x12000, scoped, tag = 'internal scratch']
  %s0 = inlined_call_operand.vmem [shape: f32[8,2], index: 0, kind: input, shape index: {}]
  %s1 = inlined_call_operand.vmem [shape: f32[4,4], index: 1, kind: input, shape index: {}]
  %s2 = inlined_call_operand.vmem [shape: f32[4,4], index: 2, kind: input, shape index: {}]
  %s3 = inlined_call_operand.vmem [shape: f32[4,128], index: 3, kind: input, shape index: {}]
  %s4 = inlined_call_operand.vmem [shape: s32[4], index: 4, kind: input, shape index: {}]
  %s5 = inlined_call_operand.vmem [shape: bf16[128,256], index: 5, kind: input, shape index: {}]
  %s6 = inlined_call_operand.vmem [shape: f32[1,256], index: 6, kind: input, shape index: {}]
  %s7 = inlined_call_operand.vmem [shape: bf16[256,128], index: 7, kind: input, shape index: {}]
  %s8 = inlined_call_operand.vmem [shape: f32[1,128], index: 8, kind: input, shape index: {}]
  %s9 = inlined_call_operand.vmem [shape: bf16[128,64], index: 9, kind: input, shape index: {}]
  %s10 = inlined_call_operand.vmem [shape: f32[1,64], index: 10, kind: input, shape index: {}]
  %s11 = inlined_call_operand.vmem [shape: bf16[64,8], index: 11, kind: input, shape index: {}]
  %s12 = inlined_call_operand.vmem [shape: f32[1,8], index: 12, kind: input, shape index: {}]
  %s13 = inlined_call_operand.hbm [shape: f32[1,1], index: 13, kind: output, shape index: {}]
  %s14 = sld [smem:[#allocation0]]
  $region66: #{two_stage_detector_forward.3} parent=0
    _
  %s16 = ssub.s32 1, %s14
  %s17 = scalar_select 0, %s16, %s14
  $region1: #{two_stage_detector_forward.3} parent=0
    #allocation2 [shape = 'u8[512]{0}', space=smem, size = 0x200, scoped, tag = 'input window, operand 4, single buffered']
    #allocation3 [shape = 's32[1]{0}', space=sflag, size = 0x4, scoped, tag = 'scoped memory for two_stage_detector_forward.3']
    #allocation4 [shape = 's32[1]{0}', space=sflag, size = 0x4, scoped, tag = 'scoped memory for two_stage_detector_forward.3']
    #allocation5 [shape = 'u8[512]{0}', space=smem, size = 0x200, scoped, tag = 'output window, operand 0, single buffered']
    %18 = vsyncpa [#allocation4], 0
    %19 = vsyncpa [#allocation3], 0
    // Predicated region
    $region2: #{two_stage_detector_forward.3} parent=1 // pred_check
      _
    $region3: #{two_stage_detector_forward.3} parent=1 // pred_check_branch
      %21 = sbr.rel (0) target = $region5
    $region4: #{two_stage_detector_forward.3} parent=1 // pred_region
      _
    $region5: #{two_stage_detector_forward.3} parent=1 // pred_fallthru
      _
    // Predicated region
    $region6: #{two_stage_detector_forward.3} parent=1 // pred_check
      _
    $region7: #{two_stage_detector_forward.3} parent=1 // pred_check_branch
      %23 = sbr.rel (0) target = $region9
    $region8: #{two_stage_detector_forward.3} parent=1 // pred_region
      _
    $region9: #{two_stage_detector_forward.3} parent=1 // pred_fallthru
      _
    // Predicated region
    $region10: #{two_stage_detector_forward.3} parent=1 // pred_check
      _
    $region11: #{two_stage_detector_forward.3} parent=1 // pred_check_branch
      %25 = sbr.rel (0) target = $region13
    $region12: #{two_stage_detector_forward.3} parent=1 // pred_region
      _
    $region13: #{two_stage_detector_forward.3} parent=1 // pred_fallthru
      _
    // Predicated region
    $region14: #{two_stage_detector_forward.3} parent=1 // pred_check
      _
    $region15: #{two_stage_detector_forward.3} parent=1 // pred_check_branch
      %27 = sbr.rel (0) target = $region17
    $region16: #{two_stage_detector_forward.3} parent=1 // pred_region
      _
    $region17: #{two_stage_detector_forward.3} parent=1 // pred_fallthru
      _
    // Predicated region
    $region18: #{two_stage_detector_forward.3} parent=1 // pred_check
      _
    $region19: #{two_stage_detector_forward.3} parent=1 // pred_check_branch
      %29 = sbr.rel (0) target = $region21
    $region20: #{two_stage_detector_forward.3} parent=1 // pred_region
      %s31 = ssub.s32 16, 16
      %32 = vsyncadd [#allocation4], %s31
      %s34 = sshll.u32 %s4, 4
      %s35 = int_to_ptr.vmem [resolvable:$true] %s34
      %37 = dma.vmem_to_smem %s35, 16, [#allocation2], [#allocation4]
    $region21: #{two_stage_detector_forward.3} parent=1 // pred_fallthru
      _
    // Predicated region
    $region22: #{two_stage_detector_forward.3} parent=1 // pred_check
      _
    $region23: #{two_stage_detector_forward.3} parent=1 // pred_check_branch
      %39 = sbr.rel (0) target = $region25
    $region24: #{two_stage_detector_forward.3} parent=1 // pred_region
      _
    $region25: #{two_stage_detector_forward.3} parent=1 // pred_fallthru
      _
    // Predicated region
    $region26: #{two_stage_detector_forward.3} parent=1 // pred_check
      _
    $region27: #{two_stage_detector_forward.3} parent=1 // pred_check_branch
      %41 = sbr.rel (0) target = $region29
    $region28: #{two_stage_detector_forward.3} parent=1 // pred_region
      _
    $region29: #{two_stage_detector_forward.3} parent=1 // pred_fallthru
      _
    // Predicated region
    $region30: #{two_stage_detector_forward.3} parent=1 // pred_check
      _
    $region31: #{two_stage_detector_forward.3} parent=1 // pred_check_branch
      %43 = sbr.rel (0) target = $region33
    $region32: #{two_stage_detector_forward.3} parent=1 // pred_region
      _
    $region33: #{two_stage_detector_forward.3} parent=1 // pred_fallthru
      _
    // Predicated region
    $region34: #{two_stage_detector_forward.3} parent=1 // pred_check
      _
    $region35: #{two_stage_detector_forward.3} parent=1 // pred_check_branch
      %45 = sbr.rel (0) target = $region37
    $region36: #{two_stage_detector_forward.3} parent=1 // pred_region
      _
    $region37: #{two_stage_detector_forward.3} parent=1 // pred_fallthru
      _
    // Predicated region
    $region38: #{two_stage_detector_forward.3} parent=1 // pred_check
      _
    $region39: #{two_stage_detector_forward.3} parent=1 // pred_check_branch
      %47 = sbr.rel (0) target = $region41
    $region40: #{two_stage_detector_forward.3} parent=1 // pred_region
      _
    $region41: #{two_stage_detector_forward.3} parent=1 // pred_fallthru
      _
    // Predicated region
    $region42: #{two_stage_detector_forward.3} parent=1 // pred_check
      _
    $region43: #{two_stage_detector_forward.3} parent=1 // pred_check_branch
      %49 = sbr.rel (0) target = $region45
    $region44: #{two_stage_detector_forward.3} parent=1 // pred_region
      _
    $region45: #{two_stage_detector_forward.3} parent=1 // pred_fallthru
      _
    // Predicated region
    $region46: #{two_stage_detector_forward.3} parent=1 // pred_check
      _
    $region47: #{two_stage_detector_forward.3} parent=1 // pred_check_branch
      %51 = sbr.rel (0) target = $region49
    $region48: #{two_stage_detector_forward.3} parent=1 // pred_region
      _
    $region49: #{two_stage_detector_forward.3} parent=1 // pred_fallthru
      _
    // Predicated region
    $region50: #{two_stage_detector_forward.3} parent=1 // pred_check
      _
    $region51: #{two_stage_detector_forward.3} parent=1 // pred_check_branch
      %53 = sbr.rel (0) target = $region53
    $region52: #{two_stage_detector_forward.3} parent=1 // pred_region
      _
    $region53: #{two_stage_detector_forward.3} parent=1 // pred_fallthru
      _
    // Predicated region
    $region54: #{two_stage_detector_forward.3} parent=1 // pred_check
      _
    $region55: #{two_stage_detector_forward.3} parent=1 // pred_check_branch
      %55 = sbr.rel (0) target = $region57
    $region56: #{two_stage_detector_forward.3} parent=1 // pred_region
      %56 = dma.done [#allocation4], 16
    $region57: #{two_stage_detector_forward.3} parent=1 // pred_fallthru
      _
    %57 = sfence
    %v59 = vld [vmem:[%s3] sm:$0xf]
    %v60 = vpack.c.bf16 %v59, %v59
    %v61 = vld [vmem:[%s5] sm:$0xff]
    %v62 = vld [vmem:[%s5 + $0x8] sm:$0xff]
    %v63 = vld [vmem:[%s5 + $0x10] sm:$0xff]
    %v64 = vld [vmem:[%s5 + $0x18] sm:$0xff]
    %v65 = vld [vmem:[%s5 + $0x20] sm:$0xff]
    %v66 = vld [vmem:[%s5 + $0x28] sm:$0xff]
    %v67 = vld [vmem:[%s5 + $0x30] sm:$0xff]
    %v68 = vld [vmem:[%s5 + $0x38] sm:$0xff]
    %v69 = vld [vmem:[%s5 + $0x40] sm:$0xff]
    %v70 = vld [vmem:[%s5 + $0x48] sm:$0xff]
    %v71 = vld [vmem:[%s5 + $0x50] sm:$0xff]
    %v72 = vld [vmem:[%s5 + $0x58] sm:$0xff]
    %v73 = vld [vmem:[%s5 + $0x60] sm:$0xff]
    %v74 = vld [vmem:[%s5 + $0x68] sm:$0xff]
    %v75 = vld [vmem:[%s5 + $0x70] sm:$0xff]
    %v76 = vld [vmem:[%s5 + $0x78] sm:$0xff]
    %v77 = vld [vmem:[%s6] sm:$0x3]
    %v79 = vlaneseq
    %v80 = vshrl.u32 %v79, 7
    %v81 = vsub.s32 0, %v80
    %v82 = vrot.slane %v77, %v81
    %v83 = vlaneseq
    %v84 = vshrl.u32 %v83, 7
    %v85 = vsub.s32 1, %v84
    %v86 = vrot.slane %v77, %v85
    %v105 = vunpack.c.l.b16 %v61
    %v106 = vunpack.c.h.b16 %v61
    %v107 = vunpack.c.l.b16 %v62
    %v108 = vunpack.c.h.b16 %v62
    %v109 = vunpack.c.l.b16 %v63
    %v110 = vunpack.c.h.b16 %v63
    %v111 = vunpack.c.l.b16 %v64
    %v112 = vunpack.c.h.b16 %v64
    %v113 = vunpack.c.l.b16 %v65
    %v114 = vunpack.c.h.b16 %v65
    %v115 = vunpack.c.l.b16 %v66
    %v116 = vunpack.c.h.b16 %v66
    %v117 = vunpack.c.l.b16 %v67
    %v118 = vunpack.c.h.b16 %v67
    %v119 = vunpack.c.l.b16 %v68
    %v120 = vunpack.c.h.b16 %v68
    %v121 = vunpack.c.l.b16 %v69
    %v122 = vunpack.c.h.b16 %v69
    %v123 = vunpack.c.l.b16 %v70
    %v124 = vunpack.c.h.b16 %v70
    %v125 = vunpack.c.l.b16 %v71
    %v126 = vunpack.c.h.b16 %v71
    %v127 = vunpack.c.l.b16 %v72
    %v128 = vunpack.c.h.b16 %v72
    %v129 = vunpack.c.l.b16 %v73
    %v130 = vunpack.c.h.b16 %v73
    %v131 = vunpack.c.l.b16 %v74
    %v132 = vunpack.c.h.b16 %v74
    %v133 = vunpack.c.l.b16 %v75
    %v134 = vunpack.c.h.b16 %v75
    %v135 = vunpack.c.l.b16 %v76
    %v136 = vunpack.c.h.b16 %v76
    %v137 = vpack.c.b16 %v107, %v105
    %v138 = vpack.c.b16 %v108, %v106
    %v139 = vpack.c.b16 %v111, %v109
    %v140 = vpack.c.b16 %v112, %v110
    %v141 = vpack.c.b16 %v115, %v113
    %v142 = vpack.c.b16 %v116, %v114
    %v143 = vpack.c.b16 %v119, %v117
    %v144 = vpack.c.b16 %v120, %v118
    %v145 = vpack.c.b16 %v123, %v121
    %v146 = vpack.c.b16 %v124, %v122
    %v147 = vpack.c.b16 %v127, %v125
    %v148 = vpack.c.b16 %v128, %v126
    %v149 = vpack.c.b16 %v131, %v129
    %v150 = vpack.c.b16 %v132, %v130
    %v151 = vpack.c.b16 %v135, %v133
    %v152 = vpack.c.b16 %v136, %v134
    %169 = vmatprep.subr.bf16.mxu0 %v138
    %170 = vmatpush1.bf16.msra.mxu0 %v137
    %171 = vmatprep.subr.bf16.mxu0 %v140
    %172 = vmatpush1.bf16.msra.mxu0 %v139
    %173 = vmatprep.subr.bf16.mxu0 %v142
    %174 = vmatpush1.bf16.msra.mxu0 %v141
    %175 = vmatprep.subr.bf16.mxu0 %v144
    %176 = vmatpush1.bf16.msra.mxu0 %v143
    %177 = vmatprep.subr.bf16.mxu0 %v146
    %178 = vmatpush1.bf16.msra.mxu0 %v145
    %179 = vmatprep.subr.bf16.mxu0 %v148
    %180 = vmatpush1.bf16.msra.mxu0 %v147
    %181 = vmatprep.subr.bf16.mxu0 %v150
    %182 = vmatpush1.bf16.msra.mxu0 %v149
    %183 = vmatprep.subr.bf16.mxu0 %v152
    %184 = vmatpush1.bf16.msra.mxu0 %v151
    %185 = vmatprep.subr.bf16.mxu0 0
    %186 = vmatpush1.bf16.msra.mxu0 0
    %187 = vmatprep.subr.bf16.mxu0 0
    %188 = vmatpush1.bf16.msra.mxu0 0
    %189 = vmatprep.subr.bf16.mxu0 0
    %190 = vmatpush1.bf16.msra.mxu0 0
    %191 = vmatprep.subr.bf16.mxu0 0
    %192 = vmatpush1.bf16.msra.mxu0 0
    %193 = vmatprep.subr.bf16.mxu0 0
    %194 = vmatpush1.bf16.msra.mxu0 0
    %195 = vmatprep.subr.bf16.mxu0 0
    %196 = vmatpush1.bf16.msra.mxu0 0
    %197 = vmatprep.subr.bf16.mxu0 0
    %198 = vmatpush1.bf16.msra.mxu0 0
    %199 = vmatprep.subr.bf16.mxu0 0
    %200 = vmatpush1.bf16.msra.mxu0 0
    %201 = vmatprep.mubr.bf16.mxu0 0
    %202 = vmatmul.mubr.bf16.gmra.mrb[0].mxu0 %v60
    %v203 = vpop.f32.mrb[0].mxu0
    %v204 = vadd.f32 %v82, %v203
    %v205 = vpop.f32.mrb[0].mxu0
    %v206 = vadd.f32 %v86, %v205
    %v207 = vpop.f32.mrb[0].mxu0
    %v208 = vpop.f32.mrb[0].mxu0
    %209 = vdwg.mxu0
    %v210 = vmax.f32 %v204, 0.0
    %v211 = vmax.f32 %v206, 0.0
    %v212 = vpack.c.bf16 %v210, %v210
    %v213 = vpack.c.bf16 %v211, %v211
    %v214 = vld [vmem:[%s7] sm:$0xf]
    %v215 = vld [vmem:[%s7 + $0x4] sm:$0xf]
    %v216 = vld [vmem:[%s7 + $0x8] sm:$0xf]
    %v217 = vld [vmem:[%s7 + $0xc] sm:$0xf]
    %v218 = vld [vmem:[%s7 + $0x10] sm:$0xf]
    %v219 = vld [vmem:[%s7 + $0x14] sm:$0xf]
    %v220 = vld [vmem:[%s7 + $0x18] sm:$0xf]
    %v221 = vld [vmem:[%s7 + $0x1c] sm:$0xf]
    %v222 = vld [vmem:[%s7 + $0x20] sm:$0xf]
    %v223 = vld [vmem:[%s7 + $0x24] sm:$0xf]
    %v224 = vld [vmem:[%s7 + $0x28] sm:$0xf]
    %v225 = vld [vmem:[%s7 + $0x2c] sm:$0xf]
    %v226 = vld [vmem:[%s7 + $0x30] sm:$0xf]
    %v227 = vld [vmem:[%s7 + $0x34] sm:$0xf]
    %v228 = vld [vmem:[%s7 + $0x38] sm:$0xf]
    %v229 = vld [vmem:[%s7 + $0x3c] sm:$0xf]
    %v230 = vld [vmem:[%s7 + $0x40] sm:$0xf]
    %v231 = vld [vmem:[%s7 + $0x44] sm:$0xf]
    %v232 = vld [vmem:[%s7 + $0x48] sm:$0xf]
    %v233 = vld [vmem:[%s7 + $0x4c] sm:$0xf]
    %v234 = vld [vmem:[%s7 + $0x50] sm:$0xf]
    %v235 = vld [vmem:[%s7 + $0x54] sm:$0xf]
    %v236 = vld [vmem:[%s7 + $0x58] sm:$0xf]
    %v237 = vld [vmem:[%s7 + $0x5c] sm:$0xf]
    %v238 = vld [vmem:[%s7 + $0x60] sm:$0xf]
    %v239 = vld [vmem:[%s7 + $0x64] sm:$0xf]
    %v240 = vld [vmem:[%s7 + $0x68] sm:$0xf]
    %v241 = vld [vmem:[%s7 + $0x6c] sm:$0xf]
    %v242 = vld [vmem:[%s7 + $0x70] sm:$0xf]
    %v243 = vld [vmem:[%s7 + $0x74] sm:$0xf]
    %v244 = vld [vmem:[%s7 + $0x78] sm:$0xf]
    %v245 = vld [vmem:[%s7 + $0x7c] sm:$0xf]
    %v246 = vld [vmem:[%s8] sm:$0x1]
    %v248 = vlaneseq
    %v249 = vshrl.u32 %v248, 7
    %v250 = vsub.s32 0, %v249
    %v251 = vrot.slane %v246, %v250
    %v285 = vunpack.c.l.b16 %v214
    %v286 = vunpack.c.l.b16 %v215
    %v287 = vunpack.c.l.b16 %v216
    %v288 = vunpack.c.l.b16 %v217
    %v289 = vunpack.c.l.b16 %v218
    %v290 = vunpack.c.l.b16 %v219
    %v291 = vunpack.c.l.b16 %v220
    %v292 = vunpack.c.l.b16 %v221
    %v293 = vunpack.c.l.b16 %v222
    %v294 = vunpack.c.l.b16 %v223
    %v295 = vunpack.c.l.b16 %v224
    %v296 = vunpack.c.l.b16 %v225
    %v297 = vunpack.c.l.b16 %v226
    %v298 = vunpack.c.l.b16 %v227
    %v299 = vunpack.c.l.b16 %v228
    %v300 = vunpack.c.l.b16 %v229
    %v301 = vunpack.c.l.b16 %v230
    %v302 = vunpack.c.l.b16 %v231
    %v303 = vunpack.c.l.b16 %v232
    %v304 = vunpack.c.l.b16 %v233
    %v305 = vunpack.c.l.b16 %v234
    %v306 = vunpack.c.l.b16 %v235
    %v307 = vunpack.c.l.b16 %v236
    %v308 = vunpack.c.l.b16 %v237
    %v309 = vunpack.c.l.b16 %v238
    %v310 = vunpack.c.l.b16 %v239
    %v311 = vunpack.c.l.b16 %v240
    %v312 = vunpack.c.l.b16 %v241
    %v313 = vunpack.c.l.b16 %v242
    %v314 = vunpack.c.l.b16 %v243
    %v315 = vunpack.c.l.b16 %v244
    %v316 = vunpack.c.l.b16 %v245
    %v317 = vpack.c.b16 %v286, %v285
    %v318 = vpack.c.b16 %v288, %v287
    %v319 = vpack.c.b16 %v290, %v289
    %v320 = vpack.c.b16 %v292, %v291
    %v321 = vpack.c.b16 %v294, %v293
    %v322 = vpack.c.b16 %v296, %v295
    %v323 = vpack.c.b16 %v298, %v297
    %v324 = vpack.c.b16 %v300, %v299
    %v325 = vpack.c.b16 %v302, %v301
    %v326 = vpack.c.b16 %v304, %v303
    %v327 = vpack.c.b16 %v306, %v305
    %v328 = vpack.c.b16 %v308, %v307
    %v329 = vpack.c.b16 %v310, %v309
    %v330 = vpack.c.b16 %v312, %v311
    %v331 = vpack.c.b16 %v314, %v313
    %v332 = vpack.c.b16 %v316, %v315
    %349 = vmatprep.subr.bf16.mxu0 0
    %350 = vmatpush1.bf16.msra.mxu0 %v317
    %351 = vmatprep.subr.bf16.mxu0 0
    %352 = vmatpush1.bf16.msra.mxu0 %v318
    %353 = vmatprep.subr.bf16.mxu0 0
    %354 = vmatpush1.bf16.msra.mxu0 %v319
    %355 = vmatprep.subr.bf16.mxu0 0
    %356 = vmatpush1.bf16.msra.mxu0 %v320
    %357 = vmatprep.subr.bf16.mxu0 0
    %358 = vmatpush1.bf16.msra.mxu0 %v321
    %359 = vmatprep.subr.bf16.mxu0 0
    %360 = vmatpush1.bf16.msra.mxu0 %v322
    %361 = vmatprep.subr.bf16.mxu0 0
    %362 = vmatpush1.bf16.msra.mxu0 %v323
    %363 = vmatprep.subr.bf16.mxu0 0
    %364 = vmatpush1.bf16.msra.mxu0 %v324
    %365 = vmatprep.subr.bf16.mxu0 0
    %366 = vmatpush1.bf16.msra.mxu0 %v325
    %367 = vmatprep.subr.bf16.mxu0 0
    %368 = vmatpush1.bf16.msra.mxu0 %v326
    %369 = vmatprep.subr.bf16.mxu0 0
    %370 = vmatpush1.bf16.msra.mxu0 %v327
    %371 = vmatprep.subr.bf16.mxu0 0
    %372 = vmatpush1.bf16.msra.mxu0 %v328
    %373 = vmatprep.subr.bf16.mxu0 0
    %374 = vmatpush1.bf16.msra.mxu0 %v329
    %375 = vmatprep.subr.bf16.mxu0 0
    %376 = vmatpush1.bf16.msra.mxu0 %v330
    %377 = vmatprep.subr.bf16.mxu0 0
    %378 = vmatpush1.bf16.msra.mxu0 %v331
    %379 = vmatprep.subr.bf16.mxu0 0
    %380 = vmatpush1.bf16.msra.mxu0 %v332
    %381 = vmatprep.mubr.bf16.mxu0 %v213
    %382 = vmatmul.mubr.bf16.gmra.mrb[0].mxu0 %v212
    %v383 = vpop.f32.mrb[0].mxu0
    %v384 = vadd.f32 %v251, %v383
    %v385 = vpop.f32.mrb[0].mxu0
    %v386 = vpop.f32.mrb[0].mxu0
    %v387 = vpop.f32.mrb[0].mxu0
    %388 = vdwg.mxu0
    %v389 = vmax.f32 %v384, 0.0
    %v390 = vpack.c.bf16 %v389, %v389
    %v391 = vld [vmem:[%s9] sm:$0xf]
    %v392 = vld [vmem:[%s9 + $0x4] sm:$0xf]
    %v393 = vld [vmem:[%s9 + $0x8] sm:$0xf]
    %v394 = vld [vmem:[%s9 + $0xc] sm:$0xf]
    %v395 = vld [vmem:[%s9 + $0x10] sm:$0xf]
    %v396 = vld [vmem:[%s9 + $0x14] sm:$0xf]
    %v397 = vld [vmem:[%s9 + $0x18] sm:$0xf]
    %v398 = vld [vmem:[%s9 + $0x1c] sm:$0xf]
    %v399 = vld [vmem:[%s9 + $0x20] sm:$0xf]
    %v400 = vld [vmem:[%s9 + $0x24] sm:$0xf]
    %v401 = vld [vmem:[%s9 + $0x28] sm:$0xf]
    %v402 = vld [vmem:[%s9 + $0x2c] sm:$0xf]
    %v403 = vld [vmem:[%s9 + $0x30] sm:$0xf]
    %v404 = vld [vmem:[%s9 + $0x34] sm:$0xf]
    %v405 = vld [vmem:[%s9 + $0x38] sm:$0xf]
    %v406 = vld [vmem:[%s9 + $0x3c] sm:$0xf]
    %v407 = vld [vmem:[%s10] sm:$0x1]
    %v409 = vlaneseq
    %v410 = vshrl.u32 %v409, 7
    %v411 = vsub.s32 0, %v410
    %v412 = vrot.slane %v407, %v411
    %v430 = vunpack.c.l.b16 %v391
    %v431 = vunpack.c.l.b16 %v392
    %v432 = vunpack.c.l.b16 %v393
    %v433 = vunpack.c.l.b16 %v394
    %v434 = vunpack.c.l.b16 %v395
    %v435 = vunpack.c.l.b16 %v396
    %v436 = vunpack.c.l.b16 %v397
    %v437 = vunpack.c.l.b16 %v398
    %v438 = vunpack.c.l.b16 %v399
    %v439 = vunpack.c.l.b16 %v400
    %v440 = vunpack.c.l.b16 %v401
    %v441 = vunpack.c.l.b16 %v402
    %v442 = vunpack.c.l.b16 %v403
    %v443 = vunpack.c.l.b16 %v404
    %v444 = vunpack.c.l.b16 %v405
    %v445 = vunpack.c.l.b16 %v406
    %v446 = vpack.c.b16 %v431, %v430
    %v447 = vpack.c.b16 %v433, %v432
    %v448 = vpack.c.b16 %v435, %v434
    %v449 = vpack.c.b16 %v437, %v436
    %v450 = vpack.c.b16 %v439, %v438
    %v451 = vpack.c.b16 %v441, %v440
    %v452 = vpack.c.b16 %v443, %v442
    %v453 = vpack.c.b16 %v445, %v444
    %462 = vmatprep.subr.bf16.mxu0 0
    %463 = vmatpush1.bf16.msra.mxu0 %v446
    %464 = vmatprep.subr.bf16.mxu0 0
    %465 = vmatpush1.bf16.msra.mxu0 %v447
    %466 = vmatprep.subr.bf16.mxu0 0
    %467 = vmatpush1.bf16.msra.mxu0 %v448
    %468 = vmatprep.subr.bf16.mxu0 0
    %469 = vmatpush1.bf16.msra.mxu0 %v449
    %470 = vmatprep.subr.bf16.mxu0 0
    %471 = vmatpush1.bf16.msra.mxu0 %v450
    %472 = vmatprep.subr.bf16.mxu0 0
    %473 = vmatpush1.bf16.msra.mxu0 %v451
    %474 = vmatprep.subr.bf16.mxu0 0
    %475 = vmatpush1.bf16.msra.mxu0 %v452
    %476 = vmatprep.subr.bf16.mxu0 0
    %477 = vmatpush1.bf16.msra.mxu0 %v453
    %478 = vmatprep.subr.bf16.mxu0 0
    %479 = vmatpush1.bf16.msra.mxu0 0
    %480 = vmatprep.subr.bf16.mxu0 0
    %481 = vmatpush1.bf16.msra.mxu0 0
    %482 = vmatprep.subr.bf16.mxu0 0
    %483 = vmatpush1.bf16.msra.mxu0 0
    %484 = vmatprep.subr.bf16.mxu0 0
    %485 = vmatpush1.bf16.msra.mxu0 0
    %486 = vmatprep.subr.bf16.mxu0 0
    %487 = vmatpush1.bf16.msra.mxu0 0
    %488 = vmatprep.subr.bf16.mxu0 0
    %489 = vmatpush1.bf16.msra.mxu0 0
    %490 = vmatprep.subr.bf16.mxu0 0
    %491 = vmatpush1.bf16.msra.mxu0 0
    %492 = vmatprep.subr.bf16.mxu0 0
    %493 = vmatpush1.bf16.msra.mxu0 0
    %494 = vmatprep.mubr.bf16.mxu0 0
    %495 = vmatmul.mubr.bf16.gmra.mrb[0].mxu0 %v390
    %v496 = vpop.f32.mrb[0].mxu0
    %v497 = vadd.f32 %v412, %v496
    %v498 = vpop.f32.mrb[0].mxu0
    %v499 = vpop.f32.mrb[0].mxu0
    %v500 = vpop.f32.mrb[0].mxu0
    %501 = vdwg.mxu0
    %v502 = vmax.f32 %v497, 0.0
    %v503 = vpack.c.bf16 %v502, %v502
    %v504 = vld [vmem:[%s11] sm:$0xf]
    %v505 = vld [vmem:[%s11 + $0x4] sm:$0xf]
    %v506 = vld [vmem:[%s11 + $0x8] sm:$0xf]
    %v507 = vld [vmem:[%s11 + $0xc] sm:$0xf]
    %v508 = vld [vmem:[%s11 + $0x10] sm:$0xf]
    %v509 = vld [vmem:[%s11 + $0x14] sm:$0xf]
    %v510 = vld [vmem:[%s11 + $0x18] sm:$0xf]
    %v511 = vld [vmem:[%s11 + $0x1c] sm:$0xf]
    %v512 = vld [vmem:[%s12] sm:$0x1]
    %v514 = vlaneseq
    %v515 = vshrl.u32 %v514, 7
    %v516 = vsub.s32 0, %v515
    %v517 = vrot.slane %v512, %v516
    %v527 = vunpack.c.l.b16 %v504
    %v528 = vunpack.c.l.b16 %v505
    %v529 = vunpack.c.l.b16 %v506
    %v530 = vunpack.c.l.b16 %v507
    %v531 = vunpack.c.l.b16 %v508
    %v532 = vunpack.c.l.b16 %v509
    %v533 = vunpack.c.l.b16 %v510
    %v534 = vunpack.c.l.b16 %v511
    %v535 = vpack.c.b16 %v528, %v527
    %v536 = vpack.c.b16 %v530, %v529
    %v537 = vpack.c.b16 %v532, %v531
    %v538 = vpack.c.b16 %v534, %v533
    %vm543 = vcmask 523264
    %v545 = vsel %vm543, %v503, 0
    %547 = vmatprep.subr.bf16.mxu0 0
    %548 = vmatpush1.bf16.msra.mxu0 %v535
    %549 = vmatprep.subr.bf16.mxu0 0
    %550 = vmatpush1.bf16.msra.mxu0 %v536
    %551 = vmatprep.subr.bf16.mxu0 0
    %552 = vmatpush1.bf16.msra.mxu0 %v537
    %553 = vmatprep.subr.bf16.mxu0 0
    %554 = vmatpush1.bf16.msra.mxu0 %v538
    %555 = vmatprep.subr.bf16.mxu0 0
    %556 = vmatpush1.bf16.msra.mxu0 0
    %557 = vmatprep.subr.bf16.mxu0 0
    %558 = vmatpush1.bf16.msra.mxu0 0
    %559 = vmatprep.subr.bf16.mxu0 0
    %560 = vmatpush1.bf16.msra.mxu0 0
    %561 = vmatprep.subr.bf16.mxu0 0
    %562 = vmatpush1.bf16.msra.mxu0 0
    %563 = vmatprep.subr.bf16.mxu0 0
    %564 = vmatpush1.bf16.msra.mxu0 0
    %565 = vmatprep.subr.bf16.mxu0 0
    %566 = vmatpush1.bf16.msra.mxu0 0
    %567 = vmatprep.subr.bf16.mxu0 0
    %568 = vmatpush1.bf16.msra.mxu0 0
    %569 = vmatprep.subr.bf16.mxu0 0
    %570 = vmatpush1.bf16.msra.mxu0 0
    %571 = vmatprep.subr.bf16.mxu0 0
    %572 = vmatpush1.bf16.msra.mxu0 0
    %573 = vmatprep.subr.bf16.mxu0 0
    %574 = vmatpush1.bf16.msra.mxu0 0
    %575 = vmatprep.subr.bf16.mxu0 0
    %576 = vmatpush1.bf16.msra.mxu0 0
    %577 = vmatprep.subr.bf16.mxu0 0
    %578 = vmatpush1.bf16.msra.mxu0 0
    %579 = vmatprep.mubr.bf16.mxu0 0
    %580 = vmatmul.mubr.bf16.gmra.mrb[0].mxu0 %v545
    %v581 = vpop.f32.mrb[0].mxu0
    %v582 = vadd.f32 %v517, %v581
    %v583 = vpop.f32.mrb[0].mxu0
    %v584 = vpop.f32.mrb[0].mxu0
    %v585 = vpop.f32.mrb[0].mxu0
    %586 = vdwg.mxu0
    %vm587 = vcmask 60416
    %v588 = vsel %vm587, %v582, -inf
    %589 = vmax.xlane.f32.xlu0 %v588
    %v590 = vpop.xlane.xlu0 %589
    %v591 = vsub.f32 %v582, %v590
    %v592 = vmul.f32 %v591, 1.442695
    %v593 = vpow.pop %v592
    %v594 = vsel %vm587, %v593, 0.0
    %595 = vadd.xlane.f32.xlu0 %v594
    %v596 = vpop.xlane.xlu0 %595
    %v597 = vlog2.pop %v596
    %v598 = vmul.f32 %v597, 0.6931472
    %v599 = vadd.f32 %v590, %v598
    %v600 = vlaneseq
    %v601 = vshrl.u32 %v600, 7
    %v602 = vlaneseq
    %v603 = vand.u32 %v602, 127
    %vm604 = vcmp.eq.s32.totalorder %v601, 0
    %s605 = sld [smem:[#allocation2]]
    %v606 = vstv %s605
    %vm607 = vcmp.eq.s32.totalorder %v603, %v606
    %vm608 = vmand %vm604, %vm607
    %v609 = vsel %vm608, 1.0, 0.0
    %v610 = vadd.f32 %v609, 0.0
    %vm611 = vcmp.eq.s32.totalorder %v601, 1
    %s612 = sld [smem:[#allocation2 + $0x1]]
    %v613 = vstv %s612
    %vm614 = vcmp.eq.s32.totalorder %v603, %v613
    %vm615 = vmand %vm611, %vm614
    %v616 = vsel %vm615, 1.0, 0.0
    %v617 = vadd.f32 %v610, %v616
    %vm618 = vcmp.eq.s32.totalorder %v601, 2
    %s619 = sld [smem:[#allocation2 + $0x2]]
    %v620 = vstv %s619
    %vm621 = vcmp.eq.s32.totalorder %v603, %v620
    %vm622 = vmand %vm618, %vm621
    %v623 = vsel %vm622, 1.0, 0.0
    %v624 = vadd.f32 %v617, %v623
    %vm625 = vcmp.eq.s32.totalorder %v601, 3
    %s626 = sld [smem:[#allocation2 + $0x3]]
    %v627 = vstv %s626
    %vm628 = vcmp.eq.s32.totalorder %v603, %v627
    %vm629 = vmand %vm625, %vm628
    %v630 = vsel %vm629, 1.0, 0.0
    %v631 = vadd.f32 %v624, %v630
    %vm632 = vcmask 3072
    %v633 = vsel %vm632, %v599, 0.0
    %634 = vadd.xlane.f32.xlu0 %v633
    %v635 = vpop.xlane.xlu0 %634
    %v636 = vrot.slane %v635, 4
    %v637 = vadd.f32 %v635, %v636
    %v638 = vrot.slane %v637, 2
    %v639 = vadd.f32 %v637, %v638
    %v640 = vrot.slane %v639, 1
    %v641 = vadd.f32 %v639, %v640
    %s642 = vtos %v641
    %v643 = vmul.f32 %v582, %v631
    %v644 = vsel %vm587, %v643, 0.0
    %645 = vadd.xlane.f32.xlu0 %v644
    %v646 = vpop.xlane.xlu0 %645
    %v647 = vrot.slane %v646, 4
    %v648 = vadd.f32 %v646, %v647
    %v649 = vrot.slane %v648, 2
    %v650 = vadd.f32 %v648, %v649
    %v651 = vrot.slane %v650, 1
    %v652 = vadd.f32 %v650, %v651
    %s653 = vtos %v652
    %s654 = ssub.f32 %s642, %s653
    %v655 = vrcp.pop 4.0
    %s656 = vtos %v655
    %s657 = smul.f32 %s654, %s656
    %v658 = vld [vmem:[%s0] sm:$0xff]
    %vm659 = vcmp.lt.s32.totalorder %v601, 4
    %vm660 = vcmp.eq.s32.totalorder %v603, 0
    %vm661 = vmand %vm659, %vm660
    %vm662 = vcmp.ge.s32.totalorder %v601, 4
    %vm663 = vcmp.eq.s32.totalorder %v603, 1
    %vm664 = vmand %vm662, %vm663
    %v665 = vsel %vm664, 1.0, 0.0
    %v666 = vsel %vm661, 1.0, %v665
    %v667 = vmax.f32 %v658, 0.0
    %v668 = vmul.f32 %v658, %v666
    %v669 = vsub.f32 %v667, %v668
    %v670 = vand.u32 2147483647, %v658
    %v671 = vsub.f32 0.0, %v670
    %v672 = vmul.f32 %v671, 1.442695
    %v673 = vpow.pop %v672
    %v674 = vadd.f32 %v673, 1.0
    %v675 = vlog2.pop %v674
    %v676 = vmul.f32 %v675, 0.6931472
    %v677 = vmul.f32 -0.5, %v673
    %v678 = vadd.f32 %v677, 1.0
    %v679 = vmul.f32 %v678, %v673
    %v680 = vand.u32 2147483647, %v673
    %vm681 = vcmp.lt.f32.partialorder %v680, 0.0004427343
    %v682 = vsel %vm681, %v679, %v676
    %v683 = vadd.f32 %v669, %v682
    %vm684 = vcmask 15360
    %v685 = vsel %vm684, %v683, 0.0
    %686 = vadd.xlane.f32.xlu0 %v685
    %v687 = vpop.xlane.xlu0 %686
    %v688 = vrot.slane %v687, 4
    %v689 = vadd.f32 %v687, %v688
    %v690 = vrot.slane %v689, 2
    %v691 = vadd.f32 %v689, %v690
    %v692 = vrot.slane %v691, 1
    %v693 = vadd.f32 %v691, %v692
    %s694 = vtos %v693
    %v695 = vrcp.pop 2.0
    %s696 = vtos %v695
    %s697 = smul.f32 %s694, %s696
    %v698 = vld [vmem:[%s1] sm:$0xf]
    %v699 = vld [vmem:[%s2] sm:$0xf]
    %v700 = vsub.f32 %v698, %v699
    %v701 = vand.u32 2147483647, %v700
    %vm702 = vcmp.lt.f32.partialorder %v701, 1.0
    %v703 = vmul.f32 %v700, 0.5
    %v704 = vmul.f32 %v703, %v700
    %v705 = vsub.f32 %v701, 0.5
    %v706 = vsel %vm702, %v704, %v705
    %vm707 = vcmask 27648
    %v708 = vsel %vm707, %v706, 0.0
    %709 = vadd.xlane.f32.xlu0 %v708
    %v710 = vpop.xlane.xlu0 %709
    %v711 = vrot.slane %v710, 4
    %v712 = vadd.f32 %v710, %v711
    %v713 = vrot.slane %v712, 2
    %v714 = vadd.f32 %v712, %v713
    %v715 = vrot.slane %v714, 1
    %v716 = vadd.f32 %v714, %v715
    %s717 = vtos %v716
    %v718 = vrcp.pop 2.0
    %s719 = vtos %v718
    %s720 = smul.f32 %s717, %s719
    %s721 = smul.f32 %s720, 5.0
    %s722 = sadd.f32 %s697, %s721
    %s723 = sadd.f32 %s722, %s657
    %s724 = scalar_lea.smem [#allocation5], 0
    %725 = sst [smem:[%s724]] %s723
    // Predicated region
    $region58: #{two_stage_detector_forward.3} parent=1 // pred_check
      _
    $region59: #{two_stage_detector_forward.3} parent=1 // pred_check_branch
      %727 = sbr.rel (0) target = $region61
    $region60: #{two_stage_detector_forward.3} parent=1 // pred_region
      %s729 = ssub.s32 16, 16
      %730 = vsyncadd [#allocation3], %s729
      %733 = dma.smem_to_hbm [#allocation5], 16, %s13, [#allocation3]
    $region61: #{two_stage_detector_forward.3} parent=1 // pred_fallthru
      _
    // Predicated region
    $region62: #{two_stage_detector_forward.3} parent=1 // pred_check
      _
    $region63: #{two_stage_detector_forward.3} parent=1 // pred_check_branch
      %735 = sbr.rel (0) target = $region65
    $region64: #{two_stage_detector_forward.3} parent=1 // pred_region
      %736 = dma.done [#allocation3], 16
    $region65: #{two_stage_detector_forward.3} parent=1 // pred_fallthru
      _
    %737 = sfence
    %738 = vsyncpa [#allocation3], 1
    %739 = vsyncpa [#allocation4], 1

// kernel: two_stage_detector_forward.2
$region0: #{two_stage_detector_forward.2}
  #allocation0 [shape = 'u32[]', space=smem, size = 0x4, offset = 0x4, fixed_abs, tag = 'smem constant byte address 0x4 - core index']
  #allocation1 [shape = 'u32[144,128]{1,0:T(1,128)}', space=vmem, size = 0x12000, scoped, tag = 'internal scratch']
  %s0 = inlined_call_operand.vmem [shape: f32[2,6,6,48], index: 0, kind: input, shape index: {}]
  %s1 = inlined_call_operand.vmem [shape: bf16[48,128], index: 1, kind: input, shape index: {}]
  %s2 = inlined_call_operand.vmem [shape: f32[1,128], index: 2, kind: input, shape index: {}]
  %s3 = inlined_call_operand.vmem [shape: bf16[1152,128], index: 3, kind: input, shape index: {}]
  %s4 = inlined_call_operand.vmem [shape: f32[1,128], index: 4, kind: input, shape index: {}]
  %s5 = inlined_call_operand.vmem [shape: bf16[128,128], index: 5, kind: input, shape index: {}]
  %s6 = inlined_call_operand.vmem [shape: f32[1,128], index: 6, kind: input, shape index: {}]
  %s7 = inlined_call_operand.vmem [shape: f32[2,6,6,128], index: 7, kind: output, shape index: {0}]
  %s8 = inlined_call_operand.vmem [shape: f32[2,4,4,128], index: 8, kind: output, shape index: {1}]
  %9 = xla_tuple %s7, %s8
  %s10 = sld [smem:[#allocation0]]
  $region69: #{two_stage_detector_forward.2} parent=0
    _
  %s12 = ssub.s32 1, %s10
  %s13 = scalar_select 0, %s12, %s10
  loop: start=0, step=1, limit=4
  $region2: #{two_stage_detector_forward.2} parent=0 // loop_pre_header
    _
  $region3: #{two_stage_detector_forward.2} parent=0 // loop_header
    %s15 = sphi 0, %s19
    %p16 = scmp.ge.s32.totalorder %s15, 4
    %s25 = sphi 0, %s27
    %s28 = sphi 0, %s25
    %s29 = sphi 0, %s28
    %s45 = sphi 0, %s29
    %s49 = sphi 0, %s49
    %s51 = sphi 0, %s49
    %s52 = sphi 0, %s51
    %s66 = sphi 0, %s52
    %s70 = sphi 0, %s70
    %s72 = sphi 0, %s70
    %s73 = sphi 0, %s72
    %s87 = sphi 0, %s73
    %s91 = sphi 0, %s91
    %s93 = sphi 0, %s91
    %s94 = sphi 0, %s93
    %s108 = sphi 0, %s94
    %s112 = sphi 0, %s112
    %s114 = sphi 0, %s112
    %s115 = sphi 0, %s114
    %s129 = sphi 0, %s115
    %s133 = sphi 0, %s133
    %s135 = sphi 0, %s133
    %s136 = sphi 0, %s135
    %s150 = sphi 0, %s136
    %s154 = sphi 0, %s154
    %s156 = sphi 0, %s154
    %s157 = sphi 0, %s156
    %s171 = sphi 0, %s157
    %s177 = sphi 0, %s179
    %s180 = sphi 0, %s177
    %s181 = sphi 0, %s180
    %s197 = sphi 0, %s181
    %s203 = sphi 0, %s205
    %s206 = sphi 0, %s203
    %s207 = sphi 0, %s206
    %s223 = sphi 0, %s207
  $region4: #{two_stage_detector_forward.2} parent=0 // loop_header_branch
    %18 = sbr.rel (%p16) target = $region8
  $region5: #{two_stage_detector_forward.2} parent=0 // loop_body
    %s20 = ssub.s32 %s15, 1
    %s21 = ssub.s32 %s15, 2
    %s22 = sadd.s32 %s15, 1
    %s23 = ssub.s32 %s15, %s22
    %p24 = scmp.eq.s32.totalorder %s23, 0
    %s26 = sadd.s32 %s25, 1
    %s27 = scalar_select %p24, %s25, %s26
    %p30 = pneg %p24
    %p31 = scmp.eq.s32.totalorder %s15, 1
    %p32 = por %p30, %p31
    %p33 = scmp.ne.s32.totalorder %s25, %s28
    %p34 = scmp.eq.s32.totalorder %s15, 0
    %p35 = por %p33, %p34
    %p36 = scmp.ne.s32.totalorder %s25, %s28
    %p37 = scmp.eq.s32.totalorder %s20, 1
    %p38 = por %p36, %p37
    %p39 = scmp.ne.s32.totalorder %s28, %s29
    %p40 = scmp.eq.s32.totalorder %s20, 0
    %p41 = por %p39, %p40
    %p42 = scmp.ne.s32.totalorder %s28, %s29
    %p43 = scmp.eq.s32.totalorder %s21, 1
    %p44 = por %p42, %p43
    %p46 = scmp.ne.s32.totalorder %s29, %s45
    %p47 = scmp.eq.s32.totalorder %s21, 0
    %p48 = por %p46, %p47
    %s50 = sadd.s32 %s49, 1
    %p53 = scmp.eq.s32.totalorder %s15, 1
    %p54 = scmp.ne.s32.totalorder %s49, %s51
    %p55 = scmp.eq.s32.totalorder %s15, 0
    %p56 = por %p54, %p55
    %p57 = scmp.ne.s32.totalorder %s49, %s51
    %p58 = scmp.eq.s32.totalorder %s20, 1
    %p59 = por %p57, %p58
    %p60 = scmp.ne.s32.totalorder %s51, %s52
    %p61 = scmp.eq.s32.totalorder %s20, 0
    %p62 = por %p60, %p61
    %p63 = scmp.ne.s32.totalorder %s51, %s52
    %p64 = scmp.eq.s32.totalorder %s21, 1
    %p65 = por %p63, %p64
    %p67 = scmp.ne.s32.totalorder %s52, %s66
    %p68 = scmp.eq.s32.totalorder %s21, 0
    %p69 = por %p67, %p68
    %s71 = sadd.s32 %s70, 1
    %p74 = scmp.eq.s32.totalorder %s15, 1
    %p75 = scmp.ne.s32.totalorder %s70, %s72
    %p76 = scmp.eq.s32.totalorder %s15, 0
    %p77 = por %p75, %p76
    %p78 = scmp.ne.s32.totalorder %s70, %s72
    %p79 = scmp.eq.s32.totalorder %s20, 1
    %p80 = por %p78, %p79
    %p81 = scmp.ne.s32.totalorder %s72, %s73
    %p82 = scmp.eq.s32.totalorder %s20, 0
    %p83 = por %p81, %p82
    %p84 = scmp.ne.s32.totalorder %s72, %s73
    %p85 = scmp.eq.s32.totalorder %s21, 1
    %p86 = por %p84, %p85
    %p88 = scmp.ne.s32.totalorder %s73, %s87
    %p89 = scmp.eq.s32.totalorder %s21, 0
    %p90 = por %p88, %p89
    %s92 = sadd.s32 %s91, 1
    %p95 = scmp.eq.s32.totalorder %s15, 1
    %p96 = scmp.ne.s32.totalorder %s91, %s93
    %p97 = scmp.eq.s32.totalorder %s15, 0
    %p98 = por %p96, %p97
    %p99 = scmp.ne.s32.totalorder %s91, %s93
    %p100 = scmp.eq.s32.totalorder %s20, 1
    %p101 = por %p99, %p100
    %p102 = scmp.ne.s32.totalorder %s93, %s94
    %p103 = scmp.eq.s32.totalorder %s20, 0
    %p104 = por %p102, %p103
    %p105 = scmp.ne.s32.totalorder %s93, %s94
    %p106 = scmp.eq.s32.totalorder %s21, 1
    %p107 = por %p105, %p106
    %p109 = scmp.ne.s32.totalorder %s94, %s108
    %p110 = scmp.eq.s32.totalorder %s21, 0
    %p111 = por %p109, %p110
    %s113 = sadd.s32 %s112, 1
    %p116 = scmp.eq.s32.totalorder %s15, 1
    %p117 = scmp.ne.s32.totalorder %s112, %s114
    %p118 = scmp.eq.s32.totalorder %s15, 0
    %p119 = por %p117, %p118
    %p120 = scmp.ne.s32.totalorder %s112, %s114
    %p121 = scmp.eq.s32.totalorder %s20, 1
    %p122 = por %p120, %p121
    %p123 = scmp.ne.s32.totalorder %s114, %s115
    %p124 = scmp.eq.s32.totalorder %s20, 0
    %p125 = por %p123, %p124
    %p126 = scmp.ne.s32.totalorder %s114, %s115
    %p127 = scmp.eq.s32.totalorder %s21, 1
    %p128 = por %p126, %p127
    %p130 = scmp.ne.s32.totalorder %s115, %s129
    %p131 = scmp.eq.s32.totalorder %s21, 0
    %p132 = por %p130, %p131
    %s134 = sadd.s32 %s133, 1
    %p137 = scmp.eq.s32.totalorder %s15, 1
    %p138 = scmp.ne.s32.totalorder %s133, %s135
    %p139 = scmp.eq.s32.totalorder %s15, 0
    %p140 = por %p138, %p139
    %p141 = scmp.ne.s32.totalorder %s133, %s135
    %p142 = scmp.eq.s32.totalorder %s20, 1
    %p143 = por %p141, %p142
    %p144 = scmp.ne.s32.totalorder %s135, %s136
    %p145 = scmp.eq.s32.totalorder %s20, 0
    %p146 = por %p144, %p145
    %p147 = scmp.ne.s32.totalorder %s135, %s136
    %p148 = scmp.eq.s32.totalorder %s21, 1
    %p149 = por %p147, %p148
    %p151 = scmp.ne.s32.totalorder %s136, %s150
    %p152 = scmp.eq.s32.totalorder %s21, 0
    %p153 = por %p151, %p152
    %s155 = sadd.s32 %s154, 1
    %p158 = scmp.eq.s32.totalorder %s15, 1
    %p159 = scmp.ne.s32.totalorder %s154, %s156
    %p160 = scmp.eq.s32.totalorder %s15, 0
    %p161 = por %p159, %p160
    %p162 = scmp.ne.s32.totalorder %s154, %s156
    %p163 = scmp.eq.s32.totalorder %s20, 1
    %p164 = por %p162, %p163
    %p165 = scmp.ne.s32.totalorder %s156, %s157
    %p166 = scmp.eq.s32.totalorder %s20, 0
    %p167 = por %p165, %p166
    %p168 = scmp.ne.s32.totalorder %s156, %s157
    %p169 = scmp.eq.s32.totalorder %s21, 1
    %p170 = por %p168, %p169
    %p172 = scmp.ne.s32.totalorder %s157, %s171
    %p173 = scmp.eq.s32.totalorder %s21, 0
    %p174 = por %p172, %p173
    %s175 = ssub.s32 %s15, %s22
    %p176 = scmp.eq.s32.totalorder %s175, 0
    %s178 = sadd.s32 %s177, 1
    %s179 = scalar_select %p176, %s177, %s178
    %p182 = pneg %p176
    %p183 = scmp.eq.s32.totalorder %s15, 1
    %p184 = por %p182, %p183
    %p185 = scmp.ne.s32.totalorder %s177, %s180
    %p186 = scmp.eq.s32.totalorder %s15, 0
    %p187 = por %p185, %p186
    %p188 = scmp.ne.s32.totalorder %s177, %s180
    %p189 = scmp.eq.s32.totalorder %s20, 1
    %p190 = por %p188, %p189
    %p191 = scmp.ne.s32.totalorder %s180, %s181
    %p192 = scmp.eq.s32.totalorder %s20, 0
    %p193 = por %p191, %p192
    %p194 = scmp.ne.s32.totalorder %s180, %s181
    %p195 = scmp.eq.s32.totalorder %s21, 1
    %p196 = por %p194, %p195
    %p198 = scmp.ne.s32.totalorder %s181, %s197
    %p199 = scmp.eq.s32.totalorder %s21, 0
    %p200 = por %p198, %p199
    %s201 = ssub.s32 %s15, %s22
    %p202 = scmp.eq.s32.totalorder %s201, 0
    %s204 = sadd.s32 %s203, 1
    %s205 = scalar_select %p202, %s203, %s204
    %p208 = pneg %p202
    %p209 = scmp.eq.s32.totalorder %s15, 1
    %p210 = por %p208, %p209
    %p211 = scmp.ne.s32.totalorder %s203, %s206
    %p212 = scmp.eq.s32.totalorder %s15, 0
    %p213 = por %p211, %p212
    %p214 = scmp.ne.s32.totalorder %s203, %s206
    %p215 = scmp.eq.s32.totalorder %s20, 1
    %p216 = por %p214, %p215
    %p217 = scmp.ne.s32.totalorder %s206, %s207
    %p218 = scmp.eq.s32.totalorder %s20, 0
    %p219 = por %p217, %p218
    %p220 = scmp.ne.s32.totalorder %s206, %s207
    %p221 = scmp.eq.s32.totalorder %s21, 1
    %p222 = por %p220, %p221
    %p224 = scmp.ne.s32.totalorder %s207, %s223
    %p225 = scmp.eq.s32.totalorder %s21, 0
    %p226 = por %p224, %p225
    %p227 = scmp.le.s32.totalorder 1, %s15
    %p228 = scmp.lt.s32.totalorder %s15, 3
    %p229 = pnand %p227, %p228
    %p230 = pneg %p229
    // Predicated region
    $region9: #{two_stage_detector_forward.2} parent=5 // pred_check
      _
    $region10: #{two_stage_detector_forward.2} parent=5 // pred_check_branch
      %232 = sbr.rel (%p229) target = $region12
    $region11: #{two_stage_detector_forward.2} parent=5 // pred_region
      %s233 = ssub.s32 %s15, 1
      // Predicated region
      $region13: #{two_stage_detector_forward.2} parent=11 // pred_check
        %p234 = pneg %p62
      $region14: #{two_stage_detector_forward.2} parent=11 // pred_check_branch
        %236 = sbr.rel (%p234) target = $region16
      $region15: #{two_stage_detector_forward.2} parent=11 // pred_region
        _
      $region16: #{two_stage_detector_forward.2} parent=11 // pred_fallthru
        _
      // Predicated region
      $region17: #{two_stage_detector_forward.2} parent=11 // pred_check
        %p237 = pneg %p83
      $region18: #{two_stage_detector_forward.2} parent=11 // pred_check_branch
        %239 = sbr.rel (%p237) target = $region20
      $region19: #{two_stage_detector_forward.2} parent=11 // pred_region
        _
      $region20: #{two_stage_detector_forward.2} parent=11 // pred_fallthru
        _
      // Predicated region
      $region21: #{two_stage_detector_forward.2} parent=11 // pred_check
        %p240 = pneg %p104
      $region22: #{two_stage_detector_forward.2} parent=11 // pred_check_branch
        %242 = sbr.rel (%p240) target = $region24
      $region23: #{two_stage_detector_forward.2} parent=11 // pred_region
        _
      $region24: #{two_stage_detector_forward.2} parent=11 // pred_fallthru
        _
      // Predicated region
      $region25: #{two_stage_detector_forward.2} parent=11 // pred_check
        %p243 = pneg %p125
      $region26: #{two_stage_detector_forward.2} parent=11 // pred_check_branch
        %245 = sbr.rel (%p243) target = $region28
      $region27: #{two_stage_detector_forward.2} parent=11 // pred_region
        _
      $region28: #{two_stage_detector_forward.2} parent=11 // pred_fallthru
        _
      // Predicated region
      $region29: #{two_stage_detector_forward.2} parent=11 // pred_check
        %p246 = pneg %p146
      $region30: #{two_stage_detector_forward.2} parent=11 // pred_check_branch
        %248 = sbr.rel (%p246) target = $region32
      $region31: #{two_stage_detector_forward.2} parent=11 // pred_region
        _
      $region32: #{two_stage_detector_forward.2} parent=11 // pred_fallthru
        _
      // Predicated region
      $region33: #{two_stage_detector_forward.2} parent=11 // pred_check
        %p249 = pneg %p167
      $region34: #{two_stage_detector_forward.2} parent=11 // pred_check_branch
        %251 = sbr.rel (%p249) target = $region36
      $region35: #{two_stage_detector_forward.2} parent=11 // pred_region
        _
      $region36: #{two_stage_detector_forward.2} parent=11 // pred_fallthru
        _
    $region12: #{two_stage_detector_forward.2} parent=5 // pred_fallthru
      _
    %p252 = scmp.lt.s32.totalorder %s15, 2
    // Predicated region
    $region37: #{two_stage_detector_forward.2} parent=5 // pred_check
      %p253 = pneg %p252
    $region38: #{two_stage_detector_forward.2} parent=5 // pred_check_branch
      %255 = sbr.rel (%p253) target = $region40
    $region39: #{two_stage_detector_forward.2} parent=5 // pred_region
      // Predicated region
      $region41: #{two_stage_detector_forward.2} parent=39 // pred_check
        %p256 = pneg %p35
      $region42: #{two_stage_detector_forward.2} parent=39 // pred_check_branch
        %258 = sbr.rel (%p256) target = $region44
      $region43: #{two_stage_detector_forward.2} parent=39 // pred_region
        %p259 = scmp.lt.s32.totalorder %s15, 1
        %s260 = scalar_select %p259, %s15, 1
        %s261 = smul.addr %s260, 6
        %s262 = smul.addr %s261, 8
        %s263 = scalar_lea.vmem %s0, %s262
      $region44: #{two_stage_detector_forward.2} parent=39 // pred_fallthru
        _
    $region40: #{two_stage_detector_forward.2} parent=5 // pred_fallthru
      _
    %p264 = scmp.le.s32.totalorder 1, %s15
    %p265 = scmp.lt.s32.totalorder %s15, 3
    %p266 = pnand %p264, %p265
    %p267 = pneg %p266
    // Predicated region
    $region45: #{two_stage_detector_forward.2} parent=5 // pred_check
      _
    $region46: #{two_stage_detector_forward.2} parent=5 // pred_check_branch
      %269 = sbr.rel (%p266) target = $region48
    $region47: #{two_stage_detector_forward.2} parent=5 // pred_region
      %s270 = ssub.s32 %s15, 1
      %p271 = scmp.lt.s32.totalorder %s20, 1
      %s272 = scalar_select %p271, %s20, 1
      %s273 = smul.addr %s272, 6
      %s274 = smul.addr %s273, 8
      %s275 = scalar_lea.vmem %s0, %s274
      %p276 = pneg %p41
      %p277 = pneg %p38
      %p278 = pneg %p62
      %p279 = pneg %p59
      %p280 = pneg %p83
      %p281 = pneg %p80
      %p282 = pneg %p104
      %p283 = pneg %p101
      %p284 = pneg %p125
      %p285 = pneg %p122
      %p286 = pneg %p146
      %p287 = pneg %p143
      %p288 = pneg %p167
      %p289 = pneg %p164
      %p290 = pneg %p193
      %p291 = pneg %p190
      %p292 = scmp.lt.s32.totalorder %s20, 1
      %s293 = scalar_select %p292, %s20, 1
      %s294 = smul.addr %s293, 6
      %s295 = smul.addr %s294, 8
      %s296 = scalar_lea.vmem %s7, %s295
      %p297 = pneg %p219
      %p298 = pneg %p216
      %p299 = scmp.lt.s32.totalorder %s20, 1
      %s300 = scalar_select %p299, %s20, 1
      %s301 = smul.addr %s300, 4
      %s302 = smul.addr %s301, 4
      %s303 = scalar_lea.vmem %s8, %s302
      %p304 = scmp.lt.s32.totalorder %s20, 1
      %s305 = scalar_select %p304, %s20, 1
      %s306 = smul.addr %s305, 6
      %s307 = smul.addr %s306, 8
      %s308 = scalar_lea.vmem %s0, %s307
      %p309 = scmp.lt.s32.totalorder %s20, 1
      %s310 = scalar_select %p309, %s20, 1
      %s311 = smul.addr %s310, 6
      %s312 = smul.addr %s311, 8
      %s313 = scalar_lea.vmem %s7, %s312
      %p314 = scmp.lt.s32.totalorder %s20, 1
      %s315 = scalar_select %p314, %s20, 1
      %s316 = smul.addr %s315, 4
      %s317 = smul.addr %s316, 4
      %s318 = scalar_lea.vmem %s8, %s317
      %v320 = vlaneseq
      %v321 = vshrl.u32 %v320, 7
      %vm322 = vcmp.ge.s32.totalorder %v321, 1
      %vm323 = vcmp.le.s32.totalorder %v321, 4
      %vm324 = vmand %vm322, %vm323
      %v325 = vsel %vm324, 1.0, 0.0
      %326 = vst [vmem:[%s313] sm:$0x3f] 0.0
      %s327 = scalar_lea.vmem %s313, 40
      %328 = vst [vmem:[%s327] sm:$0x3f] 0.0
      %s329 = scalar_lea.vmem %s308, 8
      %v330 = vld [vmem:[%s329] sm:$0x3f]
      %v331 = vpack.c.bf16 %v330, %v330
      %v332 = vld [vmem:[%s1] sm:$0xf]
      %v333 = vld [vmem:[%s1 + $0x4] sm:$0xf]
      %v334 = vld [vmem:[%s1 + $0x8] sm:$0xf]
      %v335 = vld [vmem:[%s1 + $0xc] sm:$0xf]
      %v336 = vld [vmem:[%s1 + $0x10] sm:$0xf]
      %v337 = vld [vmem:[%s1 + $0x14] sm:$0xf]
      %v338 = vld [vmem:[%s2] sm:$0x1]
      %v340 = vlaneseq
      %v341 = vshrl.u32 %v340, 7
      %v342 = vsub.s32 0, %v341
      %v343 = vrot.slane %v338, %v342
      %v345 = vmul.f32 %v343, %v325
      %v352 = vunpack.c.l.b16 %v332
      %v353 = vunpack.c.l.b16 %v333
      %v354 = vunpack.c.l.b16 %v334
      %v355 = vunpack.c.l.b16 %v335
      %v356 = vunpack.c.l.b16 %v336
      %v357 = vunpack.c.l.b16 %v337
      %v358 = vpack.c.b16 %v353, %v352
      %v359 = vpack.c.b16 %v355, %v354
      %v360 = vpack.c.b16 %v357, %v356
      %vm364 = vcmask 392192
      %v366 = vsel %vm364, %v331, 0
      %368 = vmatprep.subr.bf16.mxu0 0
      %369 = vmatpush1.bf16.msra.mxu0 %v358
      %370 = vmatprep.subr.bf16.mxu0 0
      %371 = vmatpush1.bf16.msra.mxu0 %v359
      %372 = vmatprep.subr.bf16.mxu0 0
      %373 = vmatpush1.bf16.msra.mxu0 %v360
      %374 = vmatprep.subr.bf16.mxu0 0
      %375 = vmatpush1.bf16.msra.mxu0 0
      %376 = vmatprep.subr.bf16.mxu0 0
      %377 = vmatpush1.bf16.msra.mxu0 0
      %378 = vmatprep.subr.bf16.mxu0 0
      %379 = vmatpush1.bf16.msra.mxu0 0
      %380 = vmatprep.subr.bf16.mxu0 0
      %381 = vmatpush1.bf16.msra.mxu0 0
      %382 = vmatprep.subr.bf16.mxu0 0
      %383 = vmatpush1.bf16.msra.mxu0 0
      %384 = vmatprep.subr.bf16.mxu0 0
      %385 = vmatpush1.bf16.msra.mxu0 0
      %386 = vmatprep.subr.bf16.mxu0 0
      %387 = vmatpush1.bf16.msra.mxu0 0
      %388 = vmatprep.subr.bf16.mxu0 0
      %389 = vmatpush1.bf16.msra.mxu0 0
      %390 = vmatprep.subr.bf16.mxu0 0
      %391 = vmatpush1.bf16.msra.mxu0 0
      %392 = vmatprep.subr.bf16.mxu0 0
      %393 = vmatpush1.bf16.msra.mxu0 0
      %394 = vmatprep.subr.bf16.mxu0 0
      %395 = vmatpush1.bf16.msra.mxu0 0
      %396 = vmatprep.subr.bf16.mxu0 0
      %397 = vmatpush1.bf16.msra.mxu0 0
      %398 = vmatprep.subr.bf16.mxu0 0
      %399 = vmatpush1.bf16.msra.mxu0 0
      %400 = vmatprep.mubr.bf16.mxu0 0
      %401 = vmatmul.mubr.bf16.gmra.mrb[0].mxu0 %v366
      %v402 = vpop.f32.mrb[0].mxu0
      %v403 = vadd.f32 %v345, %v402
      %v404 = vpop.f32.mrb[0].mxu0
      %v405 = vpop.f32.mrb[0].mxu0
      %v406 = vpop.f32.mrb[0].mxu0
      %407 = vdwg.mxu0
      %s408 = scalar_lea.vmem %s313, 8
      %409 = vst [vmem:[%s408] sm:$0x3f] %v403
      %s410 = scalar_lea.vmem %s308, 16
      %v411 = vld [vmem:[%s410] sm:$0x3f]
      %v412 = vpack.c.bf16 %v411, %v411
      %v413 = vld [vmem:[%s1] sm:$0xf]
      %v414 = vld [vmem:[%s1 + $0x4] sm:$0xf]
      %v415 = vld [vmem:[%s1 + $0x8] sm:$0xf]
      %v416 = vld [vmem:[%s1 + $0xc] sm:$0xf]
      %v417 = vld [vmem:[%s1 + $0x10] sm:$0xf]
      %v418 = vld [vmem:[%s1 + $0x14] sm:$0xf]
      %v419 = vld [vmem:[%s2] sm:$0x1]
      %v421 = vlaneseq
      %v422 = vshrl.u32 %v421, 7
      %v423 = vsub.s32 0, %v422
      %v424 = vrot.slane %v419, %v423
      %v426 = vmul.f32 %v424, %v325
      %v433 = vunpack.c.l.b16 %v413
      %v434 = vunpack.c.l.b16 %v414
      %v435 = vunpack.c.l.b16 %v415
      %v436 = vunpack.c.l.b16 %v416
      %v437 = vunpack.c.l.b16 %v417
      %v438 = vunpack.c.l.b16 %v418
      %v439 = vpack.c.b16 %v434, %v433
      %v440 = vpack.c.b16 %v436, %v435
      %v441 = vpack.c.b16 %v438, %v437
      %v446 = vsel %vm364, %v412, 0
      %448 = vmatprep.subr.bf16.mxu0 0
      %449 = vmatpush1.bf16.msra.mxu0 %v439
      %450 = vmatprep.subr.bf16.mxu0 0
      %451 = vmatpush1.bf16.msra.mxu0 %v440
      %452 = vmatprep.subr.bf16.mxu0 0
      %453 = vmatpush1.bf16.msra.mxu0 %v441
      %454 = vmatprep.subr.bf16.mxu0 0
      %455 = vmatpush1.bf16.msra.mxu0 0
      %456 = vmatprep.subr.bf16.mxu0 0
      %457 = vmatpush1.bf16.msra.mxu0 0
      %458 = vmatprep.subr.bf16.mxu0 0
      %459 = vmatpush1.bf16.msra.mxu0 0
      %460 = vmatprep.subr.bf16.mxu0 0
      %461 = vmatpush1.bf16.msra.mxu0 0
      %462 = vmatprep.subr.bf16.mxu0 0
      %463 = vmatpush1.bf16.msra.mxu0 0
      %464 = vmatprep.subr.bf16.mxu0 0
      %465 = vmatpush1.bf16.msra.mxu0 0
      %466 = vmatprep.subr.bf16.mxu0 0
      %467 = vmatpush1.bf16.msra.mxu0 0
      %468 = vmatprep.subr.bf16.mxu0 0
      %469 = vmatpush1.bf16.msra.mxu0 0
      %470 = vmatprep.subr.bf16.mxu0 0
      %471 = vmatpush1.bf16.msra.mxu0 0
      %472 = vmatprep.subr.bf16.mxu0 0
      %473 = vmatpush1.bf16.msra.mxu0 0
      %474 = vmatprep.subr.bf16.mxu0 0
      %475 = vmatpush1.bf16.msra.mxu0 0
      %476 = vmatprep.subr.bf16.mxu0 0
      %477 = vmatpush1.bf16.msra.mxu0 0
      %478 = vmatprep.subr.bf16.mxu0 0
      %479 = vmatpush1.bf16.msra.mxu0 0
      %480 = vmatprep.mubr.bf16.mxu0 0
      %481 = vmatmul.mubr.bf16.gmra.mrb[0].mxu0 %v446
      %v482 = vpop.f32.mrb[0].mxu0
      %v483 = vadd.f32 %v426, %v482
      %v484 = vpop.f32.mrb[0].mxu0
      %v485 = vpop.f32.mrb[0].mxu0
      %v486 = vpop.f32.mrb[0].mxu0
      %487 = vdwg.mxu0
      %s488 = scalar_lea.vmem %s313, 16
      %489 = vst [vmem:[%s488] sm:$0x3f] %v483
      %s490 = scalar_lea.vmem %s308, 24
      %v491 = vld [vmem:[%s490] sm:$0x3f]
      %v492 = vpack.c.bf16 %v491, %v491
      %v493 = vld [vmem:[%s1] sm:$0xf]
      %v494 = vld [vmem:[%s1 + $0x4] sm:$0xf]
      %v495 = vld [vmem:[%s1 + $0x8] sm:$0xf]
      %v496 = vld [vmem:[%s1 + $0xc] sm:$0xf]
      %v497 = vld [vmem:[%s1 + $0x10] sm:$0xf]
      %v498 = vld [vmem:[%s1 + $0x14] sm:$0xf]
      %v499 = vld [vmem:[%s2] sm:$0x1]
      %v501 = vlaneseq
      %v502 = vshrl.u32 %v501, 7
      %v503 = vsub.s32 0, %v502
      %v504 = vrot.slane %v499, %v503
      %v506 = vmul.f32 %v504, %v325
      %v513 = vunpack.c.l.b16 %v493
      %v514 = vunpack.c.l.b16 %v494
      %v515 = vunpack.c.l.b16 %v495
      %v516 = vunpack.c.l.b16 %v496
      %v517 = vunpack.c.l.b16 %v497
      %v518 = vunpack.c.l.b16 %v498
      %v519 = vpack.c.b16 %v514, %v513
      %v520 = vpack.c.b16 %v516, %v515
      %v521 = vpack.c.b16 %v518, %v517
      %v526 = vsel %vm364, %v492, 0
      %528 = vmatprep.subr.bf16.mxu0 0
      %529 = vmatpush1.bf16.msra.mxu0 %v519
      %530 = vmatprep.subr.bf16.mxu0 0
      %531 = vmatpush1.bf16.msra.mxu0 %v520
      %532 = vmatprep.subr.bf16.mxu0 0
      %533 = vmatpush1.bf16.msra.mxu0 %v521
      %534 = vmatprep.subr.bf16.mxu0 0
      %535 = vmatpush1.bf16.msra.mxu0 0
      %536 = vmatprep.subr.bf16.mxu0 0
      %537 = vmatpush1.bf16.msra.mxu0 0
      %538 = vmatprep.subr.bf16.mxu0 0
      %539 = vmatpush1.bf16.msra.mxu0 0
      %540 = vmatprep.subr.bf16.mxu0 0
      %541 = vmatpush1.bf16.msra.mxu0 0
      %542 = vmatprep.subr.bf16.mxu0 0
      %543 = vmatpush1.bf16.msra.mxu0 0
      %544 = vmatprep.subr.bf16.mxu0 0
      %545 = vmatpush1.bf16.msra.mxu0 0
      %546 = vmatprep.subr.bf16.mxu0 0
      %547 = vmatpush1.bf16.msra.mxu0 0
      %548 = vmatprep.subr.bf16.mxu0 0
      %549 = vmatpush1.bf16.msra.mxu0 0
      %550 = vmatprep.subr.bf16.mxu0 0
      %551 = vmatpush1.bf16.msra.mxu0 0
      %552 = vmatprep.subr.bf16.mxu0 0
      %553 = vmatpush1.bf16.msra.mxu0 0
      %554 = vmatprep.subr.bf16.mxu0 0
      %555 = vmatpush1.bf16.msra.mxu0 0
      %556 = vmatprep.subr.bf16.mxu0 0
      %557 = vmatpush1.bf16.msra.mxu0 0
      %558 = vmatprep.subr.bf16.mxu0 0
      %559 = vmatpush1.bf16.msra.mxu0 0
      %560 = vmatprep.mubr.bf16.mxu0 0
      %561 = vmatmul.mubr.bf16.gmra.mrb[0].mxu0 %v526
      %v562 = vpop.f32.mrb[0].mxu0
      %v563 = vadd.f32 %v506, %v562
      %v564 = vpop.f32.mrb[0].mxu0
      %v565 = vpop.f32.mrb[0].mxu0
      %v566 = vpop.f32.mrb[0].mxu0
      %567 = vdwg.mxu0
      %s568 = scalar_lea.vmem %s313, 24
      %569 = vst [vmem:[%s568] sm:$0x3f] %v563
      %s570 = scalar_lea.vmem %s308, 32
      %v571 = vld [vmem:[%s570] sm:$0x3f]
      %v572 = vpack.c.bf16 %v571, %v571
      %v573 = vld [vmem:[%s1] sm:$0xf]
      %v574 = vld [vmem:[%s1 + $0x4] sm:$0xf]
      %v575 = vld [vmem:[%s1 + $0x8] sm:$0xf]
      %v576 = vld [vmem:[%s1 + $0xc] sm:$0xf]
      %v577 = vld [vmem:[%s1 + $0x10] sm:$0xf]
      %v578 = vld [vmem:[%s1 + $0x14] sm:$0xf]
      %v579 = vld [vmem:[%s2] sm:$0x1]
      %v581 = vlaneseq
      %v582 = vshrl.u32 %v581, 7
      %v583 = vsub.s32 0, %v582
      %v584 = vrot.slane %v579, %v583
      %v586 = vmul.f32 %v584, %v325
      %v593 = vunpack.c.l.b16 %v573
      %v594 = vunpack.c.l.b16 %v574
      %v595 = vunpack.c.l.b16 %v575
      %v596 = vunpack.c.l.b16 %v576
      %v597 = vunpack.c.l.b16 %v577
      %v598 = vunpack.c.l.b16 %v578
      %v599 = vpack.c.b16 %v594, %v593
      %v600 = vpack.c.b16 %v596, %v595
      %v601 = vpack.c.b16 %v598, %v597
      %v606 = vsel %vm364, %v572, 0
      %608 = vmatprep.subr.bf16.mxu0 0
      %609 = vmatpush1.bf16.msra.mxu0 %v599
      %610 = vmatprep.subr.bf16.mxu0 0
      %611 = vmatpush1.bf16.msra.mxu0 %v600
      %612 = vmatprep.subr.bf16.mxu0 0
      %613 = vmatpush1.bf16.msra.mxu0 %v601
      %614 = vmatprep.subr.bf16.mxu0 0
      %615 = vmatpush1.bf16.msra.mxu0 0
      %616 = vmatprep.subr.bf16.mxu0 0
      %617 = vmatpush1.bf16.msra.mxu0 0
      %618 = vmatprep.subr.bf16.mxu0 0
      %619 = vmatpush1.bf16.msra.mxu0 0
      %620 = vmatprep.subr.bf16.mxu0 0
      %621 = vmatpush1.bf16.msra.mxu0 0
      %622 = vmatprep.subr.bf16.mxu0 0
      %623 = vmatpush1.bf16.msra.mxu0 0
      %624 = vmatprep.subr.bf16.mxu0 0
      %625 = vmatpush1.bf16.msra.mxu0 0
      %626 = vmatprep.subr.bf16.mxu0 0
      %627 = vmatpush1.bf16.msra.mxu0 0
      %628 = vmatprep.subr.bf16.mxu0 0
      %629 = vmatpush1.bf16.msra.mxu0 0
      %630 = vmatprep.subr.bf16.mxu0 0
      %631 = vmatpush1.bf16.msra.mxu0 0
      %632 = vmatprep.subr.bf16.mxu0 0
      %633 = vmatpush1.bf16.msra.mxu0 0
      %634 = vmatprep.subr.bf16.mxu0 0
      %635 = vmatpush1.bf16.msra.mxu0 0
      %636 = vmatprep.subr.bf16.mxu0 0
      %637 = vmatpush1.bf16.msra.mxu0 0
      %638 = vmatprep.subr.bf16.mxu0 0
      %639 = vmatpush1.bf16.msra.mxu0 0
      %640 = vmatprep.mubr.bf16.mxu0 0
      %641 = vmatmul.mubr.bf16.gmra.mrb[0].mxu0 %v606
      %v642 = vpop.f32.mrb[0].mxu0
      %v643 = vadd.f32 %v586, %v642
      %v644 = vpop.f32.mrb[0].mxu0
      %v645 = vpop.f32.mrb[0].mxu0
      %v646 = vpop.f32.mrb[0].mxu0
      %647 = vdwg.mxu0
      %s648 = scalar_lea.vmem %s313, 32
      %649 = vst [vmem:[%s648] sm:$0x3f] %v643
      %v650 = vld [vmem:[%s313] sm:$0xf]
      %v651 = vld [vmem:[%s313 + $0x1] sm:$0xf]
      %v652 = vld [vmem:[%s313 + $0x2] sm:$0xf]
      %v653 = vld [vmem:[%s408] sm:$0xf]
      %v654 = vld [vmem:[%s408 + $0x1] sm:$0xf]
      %v655 = vld [vmem:[%s408 + $0x2] sm:$0xf]
      %v656 = vld [vmem:[%s488] sm:$0xf]
      %v657 = vld [vmem:[%s488 + $0x1] sm:$0xf]
      %v658 = vld [vmem:[%s488 + $0x2] sm:$0xf]
      %v659 = vpack.c.bf16 %v650, %v650
      %v660 = vpack.c.bf16 %v651, %v651
      %v661 = vpack.c.bf16 %v652, %v652
      %v662 = vpack.c.bf16 %v653, %v653
      %v663 = vpack.c.bf16 %v654, %v654
      %v664 = vpack.c.bf16 %v655, %v655
      %v665 = vpack.c.bf16 %v656, %v656
      %v666 = vpack.c.bf16 %v657, %v657
      %v667 = vpack.c.bf16 %v658, %v658
      %v668 = vld [vmem:[%s3] sm:$0xf]
      %v669 = vld [vmem:[%s3 + $0x4] sm:$0xf]
      %v670 = vld [vmem:[%s3 + $0x8] sm:$0xf]
      %v671 = vld [vmem:[%s3 + $0xc] sm:$0xf]
      %v672 = vld [vmem:[%s3 + $0x10] sm:$0xf]
      %v673 = vld [vmem:[%s3 + $0x14] sm:$0xf]
      %v674 = vld [vmem:[%s3 + $0x18] sm:$0xf]
      %v675 = vld [vmem:[%s3 + $0x1c] sm:$0xf]
      %v676 = vld [vmem:[%s3 + $0x20] sm:$0xf]
      %v677 = vld [vmem:[%s3 + $0x24] sm:$0xf]
      %v678 = vld [vmem:[%s3 + $0x28] sm:$0xf]
      %v679 = vld [vmem:[%s3 + $0x2c] sm:$0xf]
      %v680 = vld [vmem:[%s3 + $0x30] sm:$0xf]
      %v681 = vld [vmem:[%s3 + $0x34] sm:$0xf]
      %v682 = vld [vmem:[%s3 + $0x38] sm:$0xf]
      %v683 = vld [vmem:[%s3 + $0x3c] sm:$0xf]
      %v684 = vld [vmem:[%s3 + $0x40] sm:$0xf]
      %v685 = vld [vmem:[%s3 + $0x44] sm:$0xf]
      %v686 = vld [vmem:[%s3 + $0x48] sm:$0xf]
      %v687 = vld [vmem:[%s3 + $0x4c] sm:$0xf]
      %v688 = vld [vmem:[%s3 + $0x50] sm:$0xf]
      %v689 = vld [vmem:[%s3 + $0x54] sm:$0xf]
      %v690 = vld [vmem:[%s3 + $0x58] sm:$0xf]
      %v691 = vld [vmem:[%s3 + $0x5c] sm:$0xf]
      %v692 = vld [vmem:[%s3 + $0x60] sm:$0xf]
      %v693 = vld [vmem:[%s3 + $0x64] sm:$0xf]
      %v694 = vld [vmem:[%s3 + $0x68] sm:$0xf]
      %v695 = vld [vmem:[%s3 + $0x6c] sm:$0xf]
      %v696 = vld [vmem:[%s3 + $0x70] sm:$0xf]
      %v697 = vld [vmem:[%s3 + $0x74] sm:$0xf]
      %v698 = vld [vmem:[%s3 + $0x78] sm:$0xf]
      %v699 = vld [vmem:[%s3 + $0x7c] sm:$0xf]
      %v700 = vld [vmem:[%s3 + $0x80] sm:$0xf]
      %v701 = vld [vmem:[%s3 + $0x84] sm:$0xf]
      %v702 = vld [vmem:[%s3 + $0x88] sm:$0xf]
      %v703 = vld [vmem:[%s3 + $0x8c] sm:$0xf]
      %v704 = vld [vmem:[%s3 + $0x90] sm:$0xf]
      %v705 = vld [vmem:[%s3 + $0x94] sm:$0xf]
      %v706 = vld [vmem:[%s3 + $0x98] sm:$0xf]
      %v707 = vld [vmem:[%s3 + $0x9c] sm:$0xf]
      %v708 = vld [vmem:[%s3 + $0xa0] sm:$0xf]
      %v709 = vld [vmem:[%s3 + $0xa4] sm:$0xf]
      %v710 = vld [vmem:[%s3 + $0xa8] sm:$0xf]
      %v711 = vld [vmem:[%s3 + $0xac] sm:$0xf]
      %v712 = vld [vmem:[%s3 + $0xb0] sm:$0xf]
      %v713 = vld [vmem:[%s3 + $0xb4] sm:$0xf]
      %v714 = vld [vmem:[%s3 + $0xb8] sm:$0xf]
      %v715 = vld [vmem:[%s3 + $0xbc] sm:$0xf]
      %v716 = vld [vmem:[%s3 + $0xc0] sm:$0xf]
      %v717 = vld [vmem:[%s3 + $0xc4] sm:$0xf]
      %v718 = vld [vmem:[%s3 + $0xc8] sm:$0xf]
      %v719 = vld [vmem:[%s3 + $0xcc] sm:$0xf]
      %v720 = vld [vmem:[%s3 + $0xd0] sm:$0xf]
      %v721 = vld [vmem:[%s3 + $0xd4] sm:$0xf]
      %v722 = vld [vmem:[%s3 + $0xd8] sm:$0xf]
      %v723 = vld [vmem:[%s3 + $0xdc] sm:$0xf]
      %v724 = vld [vmem:[%s3 + $0xe0] sm:$0xf]
      %v725 = vld [vmem:[%s3 + $0xe4] sm:$0xf]
      %v726 = vld [vmem:[%s3 + $0xe8] sm:$0xf]
      %v727 = vld [vmem:[%s3 + $0xec] sm:$0xf]
      %v728 = vld [vmem:[%s3 + $0xf0] sm:$0xf]
      %v729 = vld [vmem:[%s3 + $0xf4] sm:$0xf]
      %v730 = vld [vmem:[%s3 + $0xf8] sm:$0xf]
      %v731 = vld [vmem:[%s3 + $0xfc] sm:$0xf]
      %v732 = vld [vmem:[%s3 + $0x100] sm:$0xf]
      %v733 = vld [vmem:[%s3 + $0x104] sm:$0xf]
      %v734 = vld [vmem:[%s3 + $0x108] sm:$0xf]
      %v735 = vld [vmem:[%s3 + $0x10c] sm:$0xf]
      %v736 = vld [vmem:[%s3 + $0x110] sm:$0xf]
      %v737 = vld [vmem:[%s3 + $0x114] sm:$0xf]
      %v738 = vld [vmem:[%s3 + $0x118] sm:$0xf]
      %v739 = vld [vmem:[%s3 + $0x11c] sm:$0xf]
      %v740 = vld [vmem:[%s3 + $0x120] sm:$0xf]
      %v741 = vld [vmem:[%s3 + $0x124] sm:$0xf]
      %v742 = vld [vmem:[%s3 + $0x128] sm:$0xf]
      %v743 = vld [vmem:[%s3 + $0x12c] sm:$0xf]
      %v744 = vld [vmem:[%s3 + $0x130] sm:$0xf]
      %v745 = vld [vmem:[%s3 + $0x134] sm:$0xf]
      %v746 = vld [vmem:[%s3 + $0x138] sm:$0xf]
      %v747 = vld [vmem:[%s3 + $0x13c] sm:$0xf]
      %v748 = vld [vmem:[%s3 + $0x140] sm:$0xf]
      %v749 = vld [vmem:[%s3 + $0x144] sm:$0xf]
      %v750 = vld [vmem:[%s3 + $0x148] sm:$0xf]
      %v751 = vld [vmem:[%s3 + $0x14c] sm:$0xf]
      %v752 = vld [vmem:[%s3 + $0x150] sm:$0xf]
      %v753 = vld [vmem:[%s3 + $0x154] sm:$0xf]
      %v754 = vld [vmem:[%s3 + $0x158] sm:$0xf]
      %v755 = vld [vmem:[%s3 + $0x15c] sm:$0xf]
      %v756 = vld [vmem:[%s3 + $0x160] sm:$0xf]
      %v757 = vld [vmem:[%s3 + $0x164] sm:$0xf]
      %v758 = vld [vmem:[%s3 + $0x168] sm:$0xf]
      %v759 = vld [vmem:[%s3 + $0x16c] sm:$0xf]
      %v760 = vld [vmem:[%s3 + $0x170] sm:$0xf]
      %v761 = vld [vmem:[%s3 + $0x174] sm:$0xf]
      %v762 = vld [vmem:[%s3 + $0x178] sm:$0xf]
      %v763 = vld [vmem:[%s3 + $0x17c] sm:$0xf]
      %v764 = vld [vmem:[%s3 + $0x180] sm:$0xf]
      %v765 = vld [vmem:[%s3 + $0x184] sm:$0xf]
      %v766 = vld [vmem:[%s3 + $0x188] sm:$0xf]
      %v767 = vld [vmem:[%s3 + $0x18c] sm:$0xf]
      %v768 = vld [vmem:[%s3 + $0x190] sm:$0xf]
      %v769 = vld [vmem:[%s3 + $0x194] sm:$0xf]
      %v770 = vld [vmem:[%s3 + $0x198] sm:$0xf]
      %v771 = vld [vmem:[%s3 + $0x19c] sm:$0xf]
      %v772 = vld [vmem:[%s3 + $0x1a0] sm:$0xf]
      %v773 = vld [vmem:[%s3 + $0x1a4] sm:$0xf]
      %v774 = vld [vmem:[%s3 + $0x1a8] sm:$0xf]
      %v775 = vld [vmem:[%s3 + $0x1ac] sm:$0xf]
      %v776 = vld [vmem:[%s3 + $0x1b0] sm:$0xf]
      %v777 = vld [vmem:[%s3 + $0x1b4] sm:$0xf]
      %v778 = vld [vmem:[%s3 + $0x1b8] sm:$0xf]
      %v779 = vld [vmem:[%s3 + $0x1bc] sm:$0xf]
      %v780 = vld [vmem:[%s3 + $0x1c0] sm:$0xf]
      %v781 = vld [vmem:[%s3 + $0x1c4] sm:$0xf]
      %v782 = vld [vmem:[%s3 + $0x1c8] sm:$0xf]
      %v783 = vld [vmem:[%s3 + $0x1cc] sm:$0xf]
      %v784 = vld [vmem:[%s3 + $0x1d0] sm:$0xf]
      %v785 = vld [vmem:[%s3 + $0x1d4] sm:$0xf]
      %v786 = vld [vmem:[%s3 + $0x1d8] sm:$0xf]
      %v787 = vld [vmem:[%s3 + $0x1dc] sm:$0xf]
      %v788 = vld [vmem:[%s3 + $0x1e0] sm:$0xf]
      %v789 = vld [vmem:[%s3 + $0x1e4] sm:$0xf]
      %v790 = vld [vmem:[%s3 + $0x1e8] sm:$0xf]
      %v791 = vld [vmem:[%s3 + $0x1ec] sm:$0xf]
      %v792 = vld [vmem:[%s3 + $0x1f0] sm:$0xf]
      %v793 = vld [vmem:[%s3 + $0x1f4] sm:$0xf]
      %v794 = vld [vmem:[%s3 + $0x1f8] sm:$0xf]
      %v795 = vld [vmem:[%s3 + $0x1fc] sm:$0xf]
      %v796 = vld [vmem:[%s3 + $0x200] sm:$0xf]
      %v797 = vld [vmem:[%s3 + $0x204] sm:$0xf]
      %v798 = vld [vmem:[%s3 + $0x208] sm:$0xf]
      %v799 = vld [vmem:[%s3 + $0x20c] sm:$0xf]
      %v800 = vld [vmem:[%s3 + $0x210] sm:$0xf]
      %v801 = vld [vmem:[%s3 + $0x214] sm:$0xf]
      %v802 = vld [vmem:[%s3 + $0x218] sm:$0xf]
      %v803 = vld [vmem:[%s3 + $0x21c] sm:$0xf]
      %v804 = vld [vmem:[%s3 + $0x220] sm:$0xf]
      %v805 = vld [vmem:[%s3 + $0x224] sm:$0xf]
      %v806 = vld [vmem:[%s3 + $0x228] sm:$0xf]
      %v807 = vld [vmem:[%s3 + $0x22c] sm:$0xf]
      %v808 = vld [vmem:[%s3 + $0x230] sm:$0xf]
      %v809 = vld [vmem:[%s3 + $0x234] sm:$0xf]
      %v810 = vld [vmem:[%s3 + $0x238] sm:$0xf]
      %v811 = vld [vmem:[%s3 + $0x23c] sm:$0xf]
      %v812 = vld [vmem:[%s4] sm:$0x1]
      %v814 = vlaneseq
      %v815 = vshrl.u32 %v814, 7
      %v816 = vsub.s32 0, %v815
      %v817 = vrot.slane %v812, %v816
      %v963 = vunpack.c.l.b16 %v668
      %v964 = vunpack.c.l.b16 %v669
      %v965 = vunpack.c.l.b16 %v670
      %v966 = vunpack.c.l.b16 %v671
      %v967 = vunpack.c.l.b16 %v672
      %v968 = vunpack.c.l.b16 %v673
      %v969 = vunpack.c.l.b16 %v674
      %v970 = vunpack.c.l.b16 %v675
      %v971 = vunpack.c.l.b16 %v676
      %v972 = vunpack.c.l.b16 %v677
      %v973 = vunpack.c.l.b16 %v678
      %v974 = vunpack.c.l.b16 %v679
      %v975 = vunpack.c.l.b16 %v680
      %v976 = vunpack.c.l.b16 %v681
      %v977 = vunpack.c.l.b16 %v682
      %v978 = vunpack.c.l.b16 %v683
      %v979 = vunpack.c.l.b16 %v684
      %v980 = vunpack.c.l.b16 %v685
      %v981 = vunpack.c.l.b16 %v686
      %v982 = vunpack.c.l.b16 %v687
      %v983 = vunpack.c.l.b16 %v688
      %v984 = vunpack.c.l.b16 %v689
      %v985 = vunpack.c.l.b16 %v690
      %v986 = vunpack.c.l.b16 %v691
      %v987 = vunpack.c.l.b16 %v692
      %v988 = vunpack.c.l.b16 %v693
      %v989 = vunpack.c.l.b16 %v694
      %v990 = vunpack.c.l.b16 %v695
      %v991 = vunpack.c.l.b16 %v696
      %v992 = vunpack.c.l.b16 %v697
      %v993 = vunpack.c.l.b16 %v698
      %v994 = vunpack.c.l.b16 %v699
      %v995 = vunpack.c.l.b16 %v700
      %v996 = vunpack.c.l.b16 %v701
      %v997 = vunpack.c.l.b16 %v702
      %v998 = vunpack.c.l.b16 %v703
      %v999 = vunpack.c.l.b16 %v704
      %v1000 = vunpack.c.l.b16 %v705
      %v1001 = vunpack.c.l.b16 %v706
      %v1002 = vunpack.c.l.b16 %v707
      %v1003 = vunpack.c.l.b16 %v708
      %v1004 = vunpack.c.l.b16 %v709
      %v1005 = vunpack.c.l.b16 %v710
      %v1006 = vunpack.c.l.b16 %v711
      %v1007 = vunpack.c.l.b16 %v712
      %v1008 = vunpack.c.l.b16 %v713
      %v1009 = vunpack.c.l.b16 %v714
      %v1010 = vunpack.c.l.b16 %v715
      %v1011 = vunpack.c.l.b16 %v716
      %v1012 = vunpack.c.l.b16 %v717
      %v1013 = vunpack.c.l.b16 %v718
      %v1014 = vunpack.c.l.b16 %v719
      %v1015 = vunpack.c.l.b16 %v720
      %v1016 = vunpack.c.l.b16 %v721
      %v1017 = vunpack.c.l.b16 %v722
      %v1018 = vunpack.c.l.b16 %v723
      %v1019 = vunpack.c.l.b16 %v724
      %v1020 = vunpack.c.l.b16 %v725
      %v1021 = vunpack.c.l.b16 %v726
      %v1022 = vunpack.c.l.b16 %v727
      %v1023 = vunpack.c.l.b16 %v728
      %v1024 = vunpack.c.l.b16 %v729
      %v1025 = vunpack.c.l.b16 %v730
      %v1026 = vunpack.c.l.b16 %v731
      %v1027 = vunpack.c.l.b16 %v732
      %v1028 = vunpack.c.l.b16 %v733
      %v1029 = vunpack.c.l.b16 %v734
      %v1030 = vunpack.c.l.b16 %v735
      %v1031 = vunpack.c.l.b16 %v736
      %v1032 = vunpack.c.l.b16 %v737
      %v1033 = vunpack.c.l.b16 %v738
      %v1034 = vunpack.c.l.b16 %v739
      %v1035 = vunpack.c.l.b16 %v740
      %v1036 = vunpack.c.l.b16 %v741
      %v1037 = vunpack.c.l.b16 %v742
      %v1038 = vunpack.c.l.b16 %v743
      %v1039 = vunpack.c.l.b16 %v744
      %v1040 = vunpack.c.l.b16 %v745
      %v1041 = vunpack.c.l.b16 %v746
      %v1042 = vunpack.c.l.b16 %v747
      %v1043 = vunpack.c.l.b16 %v748
      %v1044 = vunpack.c.l.b16 %v749
      %v1045 = vunpack.c.l.b16 %v750
      %v1046 = vunpack.c.l.b16 %v751
      %v1047 = vunpack.c.l.b16 %v752
      %v1048 = vunpack.c.l.b16 %v753
      %v1049 = vunpack.c.l.b16 %v754
      %v1050 = vunpack.c.l.b16 %v755
      %v1051 = vunpack.c.l.b16 %v756
      %v1052 = vunpack.c.l.b16 %v757
      %v1053 = vunpack.c.l.b16 %v758
      %v1054 = vunpack.c.l.b16 %v759
      %v1055 = vunpack.c.l.b16 %v760
      %v1056 = vunpack.c.l.b16 %v761
      %v1057 = vunpack.c.l.b16 %v762
      %v1058 = vunpack.c.l.b16 %v763
      %v1059 = vunpack.c.l.b16 %v764
      %v1060 = vunpack.c.l.b16 %v765
      %v1061 = vunpack.c.l.b16 %v766
      %v1062 = vunpack.c.l.b16 %v767
      %v1063 = vunpack.c.l.b16 %v768
      %v1064 = vunpack.c.l.b16 %v769
      %v1065 = vunpack.c.l.b16 %v770
      %v1066 = vunpack.c.l.b16 %v771
      %v1067 = vunpack.c.l.b16 %v772
      %v1068 = vunpack.c.l.b16 %v773
      %v1069 = vunpack.c.l.b16 %v774
      %v1070 = vunpack.c.l.b16 %v775
      %v1071 = vunpack.c.l.b16 %v776
      %v1072 = vunpack.c.l.b16 %v777
      %v1073 = vunpack.c.l.b16 %v778
      %v1074 = vunpack.c.l.b16 %v779
      %v1075 = vunpack.c.l.b16 %v780
      %v1076 = vunpack.c.l.b16 %v781
      %v1077 = vunpack.c.l.b16 %v782
      %v1078 = vunpack.c.l.b16 %v783
      %v1079 = vunpack.c.l.b16 %v784
      %v1080 = vunpack.c.l.b16 %v785
      %v1081 = vunpack.c.l.b16 %v786
      %v1082 = vunpack.c.l.b16 %v787
      %v1083 = vunpack.c.l.b16 %v788
      %v1084 = vunpack.c.l.b16 %v789
      %v1085 = vunpack.c.l.b16 %v790
      %v1086 = vunpack.c.l.b16 %v791
      %v1087 = vunpack.c.l.b16 %v792
      %v1088 = vunpack.c.l.b16 %v793
      %v1089 = vunpack.c.l.b16 %v794
      %v1090 = vunpack.c.l.b16 %v795
      %v1091 = vunpack.c.l.b16 %v796
      %v1092 = vunpack.c.l.b16 %v797
      %v1093 = vunpack.c.l.b16 %v798
      %v1094 = vunpack.c.l.b16 %v799
      %v1095 = vunpack.c.l.b16 %v800
      %v1096 = vunpack.c.l.b16 %v801
      %v1097 = vunpack.c.l.b16 %v802
      %v1098 = vunpack.c.l.b16 %v803
      %v1099 = vunpack.c.l.b16 %v804
      %v1100 = vunpack.c.l.b16 %v805
      %v1101 = vunpack.c.l.b16 %v806
      %v1102 = vunpack.c.l.b16 %v807
      %v1103 = vunpack.c.l.b16 %v808
      %v1104 = vunpack.c.l.b16 %v809
      %v1105 = vunpack.c.l.b16 %v810
      %v1106 = vunpack.c.l.b16 %v811
      %v1107 = vpack.c.b16 %v964, %v963
      %v1108 = vpack.c.b16 %v966, %v965
      %v1109 = vpack.c.b16 %v968, %v967
      %v1110 = vpack.c.b16 %v970, %v969
      %v1111 = vpack.c.b16 %v972, %v971
      %v1112 = vpack.c.b16 %v974, %v973
      %v1113 = vpack.c.b16 %v976, %v975
      %v1114 = vpack.c.b16 %v978, %v977
      %v1115 = vpack.c.b16 %v980, %v979
      %v1116 = vpack.c.b16 %v982, %v981
      %v1117 = vpack.c.b16 %v984, %v983
      %v1118 = vpack.c.b16 %v986, %v985
      %v1119 = vpack.c.b16 %v988, %v987
      %v1120 = vpack.c.b16 %v990, %v989
      %v1121 = vpack.c.b16 %v992, %v991
      %v1122 = vpack.c.b16 %v994, %v993
      %v1123 = vpack.c.b16 %v996, %v995
      %v1124 = vpack.c.b16 %v998, %v997
      %v1125 = vpack.c.b16 %v1000, %v999
      %v1126 = vpack.c.b16 %v1002, %v1001
      %v1127 = vpack.c.b16 %v1004, %v1003
      %v1128 = vpack.c.b16 %v1006, %v1005
      %v1129 = vpack.c.b16 %v1008, %v1007
      %v1130 = vpack.c.b16 %v1010, %v1009
      %v1131 = vpack.c.b16 %v1012, %v1011
      %v1132 = vpack.c.b16 %v1014, %v1013
      %v1133 = vpack.c.b16 %v1016, %v1015
      %v1134 = vpack.c.b16 %v1018, %v1017
      %v1135 = vpack.c.b16 %v1020, %v1019
      %v1136 = vpack.c.b16 %v1022, %v1021
      %v1137 = vpack.c.b16 %v1024, %v1023
      %v1138 = vpack.c.b16 %v1026, %v1025
      %v1139 = vpack.c.b16 %v1028, %v1027
      %v1140 = vpack.c.b16 %v1030, %v1029
      %v1141 = vpack.c.b16 %v1032, %v1031
      %v1142 = vpack.c.b16 %v1034, %v1033
      %v1143 = vpack.c.b16 %v1036, %v1035
      %v1144 = vpack.c.b16 %v1038, %v1037
      %v1145 = vpack.c.b16 %v1040, %v1039
      %v1146 = vpack.c.b16 %v1042, %v1041
      %v1147 = vpack.c.b16 %v1044, %v1043
      %v1148 = vpack.c.b16 %v1046, %v1045
      %v1149 = vpack.c.b16 %v1048, %v1047
      %v1150 = vpack.c.b16 %v1050, %v1049
      %v1151 = vpack.c.b16 %v1052, %v1051
      %v1152 = vpack.c.b16 %v1054, %v1053
      %v1153 = vpack.c.b16 %v1056, %v1055
      %v1154 = vpack.c.b16 %v1058, %v1057
      %v1155 = vpack.c.b16 %v1060, %v1059
      %v1156 = vpack.c.b16 %v1062, %v1061
      %v1157 = vpack.c.b16 %v1064, %v1063
      %v1158 = vpack.c.b16 %v1066, %v1065
      %v1159 = vpack.c.b16 %v1068, %v1067
      %v1160 = vpack.c.b16 %v1070, %v1069
      %v1161 = vpack.c.b16 %v1072, %v1071
      %v1162 = vpack.c.b16 %v1074, %v1073
      %v1163 = vpack.c.b16 %v1076, %v1075
      %v1164 = vpack.c.b16 %v1078, %v1077
      %v1165 = vpack.c.b16 %v1080, %v1079
      %v1166 = vpack.c.b16 %v1082, %v1081
      %v1167 = vpack.c.b16 %v1084, %v1083
      %v1168 = vpack.c.b16 %v1086, %v1085
      %v1169 = vpack.c.b16 %v1088, %v1087
      %v1170 = vpack.c.b16 %v1090, %v1089
      %v1171 = vpack.c.b16 %v1092, %v1091
      %v1172 = vpack.c.b16 %v1094, %v1093
      %v1173 = vpack.c.b16 %v1096, %v1095
      %v1174 = vpack.c.b16 %v1098, %v1097
      %v1175 = vpack.c.b16 %v1100, %v1099
      %v1176 = vpack.c.b16 %v1102, %v1101
      %v1177 = vpack.c.b16 %v1104, %v1103
      %v1178 = vpack.c.b16 %v1106, %v1105
      %1251 = vmatprep.subr.bf16.mxu0 0
      %1252 = vmatpush1.bf16.msra.mxu0 %v1107
      %1253 = vmatprep.subr.bf16.mxu0 0
      %1254 = vmatpush1.bf16.msra.mxu0 %v1108
      %1255 = vmatprep.subr.bf16.mxu0 0
      %1256 = vmatpush1.bf16.msra.mxu0 %v1109
      %1257 = vmatprep.subr.bf16.mxu0 0
      %1258 = vmatpush1.bf16.msra.mxu0 %v1110
      %1259 = vmatprep.subr.bf16.mxu0 0
      %1260 = vmatpush1.bf16.msra.mxu0 %v1111
      %1261 = vmatprep.subr.bf16.mxu0 0
      %1262 = vmatpush1.bf16.msra.mxu0 %v1112
      %1263 = vmatprep.subr.bf16.mxu0 0
      %1264 = vmatpush1.bf16.msra.mxu0 %v1113
      %1265 = vmatprep.subr.bf16.mxu0 0
      %1266 = vmatpush1.bf16.msra.mxu0 %v1114
      %1267 = vmatprep.subr.bf16.mxu0 0
      %1268 = vmatpush1.bf16.msra.mxu0 %v1115
      %1269 = vmatprep.subr.bf16.mxu0 0
      %1270 = vmatpush1.bf16.msra.mxu0 %v1116
      %1271 = vmatprep.subr.bf16.mxu0 0
      %1272 = vmatpush1.bf16.msra.mxu0 %v1117
      %1273 = vmatprep.subr.bf16.mxu0 0
      %1274 = vmatpush1.bf16.msra.mxu0 %v1118
      %1275 = vmatprep.subr.bf16.mxu0 0
      %1276 = vmatpush1.bf16.msra.mxu0 %v1119
      %1277 = vmatprep.subr.bf16.mxu0 0
      %1278 = vmatpush1.bf16.msra.mxu0 %v1120
      %1279 = vmatprep.subr.bf16.mxu0 0
      %1280 = vmatpush1.bf16.msra.mxu0 %v1121
      %1281 = vmatprep.subr.bf16.mxu0 0
      %1282 = vmatpush1.bf16.msra.mxu0 %v1122
      %1283 = vmatprep.mubr.bf16.mxu0 %v660
      %1284 = vmatmul.mubr.bf16.gmra.mrb[0].mxu0 %v659
      %v1285 = vpop.f32.mrb[0].mxu0
      %v1286 = vadd.f32 %v817, %v1285
      %v1287 = vpop.f32.mrb[0].mxu0
      %v1288 = vpop.f32.mrb[0].mxu0
      %v1289 = vpop.f32.mrb[0].mxu0
      %1290 = vdwg.mxu0
      %1291 = vmatprep.subr.bf16.mxu0 0
      %1292 = vmatpush1.bf16.msra.mxu0 %v1123
      %1293 = vmatprep.subr.bf16.mxu0 0
      %1294 = vmatpush1.bf16.msra.mxu0 %v1124
      %1295 = vmatprep.subr.bf16.mxu0 0
      %1296 = vmatpush1.bf16.msra.mxu0 %v1125
      %1297 = vmatprep.subr.bf16.mxu0 0
      %1298 = vmatpush1.bf16.msra.mxu0 %v1126
      %1299 = vmatprep.subr.bf16.mxu0 0
      %1300 = vmatpush1.bf16.msra.mxu0 %v1127
      %1301 = vmatprep.subr.bf16.mxu0 0
      %1302 = vmatpush1.bf16.msra.mxu0 %v1128
      %1303 = vmatprep.subr.bf16.mxu0 0
      %1304 = vmatpush1.bf16.msra.mxu0 %v1129
      %1305 = vmatprep.subr.bf16.mxu0 0
      %1306 = vmatpush1.bf16.msra.mxu0 %v1130
      %1307 = vmatprep.subr.bf16.mxu0 0
      %1308 = vmatpush1.bf16.msra.mxu0 %v1131
      %1309 = vmatprep.subr.bf16.mxu0 0
      %1310 = vmatpush1.bf16.msra.mxu0 %v1132
      %1311 = vmatprep.subr.bf16.mxu0 0
      %1312 = vmatpush1.bf16.msra.mxu0 %v1133
      %1313 = vmatprep.subr.bf16.mxu0 0
      %1314 = vmatpush1.bf16.msra.mxu0 %v1134
      %1315 = vmatprep.subr.bf16.mxu0 0
      %1316 = vmatpush1.bf16.msra.mxu0 %v1135
      %1317 = vmatprep.subr.bf16.mxu0 0
      %1318 = vmatpush1.bf16.msra.mxu0 %v1136
      %1319 = vmatprep.subr.bf16.mxu0 0
      %1320 = vmatpush1.bf16.msra.mxu0 %v1137
      %1321 = vmatprep.subr.bf16.mxu0 0
      %1322 = vmatpush1.bf16.msra.mxu0 %v1138
      %1323 = vmatprep.mubr.bf16.mxu0 %v662
      %1324 = vmatmul.mubr.bf16.gmra.mrb[0].mxu0 %v661
      %v1325 = vpop.f32.mrb[0].mxu0
      %v1326 = vadd.f32 %v1286, %v1325
      %v1327 = vpop.f32.mrb[0].mxu0
      %v1328 = vpop.f32.mrb[0].mxu0
      %v1329 = vpop.f32.mrb[0].mxu0
      %1330 = vdwg.mxu0
      %1331 = vmatprep.subr.bf16.mxu0 0
      %1332 = vmatpush1.bf16.msra.mxu0 %v1139
      %1333 = vmatprep.subr.bf16.mxu0 0
      %1334 = vmatpush1.bf16.msra.mxu0 %v1140
      %1335 = vmatprep.subr.bf16.mxu0 0
      %1336 = vmatpush1.bf16.msra.mxu0 %v1141
      %1337 = vmatprep.subr.bf16.mxu0 0
      %1338 = vmatpush1.bf16.msra.mxu0 %v1142
      %1339 = vmatprep.subr.bf16.mxu0 0
      %1340 = vmatpush1.bf16.msra.mxu0 %v1143
      %1341 = vmatprep.subr.bf16.mxu0 0
      %1342 = vmatpush1.bf16.msra.mxu0 %v1144
      %1343 = vmatprep.subr.bf16.mxu0 0
      %1344 = vmatpush1.bf16.msra.mxu0 %v1145
      %1345 = vmatprep.subr.bf16.mxu0 0
      %1346 = vmatpush1.bf16.msra.mxu0 %v1146
      %1347 = vmatprep.subr.bf16.mxu0 0
      %1348 = vmatpush1.bf16.msra.mxu0 %v1147
      %1349 = vmatprep.subr.bf16.mxu0 0
      %1350 = vmatpush1.bf16.msra.mxu0 %v1148
      %1351 = vmatprep.subr.bf16.mxu0 0
      %1352 = vmatpush1.bf16.msra.mxu0 %v1149
      %1353 = vmatprep.subr.bf16.mxu0 0
      %1354 = vmatpush1.bf16.msra.mxu0 %v1150
      %1355 = vmatprep.subr.bf16.mxu0 0
      %1356 = vmatpush1.bf16.msra.mxu0 %v1151
      %1357 = vmatprep.subr.bf16.mxu0 0
      %1358 = vmatpush1.bf16.msra.mxu0 %v1152
      %1359 = vmatprep.subr.bf16.mxu0 0
      %1360 = vmatpush1.bf16.msra.mxu0 %v1153
      %1361 = vmatprep.subr.bf16.mxu0 0
      %1362 = vmatpush1.bf16.msra.mxu0 %v1154
      %1363 = vmatprep.mubr.bf16.mxu0 %v664
      %1364 = vmatmul.mubr.bf16.gmra.mrb[0].mxu0 %v663
      %v1365 = vpop.f32.mrb[0].mxu0
      %v1366 = vadd.f32 %v1326, %v1365
      %v1367 = vpop.f32.mrb[0].mxu0
      %v1368 = vpop.f32.mrb[0].mxu0
      %v1369 = vpop.f32.mrb[0].mxu0
      %1370 = vdwg.mxu0
      %1371 = vmatprep.subr.bf16.mxu0 0
      %1372 = vmatpush1.bf16.msra.mxu0 %v1155
      %1373 = vmatprep.subr.bf16.mxu0 0
      %1374 = vmatpush1.bf16.msra.mxu0 %v1156
      %1375 = vmatprep.subr.bf16.mxu0 0
      %1376 = vmatpush1.bf16.msra.mxu0 %v1157
      %1377 = vmatprep.subr.bf16.mxu0 0
      %1378 = vmatpush1.bf16.msra.mxu0 %v1158
      %1379 = vmatprep.subr.bf16.mxu0 0
      %1380 = vmatpush1.bf16.msra.mxu0 %v1159
      %1381 = vmatprep.subr.bf16.mxu0 0
      %1382 = vmatpush1.bf16.msra.mxu0 %v1160
      %1383 = vmatprep.subr.bf16.mxu0 0
      %1384 = vmatpush1.bf16.msra.mxu0 %v1161
      %1385 = vmatprep.subr.bf16.mxu0 0
      %1386 = vmatpush1.bf16.msra.mxu0 %v1162
      %1387 = vmatprep.subr.bf16.mxu0 0
      %1388 = vmatpush1.bf16.msra.mxu0 %v1163
      %1389 = vmatprep.subr.bf16.mxu0 0
      %1390 = vmatpush1.bf16.msra.mxu0 %v1164
      %1391 = vmatprep.subr.bf16.mxu0 0
      %1392 = vmatpush1.bf16.msra.mxu0 %v1165
      %1393 = vmatprep.subr.bf16.mxu0 0
      %1394 = vmatpush1.bf16.msra.mxu0 %v1166
      %1395 = vmatprep.subr.bf16.mxu0 0
      %1396 = vmatpush1.bf16.msra.mxu0 %v1167
      %1397 = vmatprep.subr.bf16.mxu0 0
      %1398 = vmatpush1.bf16.msra.mxu0 %v1168
      %1399 = vmatprep.subr.bf16.mxu0 0
      %1400 = vmatpush1.bf16.msra.mxu0 %v1169
      %1401 = vmatprep.subr.bf16.mxu0 0
      %1402 = vmatpush1.bf16.msra.mxu0 %v1170
      %1403 = vmatprep.mubr.bf16.mxu0 %v666
      %1404 = vmatmul.mubr.bf16.gmra.mrb[0].mxu0 %v665
      %v1405 = vpop.f32.mrb[0].mxu0
      %v1406 = vadd.f32 %v1366, %v1405
      %v1407 = vpop.f32.mrb[0].mxu0
      %v1408 = vpop.f32.mrb[0].mxu0
      %v1409 = vpop.f32.mrb[0].mxu0
      %1410 = vdwg.mxu0
      %1411 = vmatprep.subr.bf16.mxu0 0
      %1412 = vmatpush1.bf16.msra.mxu0 %v1171
      %1413 = vmatprep.subr.bf16.mxu0 0
      %1414 = vmatpush1.bf16.msra.mxu0 %v1172
      %1415 = vmatprep.subr.bf16.mxu0 0
      %1416 = vmatpush1.bf16.msra.mxu0 %v1173
      %1417 = vmatprep.subr.bf16.mxu0 0
      %1418 = vmatpush1.bf16.msra.mxu0 %v1174
      %1419 = vmatprep.subr.bf16.mxu0 0
      %1420 = vmatpush1.bf16.msra.mxu0 %v1175
      %1421 = vmatprep.subr.bf16.mxu0 0
      %1422 = vmatpush1.bf16.msra.mxu0 %v1176
      %1423 = vmatprep.subr.bf16.mxu0 0
      %1424 = vmatpush1.bf16.msra.mxu0 %v1177
      %1425 = vmatprep.subr.bf16.mxu0 0
      %1426 = vmatpush1.bf16.msra.mxu0 %v1178
      %1427 = vmatprep.subr.bf16.mxu0 0
      %1428 = vmatpush1.bf16.msra.mxu0 0
      %1429 = vmatprep.subr.bf16.mxu0 0
      %1430 = vmatpush1.bf16.msra.mxu0 0
      %1431 = vmatprep.subr.bf16.mxu0 0
      %1432 = vmatpush1.bf16.msra.mxu0 0
      %1433 = vmatprep.subr.bf16.mxu0 0
      %1434 = vmatpush1.bf16.msra.mxu0 0
      %1435 = vmatprep.subr.bf16.mxu0 0
      %1436 = vmatpush1.bf16.msra.mxu0 0
      %1437 = vmatprep.subr.bf16.mxu0 0
      %1438 = vmatpush1.bf16.msra.mxu0 0
      %1439 = vmatprep.subr.bf16.mxu0 0
      %1440 = vmatpush1.bf16.msra.mxu0 0
      %1441 = vmatprep.subr.bf16.mxu0 0
      %1442 = vmatpush1.bf16.msra.mxu0 0
      %1443 = vmatprep.mubr.bf16.mxu0 0
      %1444 = vmatmul.mubr.bf16.gmra.mrb[0].mxu0 %v667
      %v1445 = vpop.f32.mrb[0].mxu0
      %v1446 = vadd.f32 %v1406, %v1445
      %v1447 = vpop.f32.mrb[0].mxu0
      %v1448 = vpop.f32.mrb[0].mxu0
      %v1449 = vpop.f32.mrb[0].mxu0
      %1450 = vdwg.mxu0
      %vm1451 = vcmp.gt.f32.partialorder %v1446, 0.0
      %v1452 = vmul.f32 %v1446, 0.01
      %v1453 = vsel %vm1451, %v1446, %v1452
      %v1454 = vpack.c.bf16 %v1453, %v1453
      %v1455 = vld [vmem:[%s5] sm:$0xf]
      %v1456 = vld [vmem:[%s5 + $0x4] sm:$0xf]
      %v1457 = vld [vmem:[%s5 + $0x8] sm:$0xf]
      %v1458 = vld [vmem:[%s5 + $0xc] sm:$0xf]
      %v1459 = vld [vmem:[%s5 + $0x10] sm:$0xf]
      %v1460 = vld [vmem:[%s5 + $0x14] sm:$0xf]
      %v1461 = vld [vmem:[%s5 + $0x18] sm:$0xf]
      %v1462 = vld [vmem:[%s5 + $0x1c] sm:$0xf]
      %v1463 = vld [vmem:[%s5 + $0x20] sm:$0xf]
      %v1464 = vld [vmem:[%s5 + $0x24] sm:$0xf]
      %v1465 = vld [vmem:[%s5 + $0x28] sm:$0xf]
      %v1466 = vld [vmem:[%s5 + $0x2c] sm:$0xf]
      %v1467 = vld [vmem:[%s5 + $0x30] sm:$0xf]
      %v1468 = vld [vmem:[%s5 + $0x34] sm:$0xf]
      %v1469 = vld [vmem:[%s5 + $0x38] sm:$0xf]
      %v1470 = vld [vmem:[%s5 + $0x3c] sm:$0xf]
      %v1471 = vld [vmem:[%s6] sm:$0x1]
      %v1473 = vlaneseq
      %v1474 = vshrl.u32 %v1473, 7
      %v1475 = vsub.s32 0, %v1474
      %v1476 = vrot.slane %v1471, %v1475
      %v1494 = vunpack.c.l.b16 %v1455
      %v1495 = vunpack.c.l.b16 %v1456
      %v1496 = vunpack.c.l.b16 %v1457
      %v1497 = vunpack.c.l.b16 %v1458
      %v1498 = vunpack.c.l.b16 %v1459
      %v1499 = vunpack.c.l.b16 %v1460
      %v1500 = vunpack.c.l.b16 %v1461
      %v1501 = vunpack.c.l.b16 %v1462
      %v1502 = vunpack.c.l.b16 %v1463
      %v1503 = vunpack.c.l.b16 %v1464
      %v1504 = vunpack.c.l.b16 %v1465
      %v1505 = vunpack.c.l.b16 %v1466
      %v1506 = vunpack.c.l.b16 %v1467
      %v1507 = vunpack.c.l.b16 %v1468
      %v1508 = vunpack.c.l.b16 %v1469
      %v1509 = vunpack.c.l.b16 %v1470
      %v1510 = vpack.c.b16 %v1495, %v1494
      %v1511 = vpack.c.b16 %v1497, %v1496
      %v1512 = vpack.c.b16 %v1499, %v1498
      %v1513 = vpack.c.b16 %v1501, %v1500
      %v1514 = vpack.c.b16 %v1503, %v1502
      %v1515 = vpack.c.b16 %v1505, %v1504
      %v1516 = vpack.c.b16 %v1507, %v1506
      %v1517 = vpack.c.b16 %v1509, %v1508
      %1526 = vmatprep.subr.bf16.mxu0 0
      %1527 = vmatpush1.bf16.msra.mxu0 %v1510
      %1528 = vmatprep.subr.bf16.mxu0 0
      %1529 = vmatpush1.bf16.msra.mxu0 %v1511
      %1530 = vmatprep.subr.bf16.mxu0 0
      %1531 = vmatpush1.bf16.msra.mxu0 %v1512
      %1532 = vmatprep.subr.bf16.mxu0 0
      %1533 = vmatpush1.bf16.msra.mxu0 %v1513
      %1534 = vmatprep.subr.bf16.mxu0 0
      %1535 = vmatpush1.bf16.msra.mxu0 %v1514
      %1536 = vmatprep.subr.bf16.mxu0 0
      %1537 = vmatpush1.bf16.msra.mxu0 %v1515
      %1538 = vmatprep.subr.bf16.mxu0 0
      %1539 = vmatpush1.bf16.msra.mxu0 %v1516
      %1540 = vmatprep.subr.bf16.mxu0 0
      %1541 = vmatpush1.bf16.msra.mxu0 %v1517
      %1542 = vmatprep.subr.bf16.mxu0 0
      %1543 = vmatpush1.bf16.msra.mxu0 0
      %1544 = vmatprep.subr.bf16.mxu0 0
      %1545 = vmatpush1.bf16.msra.mxu0 0
      %1546 = vmatprep.subr.bf16.mxu0 0
      %1547 = vmatpush1.bf16.msra.mxu0 0
      %1548 = vmatprep.subr.bf16.mxu0 0
      %1549 = vmatpush1.bf16.msra.mxu0 0
      %1550 = vmatprep.subr.bf16.mxu0 0
      %1551 = vmatpush1.bf16.msra.mxu0 0
      %1552 = vmatprep.subr.bf16.mxu0 0
      %1553 = vmatpush1.bf16.msra.mxu0 0
      %1554 = vmatprep.subr.bf16.mxu0 0
      %1555 = vmatpush1.bf16.msra.mxu0 0
      %1556 = vmatprep.subr.bf16.mxu0 0
      %1557 = vmatpush1.bf16.msra.mxu0 0
      %1558 = vmatprep.mubr.bf16.mxu0 0
      %1559 = vmatmul.mubr.bf16.gmra.mrb[0].mxu0 %v1454
      %v1560 = vpop.f32.mrb[0].mxu0
      %v1561 = vadd.f32 %v1476, %v1560
      %v1562 = vpop.f32.mrb[0].mxu0
      %v1563 = vpop.f32.mrb[0].mxu0
      %v1564 = vpop.f32.mrb[0].mxu0
      %1565 = vdwg.mxu0
      %1566 = vst [vmem:[%s318] sm:$0xf] %v1561
      %v1567 = vld [vmem:[%s408] sm:$0xf]
      %v1568 = vld [vmem:[%s408 + $0x1] sm:$0xf]
      %v1569 = vld [vmem:[%s408 + $0x2] sm:$0xf]
      %v1570 = vld [vmem:[%s488] sm:$0xf]
      %v1571 = vld [vmem:[%s488 + $0x1] sm:$0xf]
      %v1572 = vld [vmem:[%s488 + $0x2] sm:$0xf]
      %v1573 = vld [vmem:[%s568] sm:$0xf]
      %v1574 = vld [vmem:[%s568 + $0x1] sm:$0xf]
      %v1575 = vld [vmem:[%s568 + $0x2] sm:$0xf]
      %v1576 = vpack.c.bf16 %v1567, %v1567
      %v1577 = vpack.c.bf16 %v1568, %v1568
      %v1578 = vpack.c.bf16 %v1569, %v1569
      %v1579 = vpack.c.bf16 %v1570, %v1570
      %v1580 = vpack.c.bf16 %v1571, %v1571
      %v1581 = vpack.c.bf16 %v1572, %v1572
      %v1582 = vpack.c.bf16 %v1573, %v1573
      %v1583 = vpack.c.bf16 %v1574, %v1574
      %v1584 = vpack.c.bf16 %v1575, %v1575
      %v1585 = vld [vmem:[%s3] sm:$0xf]
      %v1586 = vld [vmem:[%s3 + $0x4] sm:$0xf]
      %v1587 = vld [vmem:[%s3 + $0x8] sm:$0xf]
      %v1588 = vld [vmem:[%s3 + $0xc] sm:$0xf]
      %v1589 = vld [vmem:[%s3 + $0x10] sm:$0xf]
      %v1590 = vld [vmem:[%s3 + $0x14] sm:$0xf]
      %v1591 = vld [vmem:[%s3 + $0x18] sm:$0xf]
      %v1592 = vld [vmem:[%s3 + $0x1c] sm:$0xf]
      %v1593 = vld [vmem:[%s3 + $0x20] sm:$0xf]
      %v1594 = vld [vmem:[%s3 + $0x24] sm:$0xf]
      %v1595 = vld [vmem:[%s3 + $0x28] sm:$0xf]
      %v1596 = vld [vmem:[%s3 + $0x2c] sm:$0xf]
      %v1597 = vld [vmem:[%s3 + $0x30] sm:$0xf]
      %v1598 = vld [vmem:[%s3 + $0x34] sm:$0xf]
      %v1599 = vld [vmem:[%s3 + $0x38] sm:$0xf]
      %v1600 = vld [vmem:[%s3 + $0x3c] sm:$0xf]
      %v1601 = vld [vmem:[%s3 + $0x40] sm:$0xf]
      %v1602 = vld [vmem:[%s3 + $0x44] sm:$0xf]
      %v1603 = vld [vmem:[%s3 + $0x48] sm:$0xf]
      %v1604 = vld [vmem:[%s3 + $0x4c] sm:$0xf]
      %v1605 = vld [vmem:[%s3 + $0x50] sm:$0xf]
      %v1606 = vld [vmem:[%s3 + $0x54] sm:$0xf]
      %v1607 = vld [vmem:[%s3 + $0x58] sm:$0xf]
      %v1608 = vld [vmem:[%s3 + $0x5c] sm:$0xf]
      %v1609 = vld [vmem:[%s3 + $0x60] sm:$0xf]
      %v1610 = vld [vmem:[%s3 + $0x64] sm:$0xf]
      %v1611 = vld [vmem:[%s3 + $0x68] sm:$0xf]
      %v1612 = vld [vmem:[%s3 + $0x6c] sm:$0xf]
      %v1613 = vld [vmem:[%s3 + $0x70] sm:$0xf]
      %v1614 = vld [vmem:[%s3 + $0x74] sm:$0xf]
      %v1615 = vld [vmem:[%s3 + $0x78] sm:$0xf]
      %v1616 = vld [vmem:[%s3 + $0x7c] sm:$0xf]
      %v1617 = vld [vmem:[%s3 + $0x80] sm:$0xf]
      %v1618 = vld [vmem:[%s3 + $0x84] sm:$0xf]
      %v1619 = vld [vmem:[%s3 + $0x88] sm:$0xf]
      %v1620 = vld [vmem:[%s3 + $0x8c] sm:$0xf]
      %v1621 = vld [vmem:[%s3 + $0x90] sm:$0xf]
      %v1622 = vld [vmem:[%s3 + $0x94] sm:$0xf]
      %v1623 = vld [vmem:[%s3 + $0x98] sm:$0xf]
      %v1624 = vld [vmem:[%s3 + $0x9c] sm:$0xf]
      %v1625 = vld [vmem:[%s3 + $0xa0] sm:$0xf]
      %v1626 = vld [vmem:[%s3 + $0xa4] sm:$0xf]
      %v1627 = vld [vmem:[%s3 + $0xa8] sm:$0xf]
      %v1628 = vld [vmem:[%s3 + $0xac] sm:$0xf]
      %v1629 = vld [vmem:[%s3 + $0xb0] sm:$0xf]
      %v1630 = vld [vmem:[%s3 + $0xb4] sm:$0xf]
      %v1631 = vld [vmem:[%s3 + $0xb8] sm:$0xf]
      %v1632 = vld [vmem:[%s3 + $0xbc] sm:$0xf]
      %v1633 = vld [vmem:[%s3 + $0xc0] sm:$0xf]
      %v1634 = vld [vmem:[%s3 + $0xc4] sm:$0xf]
      %v1635 = vld [vmem:[%s3 + $0xc8] sm:$0xf]
      %v1636 = vld [vmem:[%s3 + $0xcc] sm:$0xf]
      %v1637 = vld [vmem:[%s3 + $0xd0] sm:$0xf]
      %v1638 = vld [vmem:[%s3 + $0xd4] sm:$0xf]
      %v1639 = vld [vmem:[%s3 + $0xd8] sm:$0xf]
      %v1640 = vld [vmem:[%s3 + $0xdc] sm:$0xf]
      %v1641 = vld [vmem:[%s3 + $0xe0] sm:$0xf]
      %v1642 = vld [vmem:[%s3 + $0xe4] sm:$0xf]
      %v1643 = vld [vmem:[%s3 + $0xe8] sm:$0xf]
      %v1644 = vld [vmem:[%s3 + $0xec] sm:$0xf]
      %v1645 = vld [vmem:[%s3 + $0xf0] sm:$0xf]
      %v1646 = vld [vmem:[%s3 + $0xf4] sm:$0xf]
      %v1647 = vld [vmem:[%s3 + $0xf8] sm:$0xf]
      %v1648 = vld [vmem:[%s3 + $0xfc] sm:$0xf]
      %v1649 = vld [vmem:[%s3 + $0x100] sm:$0xf]
      %v1650 = vld [vmem:[%s3 + $0x104] sm:$0xf]
      %v1651 = vld [vmem:[%s3 + $0x108] sm:$0xf]
      %v1652 = vld [vmem:[%s3 + $0x10c] sm:$0xf]
      %v1653 = vld [vmem:[%s3 + $0x110] sm:$0xf]
      %v1654 = vld [vmem:[%s3 + $0x114] sm:$0xf]
      %v1655 = vld [vmem:[%s3 + $0x118] sm:$0xf]
      %v1656 = vld [vmem:[%s3 + $0x11c] sm:$0xf]
      %v1657 = vld [vmem:[%s3 + $0x120] sm:$0xf]
      %v1658 = vld [vmem:[%s3 + $0x124] sm:$0xf]
      %v1659 = vld [vmem:[%s3 + $0x128] sm:$0xf]
      %v1660 = vld [vmem:[%s3 + $0x12c] sm:$0xf]
      %v1661 = vld [vmem:[%s3 + $0x130] sm:$0xf]
      %v1662 = vld [vmem:[%s3 + $0x134] sm:$0xf]
      %v1663 = vld [vmem:[%s3 + $0x138] sm:$0xf]
      %v1664 = vld [vmem:[%s3 + $0x13c] sm:$0xf]
      %v1665 = vld [vmem:[%s3 + $0x140] sm:$0xf]
      %v1666 = vld [vmem:[%s3 + $0x144] sm:$0xf]
      %v1667 = vld [vmem:[%s3 + $0x148] sm:$0xf]
      %v1668 = vld [vmem:[%s3 + $0x14c] sm:$0xf]
      %v1669 = vld [vmem:[%s3 + $0x150] sm:$0xf]
      %v1670 = vld [vmem:[%s3 + $0x154] sm:$0xf]
      %v1671 = vld [vmem:[%s3 + $0x158] sm:$0xf]
      %v1672 = vld [vmem:[%s3 + $0x15c] sm:$0xf]
      %v1673 = vld [vmem:[%s3 + $0x160] sm:$0xf]
      %v1674 = vld [vmem:[%s3 + $0x164] sm:$0xf]
      %v1675 = vld [vmem:[%s3 + $0x168] sm:$0xf]
      %v1676 = vld [vmem:[%s3 + $0x16c] sm:$0xf]
      %v1677 = vld [vmem:[%s3 + $0x170] sm:$0xf]
      %v1678 = vld [vmem:[%s3 + $0x174] sm:$0xf]
      %v1679 = vld [vmem:[%s3 + $0x178] sm:$0xf]
      %v1680 = vld [vmem:[%s3 + $0x17c] sm:$0xf]
      %v1681 = vld [vmem:[%s3 + $0x180] sm:$0xf]
      %v1682 = vld [vmem:[%s3 + $0x184] sm:$0xf]
      %v1683 = vld [vmem:[%s3 + $0x188] sm:$0xf]
      %v1684 = vld [vmem:[%s3 + $0x18c] sm:$0xf]
      %v1685 = vld [vmem:[%s3 + $0x190] sm:$0xf]
      %v1686 = vld [vmem:[%s3 + $0x194] sm:$0xf]
      %v1687 = vld [vmem:[%s3 + $0x198] sm:$0xf]
      %v1688 = vld [vmem:[%s3 + $0x19c] sm:$0xf]
      %v1689 = vld [vmem:[%s3 + $0x1a0] sm:$0xf]
      %v1690 = vld [vmem:[%s3 + $0x1a4] sm:$0xf]
      %v1691 = vld [vmem:[%s3 + $0x1a8] sm:$0xf]
      %v1692 = vld [vmem:[%s3 + $0x1ac] sm:$0xf]
      %v1693 = vld [vmem:[%s3 + $0x1b0] sm:$0xf]
      %v1694 = vld [vmem:[%s3 + $0x1b4] sm:$0xf]
      %v1695 = vld [vmem:[%s3 + $0x1b8] sm:$0xf]
      %v1696 = vld [vmem:[%s3 + $0x1bc] sm:$0xf]
      %v1697 = vld [vmem:[%s3 + $0x1c0] sm:$0xf]
      %v1698 = vld [vmem:[%s3 + $0x1c4] sm:$0xf]
      %v1699 = vld [vmem:[%s3 + $0x1c8] sm:$0xf]
      %v1700 = vld [vmem:[%s3 + $0x1cc] sm:$0xf]
      %v1701 = vld [vmem:[%s3 + $0x1d0] sm:$0xf]
      %v1702 = vld [vmem:[%s3 + $0x1d4] sm:$0xf]
      %v1703 = vld [vmem:[%s3 + $0x1d8] sm:$0xf]
      %v1704 = vld [vmem:[%s3 + $0x1dc] sm:$0xf]
      %v1705 = vld [vmem:[%s3 + $0x1e0] sm:$0xf]
      %v1706 = vld [vmem:[%s3 + $0x1e4] sm:$0xf]
      %v1707 = vld [vmem:[%s3 + $0x1e8] sm:$0xf]
      %v1708 = vld [vmem:[%s3 + $0x1ec] sm:$0xf]
      %v1709 = vld [vmem:[%s3 + $0x1f0] sm:$0xf]
      %v1710 = vld [vmem:[%s3 + $0x1f4] sm:$0xf]
      %v1711 = vld [vmem:[%s3 + $0x1f8] sm:$0xf]
      %v1712 = vld [vmem:[%s3 + $0x1fc] sm:$0xf]
      %v1713 = vld [vmem:[%s3 + $0x200] sm:$0xf]
      %v1714 = vld [vmem:[%s3 + $0x204] sm:$0xf]
      %v1715 = vld [vmem:[%s3 + $0x208] sm:$0xf]
      %v1716 = vld [vmem:[%s3 + $0x20c] sm:$0xf]
      %v1717 = vld [vmem:[%s3 + $0x210] sm:$0xf]
      %v1718 = vld [vmem:[%s3 + $0x214] sm:$0xf]
      %v1719 = vld [vmem:[%s3 + $0x218] sm:$0xf]
      %v1720 = vld [vmem:[%s3 + $0x21c] sm:$0xf]
      %v1721 = vld [vmem:[%s3 + $0x220] sm:$0xf]
      %v1722 = vld [vmem:[%s3 + $0x224] sm:$0xf]
      %v1723 = vld [vmem:[%s3 + $0x228] sm:$0xf]
      %v1724 = vld [vmem:[%s3 + $0x22c] sm:$0xf]
      %v1725 = vld [vmem:[%s3 + $0x230] sm:$0xf]
      %v1726 = vld [vmem:[%s3 + $0x234] sm:$0xf]
      %v1727 = vld [vmem:[%s3 + $0x238] sm:$0xf]
      %v1728 = vld [vmem:[%s3 + $0x23c] sm:$0xf]
      %v1729 = vld [vmem:[%s4] sm:$0x1]
      %v1731 = vlaneseq
      %v1732 = vshrl.u32 %v1731, 7
      %v1733 = vsub.s32 0, %v1732
      %v1734 = vrot.slane %v1729, %v1733
      %v1880 = vunpack.c.l.b16 %v1585
      %v1881 = vunpack.c.l.b16 %v1586
      %v1882 = vunpack.c.l.b16 %v1587
      %v1883 = vunpack.c.l.b16 %v1588
      %v1884 = vunpack.c.l.b16 %v1589
      %v1885 = vunpack.c.l.b16 %v1590
      %v1886 = vunpack.c.l.b16 %v1591
      %v1887 = vunpack.c.l.b16 %v1592
      %v1888 = vunpack.c.l.b16 %v1593
      %v1889 = vunpack.c.l.b16 %v1594
      %v1890 = vunpack.c.l.b16 %v1595
      %v1891 = vunpack.c.l.b16 %v1596
      %v1892 = vunpack.c.l.b16 %v1597
      %v1893 = vunpack.c.l.b16 %v1598
      %v1894 = vunpack.c.l.b16 %v1599
      %v1895 = vunpack.c.l.b16 %v1600
      %v1896 = vunpack.c.l.b16 %v1601
      %v1897 = vunpack.c.l.b16 %v1602
      %v1898 = vunpack.c.l.b16 %v1603
      %v1899 = vunpack.c.l.b16 %v1604
      %v1900 = vunpack.c.l.b16 %v1605
      %v1901 = vunpack.c.l.b16 %v1606
      %v1902 = vunpack.c.l.b16 %v1607
      %v1903 = vunpack.c.l.b16 %v1608
      %v1904 = vunpack.c.l.b16 %v1609
      %v1905 = vunpack.c.l.b16 %v1610
      %v1906 = vunpack.c.l.b16 %v1611
      %v1907 = vunpack.c.l.b16 %v1612
      %v1908 = vunpack.c.l.b16 %v1613
      %v1909 = vunpack.c.l.b16 %v1614
      %v1910 = vunpack.c.l.b16 %v1615
      %v1911 = vunpack.c.l.b16 %v1616
      %v1912 = vunpack.c.l.b16 %v1617
      %v1913 = vunpack.c.l.b16 %v1618
      %v1914 = vunpack.c.l.b16 %v1619
      %v1915 = vunpack.c.l.b16 %v1620
      %v1916 = vunpack.c.l.b16 %v1621
      %v1917 = vunpack.c.l.b16 %v1622
      %v1918 = vunpack.c.l.b16 %v1623
      %v1919 = vunpack.c.l.b16 %v1624
      %v1920 = vunpack.c.l.b16 %v1625
      %v1921 = vunpack.c.l.b16 %v1626
      %v1922 = vunpack.c.l.b16 %v1627
      %v1923 = vunpack.c.l.b16 %v1628
      %v1924 = vunpack.c.l.b16 %v1629
      %v1925 = vunpack.c.l.b16 %v1630
      %v1926 = vunpack.c.l.b16 %v1631
      %v1927 = vunpack.c.l.b16 %v1632
      %v1928 = vunpack.c.l.b16 %v1633
      %v1929 = vunpack.c.l.b16 %v1634
      %v1930 = vunpack.c.l.b16 %v1635
      %v1931 = vunpack.c.l.b16 %v1636
      %v1932 = vunpack.c.l.b16 %v1637
      %v1933 = vunpack.c.l.b16 %v1638
      %v1934 = vunpack.c.l.b16 %v1639
      %v1935 = vunpack.c.l.b16 %v1640
      %v1936 = vunpack.c.l.b16 %v1641
      %v1937 = vunpack.c.l.b16 %v1642
      %v1938 = vunpack.c.l.b16 %v1643
      %v1939 = vunpack.c.l.b16 %v1644
      %v1940 = vunpack.c.l.b16 %v1645
      %v1941 = vunpack.c.l.b16 %v1646
      %v1942 = vunpack.c.l.b16 %v1647
      %v1943 = vunpack.c.l.b16 %v1648
      %v1944 = vunpack.c.l.b16 %v1649
      %v1945 = vunpack.c.l.b16 %v1650
      %v1946 = vunpack.c.l.b16 %v1651
      %v1947 = vunpack.c.l.b16 %v1652
      %v1948 = vunpack.c.l.b16 %v1653
      %v1949 = vunpack.c.l.b16 %v1654
      %v1950 = vunpack.c.l.b16 %v1655
      %v1951 = vunpack.c.l.b16 %v1656
      %v1952 = vunpack.c.l.b16 %v1657
      %v1953 = vunpack.c.l.b16 %v1658
      %v1954 = vunpack.c.l.b16 %v1659
      %v1955 = vunpack.c.l.b16 %v1660
      %v1956 = vunpack.c.l.b16 %v1661
      %v1957 = vunpack.c.l.b16 %v1662
      %v1958 = vunpack.c.l.b16 %v1663
      %v1959 = vunpack.c.l.b16 %v1664
      %v1960 = vunpack.c.l.b16 %v1665
      %v1961 = vunpack.c.l.b16 %v1666
      %v1962 = vunpack.c.l.b16 %v1667
      %v1963 = vunpack.c.l.b16 %v1668
      %v1964 = vunpack.c.l.b16 %v1669
      %v1965 = vunpack.c.l.b16 %v1670
      %v1966 = vunpack.c.l.b16 %v1671
      %v1967 = vunpack.c.l.b16 %v1672
      %v1968 = vunpack.c.l.b16 %v1673
      %v1969 = vunpack.c.l.b16 %v1674
      %v1970 = vunpack.c.l.b16 %v1675
      %v1971 = vunpack.c.l.b16 %v1676
      %v1972 = vunpack.c.l.b16 %v1677
      %v1973 = vunpack.c.l.b16 %v1678
      %v1974 = vunpack.c.l.b16 %v1679
      %v1975 = vunpack.c.l.b16 %v1680
      %v1976 = vunpack.c.l.b16 %v1681
      %v1977 = vunpack.c.l.b16 %v1682
      %v1978 = vunpack.c.l.b16 %v1683
      %v1979 = vunpack.c.l.b16 %v1684
      %v1980 = vunpack.c.l.b16 %v1685
      %v1981 = vunpack.c.l.b16 %v1686
      %v1982 = vunpack.c.l.b16 %v1687
      %v1983 = vunpack.c.l.b16 %v1688
      %v1984 = vunpack.c.l.b16 %v1689
      %v1985 = vunpack.c.l.b16 %v1690
      %v1986 = vunpack.c.l.b16 %v1691
      %v1987 = vunpack.c.l.b16 %v1692
      %v1988 = vunpack.c.l.b16 %v1693
      %v1989 = vunpack.c.l.b16 %v1694
      %v1990 = vunpack.c.l.b16 %v1695
      %v1991 = vunpack.c.l.b16 %v1696
      %v1992 = vunpack.c.l.b16 %v1697
      %v1993 = vunpack.c.l.b16 %v1698
      %v1994 = vunpack.c.l.b16 %v1699
      %v1995 = vunpack.c.l.b16 %v1700
      %v1996 = vunpack.c.l.b16 %v1701
      %v1997 = vunpack.c.l.b16 %v1702
      %v1998 = vunpack.c.l.b16 %v1703
      %v1999 = vunpack.c.l.b16 %v1704
      %v2000 = vunpack.c.l.b16 %v1705
      %v2001 = vunpack.c.l.b16 %v1706
      %v2002 = vunpack.c.l.b16 %v1707
      %v2003 = vunpack.c.l.b16 %v1708
      %v2004 = vunpack.c.l.b16 %v1709
      %v2005 = vunpack.c.l.b16 %v1710
      %v2006 = vunpack.c.l.b16 %v1711
      %v2007 = vunpack.c.l.b16 %v1712
      %v2008 = vunpack.c.l.b16 %v1713
      %v2009 = vunpack.c.l.b16 %v1714
      %v2010 = vunpack.c.l.b16 %v1715
      %v2011 = vunpack.c.l.b16 %v1716
      %v2012 = vunpack.c.l.b16 %v1717
      %v2013 = vunpack.c.l.b16 %v1718
      %v2014 = vunpack.c.l.b16 %v1719
      %v2015 = vunpack.c.l.b16 %v1720
      %v2016 = vunpack.c.l.b16 %v1721
      %v2017 = vunpack.c.l.b16 %v1722
      %v2018 = vunpack.c.l.b16 %v1723
      %v2019 = vunpack.c.l.b16 %v1724
      %v2020 = vunpack.c.l.b16 %v1725
      %v2021 = vunpack.c.l.b16 %v1726
      %v2022 = vunpack.c.l.b16 %v1727
      %v2023 = vunpack.c.l.b16 %v1728
      %v2024 = vpack.c.b16 %v1881, %v1880
      %v2025 = vpack.c.b16 %v1883, %v1882
      %v2026 = vpack.c.b16 %v1885, %v1884
      %v2027 = vpack.c.b16 %v1887, %v1886
      %v2028 = vpack.c.b16 %v1889, %v1888
      %v2029 = vpack.c.b16 %v1891, %v1890
      %v2030 = vpack.c.b16 %v1893, %v1892
      %v2031 = vpack.c.b16 %v1895, %v1894
      %v2032 = vpack.c.b16 %v1897, %v1896
      %v2033 = vpack.c.b16 %v1899, %v1898
      %v2034 = vpack.c.b16 %v1901, %v1900
      %v2035 = vpack.c.b16 %v1903, %v1902
      %v2036 = vpack.c.b16 %v1905, %v1904
      %v2037 = vpack.c.b16 %v1907, %v1906
      %v2038 = vpack.c.b16 %v1909, %v1908
      %v2039 = vpack.c.b16 %v1911, %v1910
      %v2040 = vpack.c.b16 %v1913, %v1912
      %v2041 = vpack.c.b16 %v1915, %v1914
      %v2042 = vpack.c.b16 %v1917, %v1916
      %v2043 = vpack.c.b16 %v1919, %v1918
      %v2044 = vpack.c.b16 %v1921, %v1920
      %v2045 = vpack.c.b16 %v1923, %v1922
      %v2046 = vpack.c.b16 %v1925, %v1924
      %v2047 = vpack.c.b16 %v1927, %v1926
      %v2048 = vpack.c.b16 %v1929, %v1928
      %v2049 = vpack.c.b16 %v1931, %v1930
      %v2050 = vpack.c.b16 %v1933, %v1932
      %v2051 = vpack.c.b16 %v1935, %v1934
      %v2052 = vpack.c.b16 %v1937, %v1936
      %v2053 = vpack.c.b16 %v1939, %v1938
      %v2054 = vpack.c.b16 %v1941, %v1940
      %v2055 = vpack.c.b16 %v1943, %v1942
      %v2056 = vpack.c.b16 %v1945, %v1944
      %v2057 = vpack.c.b16 %v1947, %v1946
      %v2058 = vpack.c.b16 %v1949, %v1948
      %v2059 = vpack.c.b16 %v1951, %v1950
      %v2060 = vpack.c.b16 %v1953, %v1952
      %v2061 = vpack.c.b16 %v1955, %v1954
      %v2062 = vpack.c.b16 %v1957, %v1956
      %v2063 = vpack.c.b16 %v1959, %v1958
      %v2064 = vpack.c.b16 %v1961, %v1960
      %v2065 = vpack.c.b16 %v1963, %v1962
      %v2066 = vpack.c.b16 %v1965, %v1964
      %v2067 = vpack.c.b16 %v1967, %v1966
      %v2068 = vpack.c.b16 %v1969, %v1968
      %v2069 = vpack.c.b16 %v1971, %v1970
      %v2070 = vpack.c.b16 %v1973, %v1972
      %v2071 = vpack.c.b16 %v1975, %v1974
      %v2072 = vpack.c.b16 %v1977, %v1976
      %v2073 = vpack.c.b16 %v1979, %v1978
      %v2074 = vpack.c.b16 %v1981, %v1980
      %v2075 = vpack.c.b16 %v1983, %v1982
      %v2076 = vpack.c.b16 %v1985, %v1984
      %v2077 = vpack.c.b16 %v1987, %v1986
      %v2078 = vpack.c.b16 %v1989, %v1988
      %v2079 = vpack.c.b16 %v1991, %v1990
      %v2080 = vpack.c.b16 %v1993, %v1992
      %v2081 = vpack.c.b16 %v1995, %v1994
      %v2082 = vpack.c.b16 %v1997, %v1996
      %v2083 = vpack.c.b16 %v1999, %v1998
      %v2084 = vpack.c.b16 %v2001, %v2000
      %v2085 = vpack.c.b16 %v2003, %v2002
      %v2086 = vpack.c.b16 %v2005, %v2004
      %v2087 = vpack.c.b16 %v2007, %v2006
      %v2088 = vpack.c.b16 %v2009, %v2008
      %v2089 = vpack.c.b16 %v2011, %v2010
      %v2090 = vpack.c.b16 %v2013, %v2012
      %v2091 = vpack.c.b16 %v2015, %v2014
      %v2092 = vpack.c.b16 %v2017, %v2016
      %v2093 = vpack.c.b16 %v2019, %v2018
      %v2094 = vpack.c.b16 %v2021, %v2020
      %v2095 = vpack.c.b16 %v2023, %v2022
      %2168 = vmatprep.subr.bf16.mxu0 0
      %2169 = vmatpush1.bf16.msra.mxu0 %v2024
      %2170 = vmatprep.subr.bf16.mxu0 0
      %2171 = vmatpush1.bf16.msra.mxu0 %v2025
      %2172 = vmatprep.subr.bf16.mxu0 0
      %2173 = vmatpush1.bf16.msra.mxu0 %v2026
      %2174 = vmatprep.subr.bf16.mxu0 0
      %2175 = vmatpush1.bf16.msra.mxu0 %v2027
      %2176 = vmatprep.subr.bf16.mxu0 0
      %2177 = vmatpush1.bf16.msra.mxu0 %v2028
      %2178 = vmatprep.subr.bf16.mxu0 0
      %2179 = vmatpush1.bf16.msra.mxu0 %v2029
      %2180 = vmatprep.subr.bf16.mxu0 0
      %2181 = vmatpush1.bf16.msra.mxu0 %v2030
      %2182 = vmatprep.subr.bf16.mxu0 0
      %2183 = vmatpush1.bf16.msra.mxu0 %v2031
      %2184 = vmatprep.subr.bf16.mxu0 0
      %2185 = vmatpush1.bf16.msra.mxu0 %v2032
      %2186 = vmatprep.subr.bf16.mxu0 0
      %2187 = vmatpush1.bf16.msra.mxu0 %v2033
      %2188 = vmatprep.subr.bf16.mxu0 0
      %2189 = vmatpush1.bf16.msra.mxu0 %v2034
      %2190 = vmatprep.subr.bf16.mxu0 0
      %2191 = vmatpush1.bf16.msra.mxu0 %v2035
      %2192 = vmatprep.subr.bf16.mxu0 0
      %2193 = vmatpush1.bf16.msra.mxu0 %v2036
      %2194 = vmatprep.subr.bf16.mxu0 0
      %2195 = vmatpush1.bf16.msra.mxu0 %v2037
      %2196 = vmatprep.subr.bf16.mxu0 0
      %2197 = vmatpush1.bf16.msra.mxu0 %v2038
      %2198 = vmatprep.subr.bf16.mxu0 0
      %2199 = vmatpush1.bf16.msra.mxu0 %v2039
      %2200 = vmatprep.mubr.bf16.mxu0 %v1577
      %2201 = vmatmul.mubr.bf16.gmra.mrb[0].mxu0 %v1576
      %v2202 = vpop.f32.mrb[0].mxu0
      %v2203 = vadd.f32 %v1734, %v2202
      %v2204 = vpop.f32.mrb[0].mxu0
      %v2205 = vpop.f32.mrb[0].mxu0
      %v2206 = vpop.f32.mrb[0].mxu0
      %2207 = vdwg.mxu0
      %2208 = vmatprep.subr.bf16.mxu0 0
      %2209 = vmatpush1.bf16.msra.mxu0 %v2040
      %2210 = vmatprep.subr.bf16.mxu0 0
      %2211 = vmatpush1.bf16.msra.mxu0 %v2041
      %2212 = vmatprep.subr.bf16.mxu0 0
      %2213 = vmatpush1.bf16.msra.mxu0 %v2042
      %2214 = vmatprep.subr.bf16.mxu0 0
      %2215 = vmatpush1.bf16.msra.mxu0 %v2043
      %2216 = vmatprep.subr.bf16.mxu0 0
      %2217 = vmatpush1.bf16.msra.mxu0 %v2044
      %2218 = vmatprep.subr.bf16.mxu0 0
      %2219 = vmatpush1.bf16.msra.mxu0 %v2045
      %2220 = vmatprep.subr.bf16.mxu0 0
      %2221 = vmatpush1.bf16.msra.mxu0 %v2046
      %2222 = vmatprep.subr.bf16.mxu0 0
      %2223 = vmatpush1.bf16.msra.mxu0 %v2047
      %2224 = vmatprep.subr.bf16.mxu0 0
      %2225 = vmatpush1.bf16.msra.mxu0 %v2048
      %2226 = vmatprep.subr.bf16.mxu0 0
      %2227 = vmatpush1.bf16.msra.mxu0 %v2049
      %2228 = vmatprep.subr.bf16.mxu0 0
      %2229 = vmatpush1.bf16.msra.mxu0 %v2050
      %2230 = vmatprep.subr.bf16.mxu0 0
      %2231 = vmatpush1.bf16.msra.mxu0 %v2051
      %2232 = vmatprep.subr.bf16.mxu0 0
      %2233 = vmatpush1.bf16.msra.mxu0 %v2052
      %2234 = vmatprep.subr.bf16.mxu0 0
      %2235 = vmatpush1.bf16.msra.mxu0 %v2053
      %2236 = vmatprep.subr.bf16.mxu0 0
      %2237 = vmatpush1.bf16.msra.mxu0 %v2054
      %2238 = vmatprep.subr.bf16.mxu0 0
      %2239 = vmatpush1.bf16.msra.mxu0 %v2055
      %2240 = vmatprep.mubr.bf16.mxu0 %v1579
      %2241 = vmatmul.mubr.bf16.gmra.mrb[0].mxu0 %v1578
      %v2242 = vpop.f32.mrb[0].mxu0
      %v2243 = vadd.f32 %v2203, %v2242
      %v2244 = vpop.f32.mrb[0].mxu0
      %v2245 = vpop.f32.mrb[0].mxu0
      %v2246 = vpop.f32.mrb[0].mxu0
      %2247 = vdwg.mxu0
      %2248 = vmatprep.subr.bf16.mxu0 0
      %2249 = vmatpush1.bf16.msra.mxu0 %v2056
      %2250 = vmatprep.subr.bf16.mxu0 0
      %2251 = vmatpush1.bf16.msra.mxu0 %v2057
      %2252 = vmatprep.subr.bf16.mxu0 0
      %2253 = vmatpush1.bf16.msra.mxu0 %v2058
      %2254 = vmatprep.subr.bf16.mxu0 0
      %2255 = vmatpush1.bf16.msra.mxu0 %v2059
      %2256 = vmatprep.subr.bf16.mxu0 0
      %2257 = vmatpush1.bf16.msra.mxu0 %v2060
      %2258 = vmatprep.subr.bf16.mxu0 0
      %2259 = vmatpush1.bf16.msra.mxu0 %v2061
      %2260 = vmatprep.subr.bf16.mxu0 0
      %2261 = vmatpush1.bf16.msra.mxu0 %v2062
      %2262 = vmatprep.subr.bf16.mxu0 0
      %2263 = vmatpush1.bf16.msra.mxu0 %v2063
      %2264 = vmatprep.subr.bf16.mxu0 0
      %2265 = vmatpush1.bf16.msra.mxu0 %v2064
      %2266 = vmatprep.subr.bf16.mxu0 0
      %2267 = vmatpush1.bf16.msra.mxu0 %v2065
      %2268 = vmatprep.subr.bf16.mxu0 0
      %2269 = vmatpush1.bf16.msra.mxu0 %v2066
      %2270 = vmatprep.subr.bf16.mxu0 0
      %2271 = vmatpush1.bf16.msra.mxu0 %v2067
      %2272 = vmatprep.subr.bf16.mxu0 0
      %2273 = vmatpush1.bf16.msra.mxu0 %v2068
      %2274 = vmatprep.subr.bf16.mxu0 0
      %2275 = vmatpush1.bf16.msra.mxu0 %v2069
      %2276 = vmatprep.subr.bf16.mxu0 0
      %2277 = vmatpush1.bf16.msra.mxu0 %v2070
      %2278 = vmatprep.subr.bf16.mxu0 0
      %2279 = vmatpush1.bf16.msra.mxu0 %v2071
      %2280 = vmatprep.mubr.bf16.mxu0 %v1581
      %2281 = vmatmul.mubr.bf16.gmra.mrb[0].mxu0 %v1580
      %v2282 = vpop.f32.mrb[0].mxu0
      %v2283 = vadd.f32 %v2243, %v2282
      %v2284 = vpop.f32.mrb[0].mxu0
      %v2285 = vpop.f32.mrb[0].mxu0
      %v2286 = vpop.f32.mrb[0].mxu0
      %2287 = vdwg.mxu0
      %2288 = vmatprep.subr.bf16.mxu0 0
      %2289 = vmatpush1.bf16.msra.mxu0 %v2072
      %2290 = vmatprep.subr.bf16.mxu0 0
      %2291 = vmatpush1.bf16.msra.mxu0 %v2073
      %2292 = vmatprep.subr.bf16.mxu0 0
      %2293 = vmatpush1.bf16.msra.mxu0 %v2074
      %2294 = vmatprep.subr.bf16.mxu0 0
      %2295 = vmatpush1.bf16.msra.mxu0 %v2075
      %2296 = vmatprep.subr.bf16.mxu0 0
      %2297 = vmatpush1.bf16.msra.mxu0 %v2076
      %2298 = vmatprep.subr.bf16.mxu0 0
      %2299 = vmatpush1.bf16.msra.mxu0 %v2077
      %2300 = vmatprep.subr.bf16.mxu0 0
      %2301 = vmatpush1.bf16.msra.mxu0 %v2078
      %2302 = vmatprep.subr.bf16.mxu0 0
      %2303 = vmatpush1.bf16.msra.mxu0 %v2079
      %2304 = vmatprep.subr.bf16.mxu0 0
      %2305 = vmatpush1.bf16.msra.mxu0 %v2080
      %2306 = vmatprep.subr.bf16.mxu0 0
      %2307 = vmatpush1.bf16.msra.mxu0 %v2081
      %2308 = vmatprep.subr.bf16.mxu0 0
      %2309 = vmatpush1.bf16.msra.mxu0 %v2082
      %2310 = vmatprep.subr.bf16.mxu0 0
      %2311 = vmatpush1.bf16.msra.mxu0 %v2083
      %2312 = vmatprep.subr.bf16.mxu0 0
      %2313 = vmatpush1.bf16.msra.mxu0 %v2084
      %2314 = vmatprep.subr.bf16.mxu0 0
      %2315 = vmatpush1.bf16.msra.mxu0 %v2085
      %2316 = vmatprep.subr.bf16.mxu0 0
      %2317 = vmatpush1.bf16.msra.mxu0 %v2086
      %2318 = vmatprep.subr.bf16.mxu0 0
      %2319 = vmatpush1.bf16.msra.mxu0 %v2087
      %2320 = vmatprep.mubr.bf16.mxu0 %v1583
      %2321 = vmatmul.mubr.bf16.gmra.mrb[0].mxu0 %v1582
      %v2322 = vpop.f32.mrb[0].mxu0
      %v2323 = vadd.f32 %v2283, %v2322
      %v2324 = vpop.f32.mrb[0].mxu0
      %v2325 = vpop.f32.mrb[0].mxu0
      %v2326 = vpop.f32.mrb[0].mxu0
      %2327 = vdwg.mxu0
      %2328 = vmatprep.subr.bf16.mxu0 0
      %2329 = vmatpush1.bf16.msra.mxu0 %v2088
      %2330 = vmatprep.subr.bf16.mxu0 0
      %2331 = vmatpush1.bf16.msra.mxu0 %v2089
      %2332 = vmatprep.subr.bf16.mxu0 0
      %2333 = vmatpush1.bf16.msra.mxu0 %v2090
      %2334 = vmatprep.subr.bf16.mxu0 0
      %2335 = vmatpush1.bf16.msra.mxu0 %v2091
      %2336 = vmatprep.subr.bf16.mxu0 0
      %2337 = vmatpush1.bf16.msra.mxu0 %v2092
      %2338 = vmatprep.subr.bf16.mxu0 0
      %2339 = vmatpush1.bf16.msra.mxu0 %v2093
      %2340 = vmatprep.subr.bf16.mxu0 0
      %2341 = vmatpush1.bf16.msra.mxu0 %v2094
      %2342 = vmatprep.subr.bf16.mxu0 0
      %2343 = vmatpush1.bf16.msra.mxu0 %v2095
      %2344 = vmatprep.subr.bf16.mxu0 0
      %2345 = vmatpush1.bf16.msra.mxu0 0
      %2346 = vmatprep.subr.bf16.mxu0 0
      %2347 = vmatpush1.bf16.msra.mxu0 0
      %2348 = vmatprep.subr.bf16.mxu0 0
      %2349 = vmatpush1.bf16.msra.mxu0 0
      %2350 = vmatprep.subr.bf16.mxu0 0
      %2351 = vmatpush1.bf16.msra.mxu0 0
      %2352 = vmatprep.subr.bf16.mxu0 0
      %2353 = vmatpush1.bf16.msra.mxu0 0
      %2354 = vmatprep.subr.bf16.mxu0 0
      %2355 = vmatpush1.bf16.msra.mxu0 0
      %2356 = vmatprep.subr.bf16.mxu0 0
      %2357 = vmatpush1.bf16.msra.mxu0 0
      %2358 = vmatprep.subr.bf16.mxu0 0
      %2359 = vmatpush1.bf16.msra.mxu0 0
      %2360 = vmatprep.mubr.bf16.mxu0 0
      %2361 = vmatmul.mubr.bf16.gmra.mrb[0].mxu0 %v1584
      %v2362 = vpop.f32.mrb[0].mxu0
      %v2363 = vadd.f32 %v2323, %v2362
      %v2364 = vpop.f32.mrb[0].mxu0
      %v2365 = vpop.f32.mrb[0].mxu0
      %v2366 = vpop.f32.mrb[0].mxu0
      %2367 = vdwg.mxu0
      %vm2368 = vcmp.gt.f32.partialorder %v2363, 0.0
      %v2369 = vmul.f32 %v2363, 0.01
      %v2370 = vsel %vm2368, %v2363, %v2369
      %v2371 = vpack.c.bf16 %v2370, %v2370
      %v2372 = vld [vmem:[%s5] sm:$0xf]
      %v2373 = vld [vmem:[%s5 + $0x4] sm:$0xf]
      %v2374 = vld [vmem:[%s5 + $0x8] sm:$0xf]
      %v2375 = vld [vmem:[%s5 + $0xc] sm:$0xf]
      %v2376 = vld [vmem:[%s5 + $0x10] sm:$0xf]
      %v2377 = vld [vmem:[%s5 + $0x14] sm:$0xf]
      %v2378 = vld [vmem:[%s5 + $0x18] sm:$0xf]
      %v2379 = vld [vmem:[%s5 + $0x1c] sm:$0xf]
      %v2380 = vld [vmem:[%s5 + $0x20] sm:$0xf]
      %v2381 = vld [vmem:[%s5 + $0x24] sm:$0xf]
      %v2382 = vld [vmem:[%s5 + $0x28] sm:$0xf]
      %v2383 = vld [vmem:[%s5 + $0x2c] sm:$0xf]
      %v2384 = vld [vmem:[%s5 + $0x30] sm:$0xf]
      %v2385 = vld [vmem:[%s5 + $0x34] sm:$0xf]
      %v2386 = vld [vmem:[%s5 + $0x38] sm:$0xf]
      %v2387 = vld [vmem:[%s5 + $0x3c] sm:$0xf]
      %v2388 = vld [vmem:[%s6] sm:$0x1]
      %v2390 = vlaneseq
      %v2391 = vshrl.u32 %v2390, 7
      %v2392 = vsub.s32 0, %v2391
      %v2393 = vrot.slane %v2388, %v2392
      %v2411 = vunpack.c.l.b16 %v2372
      %v2412 = vunpack.c.l.b16 %v2373
      %v2413 = vunpack.c.l.b16 %v2374
      %v2414 = vunpack.c.l.b16 %v2375
      %v2415 = vunpack.c.l.b16 %v2376
      %v2416 = vunpack.c.l.b16 %v2377
      %v2417 = vunpack.c.l.b16 %v2378
      %v2418 = vunpack.c.l.b16 %v2379
      %v2419 = vunpack.c.l.b16 %v2380
      %v2420 = vunpack.c.l.b16 %v2381
      %v2421 = vunpack.c.l.b16 %v2382
      %v2422 = vunpack.c.l.b16 %v2383
      %v2423 = vunpack.c.l.b16 %v2384
      %v2424 = vunpack.c.l.b16 %v2385
      %v2425 = vunpack.c.l.b16 %v2386
      %v2426 = vunpack.c.l.b16 %v2387
      %v2427 = vpack.c.b16 %v2412, %v2411
      %v2428 = vpack.c.b16 %v2414, %v2413
      %v2429 = vpack.c.b16 %v2416, %v2415
      %v2430 = vpack.c.b16 %v2418, %v2417
      %v2431 = vpack.c.b16 %v2420, %v2419
      %v2432 = vpack.c.b16 %v2422, %v2421
      %v2433 = vpack.c.b16 %v2424, %v2423
      %v2434 = vpack.c.b16 %v2426, %v2425
      %2443 = vmatprep.subr.bf16.mxu0 0
      %2444 = vmatpush1.bf16.msra.mxu0 %v2427
      %2445 = vmatprep.subr.bf16.mxu0 0
      %2446 = vmatpush1.bf16.msra.mxu0 %v2428
      %2447 = vmatprep.subr.bf16.mxu0 0
      %2448 = vmatpush1.bf16.msra.mxu0 %v2429
      %2449 = vmatprep.subr.bf16.mxu0 0
      %2450 = vmatpush1.bf16.msra.mxu0 %v2430
      %2451 = vmatprep.subr.bf16.mxu0 0
      %2452 = vmatpush1.bf16.msra.mxu0 %v2431
      %2453 = vmatprep.subr.bf16.mxu0 0
      %2454 = vmatpush1.bf16.msra.mxu0 %v2432
      %2455 = vmatprep.subr.bf16.mxu0 0
      %2456 = vmatpush1.bf16.msra.mxu0 %v2433
      %2457 = vmatprep.subr.bf16.mxu0 0
      %2458 = vmatpush1.bf16.msra.mxu0 %v2434
      %2459 = vmatprep.subr.bf16.mxu0 0
      %2460 = vmatpush1.bf16.msra.mxu0 0
      %2461 = vmatprep.subr.bf16.mxu0 0
      %2462 = vmatpush1.bf16.msra.mxu0 0
      %2463 = vmatprep.subr.bf16.mxu0 0
      %2464 = vmatpush1.bf16.msra.mxu0 0
      %2465 = vmatprep.subr.bf16.mxu0 0
      %2466 = vmatpush1.bf16.msra.mxu0 0
      %2467 = vmatprep.subr.bf16.mxu0 0
      %2468 = vmatpush1.bf16.msra.mxu0 0
      %2469 = vmatprep.subr.bf16.mxu0 0
      %2470 = vmatpush1.bf16.msra.mxu0 0
      %2471 = vmatprep.subr.bf16.mxu0 0
      %2472 = vmatpush1.bf16.msra.mxu0 0
      %2473 = vmatprep.subr.bf16.mxu0 0
      %2474 = vmatpush1.bf16.msra.mxu0 0
      %2475 = vmatprep.mubr.bf16.mxu0 0
      %2476 = vmatmul.mubr.bf16.gmra.mrb[0].mxu0 %v2371
      %v2477 = vpop.f32.mrb[0].mxu0
      %v2478 = vadd.f32 %v2393, %v2477
      %v2479 = vpop.f32.mrb[0].mxu0
      %v2480 = vpop.f32.mrb[0].mxu0
      %v2481 = vpop.f32.mrb[0].mxu0
      %2482 = vdwg.mxu0
      %s2483 = scalar_lea.vmem %s318, 4
      %2484 = vst [vmem:[%s2483] sm:$0xf] %v2478
      %v2485 = vld [vmem:[%s488] sm:$0xf]
      %v2486 = vld [vmem:[%s488 + $0x1] sm:$0xf]
      %v2487 = vld [vmem:[%s488 + $0x2] sm:$0xf]
      %v2488 = vld [vmem:[%s568] sm:$0xf]
      %v2489 = vld [vmem:[%s568 + $0x1] sm:$0xf]
      %v2490 = vld [vmem:[%s568 + $0x2] sm:$0xf]
      %v2491 = vld [vmem:[%s648] sm:$0xf]
      %v2492 = vld [vmem:[%s648 + $0x1] sm:$0xf]
      %v2493 = vld [vmem:[%s648 + $0x2] sm:$0xf]
      %v2494 = vpack.c.bf16 %v2485, %v2485
      %v2495 = vpack.c.bf16 %v2486, %v2486
      %v2496 = vpack.c.bf16 %v2487, %v2487
      %v2497 = vpack.c.bf16 %v2488, %v2488
      %v2498 = vpack.c.bf16 %v2489, %v2489
      %v2499 = vpack.c.bf16 %v2490, %v2490
      %v2500 = vpack.c.bf16 %v2491, %v2491
      %v2501 = vpack.c.bf16 %v2492, %v2492
      %v2502 = vpack.c.bf16 %v2493, %v2493
      %v2503 = vld [vmem:[%s3] sm:$0xf]
      %v2504 = vld [vmem:[%s3 + $0x4] sm:$0xf]
      %v2505 = vld [vmem:[%s3 + $0x8] sm:$0xf]
      %v2506 = vld [vmem:[%s3 + $0xc] sm:$0xf]
      %v2507 = vld [vmem:[%s3 + $0x10] sm:$0xf]
      %v2508 = vld [vmem:[%s3 + $0x14] sm:$0xf]
      %v2509 = vld [vmem:[%s3 + $0x18] sm:$0xf]
      %v2510 = vld [vmem:[%s3 + $0x1c] sm:$0xf]
      %v2511 = vld [vmem:[%s3 + $0x20] sm:$0xf]
      %v2512 = vld [vmem:[%s3 + $0x24] sm:$0xf]
      %v2513 = vld [vmem:[%s3 + $0x28] sm:$0xf]
      %v2514 = vld [vmem:[%s3 + $0x2c] sm:$0xf]
      %v2515 = vld [vmem:[%s3 + $0x30] sm:$0xf]
      %v2516 = vld [vmem:[%s3 + $0x34] sm:$0xf]
      %v2517 = vld [vmem:[%s3 + $0x38] sm:$0xf]
      %v2518 = vld [vmem:[%s3 + $0x3c] sm:$0xf]
      %v2519 = vld [vmem:[%s3 + $0x40] sm:$0xf]
      %v2520 = vld [vmem:[%s3 + $0x44] sm:$0xf]
      %v2521 = vld [vmem:[%s3 + $0x48] sm:$0xf]
      %v2522 = vld [vmem:[%s3 + $0x4c] sm:$0xf]
      %v2523 = vld [vmem:[%s3 + $0x50] sm:$0xf]
      %v2524 = vld [vmem:[%s3 + $0x54] sm:$0xf]
      %v2525 = vld [vmem:[%s3 + $0x58] sm:$0xf]
      %v2526 = vld [vmem:[%s3 + $0x5c] sm:$0xf]
      %v2527 = vld [vmem:[%s3 + $0x60] sm:$0xf]
      %v2528 = vld [vmem:[%s3 + $0x64] sm:$0xf]
      %v2529 = vld [vmem:[%s3 + $0x68] sm:$0xf]
      %v2530 = vld [vmem:[%s3 + $0x6c] sm:$0xf]
      %v2531 = vld [vmem:[%s3 + $0x70] sm:$0xf]
      %v2532 = vld [vmem:[%s3 + $0x74] sm:$0xf]
      %v2533 = vld [vmem:[%s3 + $0x78] sm:$0xf]
      %v2534 = vld [vmem:[%s3 + $0x7c] sm:$0xf]
      %v2535 = vld [vmem:[%s3 + $0x80] sm:$0xf]
      %v2536 = vld [vmem:[%s3 + $0x84] sm:$0xf]
      %v2537 = vld [vmem:[%s3 + $0x88] sm:$0xf]
      %v2538 = vld [vmem:[%s3 + $0x8c] sm:$0xf]
      %v2539 = vld [vmem:[%s3 + $0x90] sm:$0xf]
      %v2540 = vld [vmem:[%s3 + $0x94] sm:$0xf]
      %v2541 = vld [vmem:[%s3 + $0x98] sm:$0xf]
      %v2542 = vld [vmem:[%s3 + $0x9c] sm:$0xf]
      %v2543 = vld [vmem:[%s3 + $0xa0] sm:$0xf]
      %v2544 = vld [vmem:[%s3 + $0xa4] sm:$0xf]
      %v2545 = vld [vmem:[%s3 + $0xa8] sm:$0xf]
      %v2546 = vld [vmem:[%s3 + $0xac] sm:$0xf]
      %v2547 = vld [vmem:[%s3 + $0xb0] sm:$0xf]
      %v2548 = vld [vmem:[%s3 + $0xb4] sm:$0xf]
      %v2549 = vld [vmem:[%s3 + $0xb8] sm:$0xf]
      %v2550 = vld [vmem:[%s3 + $0xbc] sm:$0xf]
      %v2551 = vld [vmem:[%s3 + $0xc0] sm:$0xf]
      %v2552 = vld [vmem:[%s3 + $0xc4] sm:$0xf]
      %v2553 = vld [vmem:[%s3 + $0xc8] sm:$0xf]
      %v2554 = vld [vmem:[%s3 + $0xcc] sm:$0xf]
      %v2555 = vld [vmem:[%s3 + $0xd0] sm:$0xf]
      %v2556 = vld [vmem:[%s3 + $0xd4] sm:$0xf]
      %v2557 = vld [vmem:[%s3 + $0xd8] sm:$0xf]
      %v2558 = vld [vmem:[%s3 + $0xdc] sm:$0xf]
      %v2559 = vld [vmem:[%s3 + $0xe0] sm:$0xf]
      %v2560 = vld [vmem:[%s3 + $0xe4] sm:$0xf]
      %v2561 = vld [vmem:[%s3 + $0xe8] sm:$0xf]
      %v2562 = vld [vmem:[%s3 + $0xec] sm:$0xf]
      %v2563 = vld [vmem:[%s3 + $0xf0] sm:$0xf]
      %v2564 = vld [vmem:[%s3 + $0xf4] sm:$0xf]
      %v2565 = vld [vmem:[%s3 + $0xf8] sm:$0xf]
      %v2566 = vld [vmem:[%s3 + $0xfc] sm:$0xf]
      %v2567 = vld [vmem:[%s3 + $0x100] sm:$0xf]
      %v2568 = vld [vmem:[%s3 + $0x104] sm:$0xf]
      %v2569 = vld [vmem:[%s3 + $0x108] sm:$0xf]
      %v2570 = vld [vmem:[%s3 + $0x10c] sm:$0xf]
      %v2571 = vld [vmem:[%s3 + $0x110] sm:$0xf]
      %v2572 = vld [vmem:[%s3 + $0x114] sm:$0xf]
      %v2573 = vld [vmem:[%s3 + $0x118] sm:$0xf]
      %v2574 = vld [vmem:[%s3 + $0x11c] sm:$0xf]
      %v2575 = vld [vmem:[%s3 + $0x120] sm:$0xf]
      %v2576 = vld [vmem:[%s3 + $0x124] sm:$0xf]
      %v2577 = vld [vmem:[%s3 + $0x128] sm:$0xf]
      %v2578 = vld [vmem:[%s3 + $0x12c] sm:$0xf]
      %v2579 = vld [vmem:[%s3 + $0x130] sm:$0xf]
      %v2580 = vld [vmem:[%s3 + $0x134] sm:$0xf]
      %v2581 = vld [vmem:[%s3 + $0x138] sm:$0xf]
      %v2582 = vld [vmem:[%s3 + $0x13c] sm:$0xf]
      %v2583 = vld [vmem:[%s3 + $0x140] sm:$0xf]
      %v2584 = vld [vmem:[%s3 + $0x144] sm:$0xf]
      %v2585 = vld [vmem:[%s3 + $0x148] sm:$0xf]
      %v2586 = vld [vmem:[%s3 + $0x14c] sm:$0xf]
      %v2587 = vld [vmem:[%s3 + $0x150] sm:$0xf]
      %v2588 = vld [vmem:[%s3 + $0x154] sm:$0xf]
      %v2589 = vld [vmem:[%s3 + $0x158] sm:$0xf]
      %v2590 = vld [vmem:[%s3 + $0x15c] sm:$0xf]
      %v2591 = vld [vmem:[%s3 + $0x160] sm:$0xf]
      %v2592 = vld [vmem:[%s3 + $0x164] sm:$0xf]
      %v2593 = vld [vmem:[%s3 + $0x168] sm:$0xf]
      %v2594 = vld [vmem:[%s3 + $0x16c] sm:$0xf]
      %v2595 = vld [vmem:[%s3 + $0x170] sm:$0xf]
      %v2596 = vld [vmem:[%s3 + $0x174] sm:$0xf]
      %v2597 = vld [vmem:[%s3 + $0x178] sm:$0xf]
      %v2598 = vld [vmem:[%s3 + $0x17c] sm:$0xf]
      %v2599 = vld [vmem:[%s3 + $0x180] sm:$0xf]
      %v2600 = vld [vmem:[%s3 + $0x184] sm:$0xf]
      %v2601 = vld [vmem:[%s3 + $0x188] sm:$0xf]
      %v2602 = vld [vmem:[%s3 + $0x18c] sm:$0xf]
      %v2603 = vld [vmem:[%s3 + $0x190] sm:$0xf]
      %v2604 = vld [vmem:[%s3 + $0x194] sm:$0xf]
      %v2605 = vld [vmem:[%s3 + $0x198] sm:$0xf]
      %v2606 = vld [vmem:[%s3 + $0x19c] sm:$0xf]
      %v2607 = vld [vmem:[%s3 + $0x1a0] sm:$0xf]
      %v2608 = vld [vmem:[%s3 + $0x1a4] sm:$0xf]
      %v2609 = vld [vmem:[%s3 + $0x1a8] sm:$0xf]
      %v2610 = vld [vmem:[%s3 + $0x1ac] sm:$0xf]
      %v2611 = vld [vmem:[%s3 + $0x1b0] sm:$0xf]
      %v2612 = vld [vmem:[%s3 + $0x1b4] sm:$0xf]
      %v2613 = vld [vmem:[%s3 + $0x1b8] sm:$0xf]
      %v2614 = vld [vmem:[%s3 + $0x1bc] sm:$0xf]
      %v2615 = vld [vmem:[%s3 + $0x1c0] sm:$0xf]
      %v2616 = vld [vmem:[%s3 + $0x1c4] sm:$0xf]
      %v2617 = vld [vmem:[%s3 + $0x1c8] sm:$0xf]
      %v2618 = vld [vmem:[%s3 + $0x1cc] sm:$0xf]
      %v2619 = vld [vmem:[%s3 + $0x1d0] sm:$0xf]
      %v2620 = vld [vmem:[%s3 + $0x1d4] sm:$0xf]
      %v2621 = vld [vmem:[%s3 + $0x1d8] sm:$0xf]
      %v2622 = vld [vmem:[%s3 + $0x1dc] sm:$0xf]
      %v2623 = vld [vmem:[%s3 + $0x1e0] sm:$0xf]
      %v2624 = vld [vmem:[%s3 + $0x1e4] sm:$0xf]
      %v2625 = vld [vmem:[%s3 + $0x1e8] sm:$0xf]
      %v2626 = vld [vmem:[%s3 + $0x1ec] sm:$0xf]
      %v2627 = vld [vmem:[%s3 + $0x1f0] sm:$0xf]
      %v2628 = vld [vmem:[%s3 + $0x1f4] sm:$0xf]
      %v2629 = vld [vmem:[%s3 + $0x1f8] sm:$0xf]
      %v2630 = vld [vmem:[%s3 + $0x1fc] sm:$0xf]
      %v2631 = vld [vmem:[%s3 + $0x200] sm:$0xf]
      %v2632 = vld [vmem:[%s3 + $0x204] sm:$0xf]
      %v2633 = vld [vmem:[%s3 + $0x208] sm:$0xf]
      %v2634 = vld [vmem:[%s3 + $0x20c] sm:$0xf]
      %v2635 = vld [vmem:[%s3 + $0x210] sm:$0xf]
      %v2636 = vld [vmem:[%s3 + $0x214] sm:$0xf]
      %v2637 = vld [vmem:[%s3 + $0x218] sm:$0xf]
      %v2638 = vld [vmem:[%s3 + $0x21c] sm:$0xf]
      %v2639 = vld [vmem:[%s3 + $0x220] sm:$0xf]
      %v2640 = vld [vmem:[%s3 + $0x224] sm:$0xf]
      %v2641 = vld [vmem:[%s3 + $0x228] sm:$0xf]
      %v2642 = vld [vmem:[%s3 + $0x22c] sm:$0xf]
      %v2643 = vld [vmem:[%s3 + $0x230] sm:$0xf]
      %v2644 = vld [vmem:[%s3 + $0x234] sm:$0xf]
      %v2645 = vld [vmem:[%s3 + $0x238] sm:$0xf]
      %v2646 = vld [vmem:[%s3 + $0x23c] sm:$0xf]
      %v2647 = vld [vmem:[%s4] sm:$0x1]
      %v2649 = vlaneseq
      %v2650 = vshrl.u32 %v2649, 7
      %v2651 = vsub.s32 0, %v2650
      %v2652 = vrot.slane %v2647, %v2651
      %v2798 = vunpack.c.l.b16 %v2503
      %v2799 = vunpack.c.l.b16 %v2504
      %v2800 = vunpack.c.l.b16 %v2505
      %v2801 = vunpack.c.l.b16 %v2506
      %v2802 = vunpack.c.l.b16 %v2507
      %v2803 = vunpack.c.l.b16 %v2508
      %v2804 = vunpack.c.l.b16 %v2509
      %v2805 = vunpack.c.l.b16 %v2510
      %v2806 = vunpack.c.l.b16 %v2511
      %v2807 = vunpack.c.l.b16 %v2512
      %v2808 = vunpack.c.l.b16 %v2513
      %v2809 = vunpack.c.l.b16 %v2514
      %v2810 = vunpack.c.l.b16 %v2515
      %v2811 = vunpack.c.l.b16 %v2516
      %v2812 = vunpack.c.l.b16 %v2517
      %v2813 = vunpack.c.l.b16 %v2518
      %v2814 = vunpack.c.l.b16 %v2519
      %v2815 = vunpack.c.l.b16 %v2520
      %v2816 = vunpack.c.l.b16 %v2521
      %v2817 = vunpack.c.l.b16 %v2522
      %v2818 = vunpack.c.l.b16 %v2523
      %v2819 = vunpack.c.l.b16 %v2524
      %v2820 = vunpack.c.l.b16 %v2525
      %v2821 = vunpack.c.l.b16 %v2526
      %v2822 = vunpack.c.l.b16 %v2527
      %v2823 = vunpack.c.l.b16 %v2528
      %v2824 = vunpack.c.l.b16 %v2529
      %v2825 = vunpack.c.l.b16 %v2530
      %v2826 = vunpack.c.l.b16 %v2531
      %v2827 = vunpack.c.l.b16 %v2532
      %v2828 = vunpack.c.l.b16 %v2533
      %v2829 = vunpack.c.l.b16 %v2534
      %v2830 = vunpack.c.l.b16 %v2535
      %v2831 = vunpack.c.l.b16 %v2536
      %v2832 = vunpack.c.l.b16 %v2537
      %v2833 = vunpack.c.l.b16 %v2538
      %v2834 = vunpack.c.l.b16 %v2539
      %v2835 = vunpack.c.l.b16 %v2540
      %v2836 = vunpack.c.l.b16 %v2541
      %v2837 = vunpack.c.l.b16 %v2542
      %v2838 = vunpack.c.l.b16 %v2543
      %v2839 = vunpack.c.l.b16 %v2544
      %v2840 = vunpack.c.l.b16 %v2545
      %v2841 = vunpack.c.l.b16 %v2546
      %v2842 = vunpack.c.l.b16 %v2547
      %v2843 = vunpack.c.l.b16 %v2548
      %v2844 = vunpack.c.l.b16 %v2549
      %v2845 = vunpack.c.l.b16 %v2550
      %v2846 = vunpack.c.l.b16 %v2551
      %v2847 = vunpack.c.l.b16 %v2552
      %v2848 = vunpack.c.l.b16 %v2553
      %v2849 = vunpack.c.l.b16 %v2554
      %v2850 = vunpack.c.l.b16 %v2555
      %v2851 = vunpack.c.l.b16 %v2556
      %v2852 = vunpack.c.l.b16 %v2557
      %v2853 = vunpack.c.l.b16 %v2558
      %v2854 = vunpack.c.l.b16 %v2559
      %v2855 = vunpack.c.l.b16 %v2560
      %v2856 = vunpack.c.l.b16 %v2561
      %v2857 = vunpack.c.l.b16 %v2562
      %v2858 = vunpack.c.l.b16 %v2563
      %v2859 = vunpack.c.l.b16 %v2564
      %v2860 = vunpack.c.l.b16 %v2565
      %v2861 = vunpack.c.l.b16 %v2566
      %v2862 = vunpack.c.l.b16 %v2567
      %v2863 = vunpack.c.l.b16 %v2568
      %v2864 = vunpack.c.l.b16 %v2569
      %v2865 = vunpack.c.l.b16 %v2570
      %v2866 = vunpack.c.l.b16 %v2571
      %v2867 = vunpack.c.l.b16 %v2572
      %v2868 = vunpack.c.l.b16 %v2573
      %v2869 = vunpack.c.l.b16 %v2574
      %v2870 = vunpack.c.l.b16 %v2575
      %v2871 = vunpack.c.l.b16 %v2576
      %v2872 = vunpack.c.l.b16 %v2577
      %v2873 = vunpack.c.l.b16 %v2578
      %v2874 = vunpack.c.l.b16 %v2579
      %v2875 = vunpack.c.l.b16 %v2580
      %v2876 = vunpack.c.l.b16 %v2581
      %v2877 = vunpack.c.l.b16 %v2582
      %v2878 = vunpack.c.l.b16 %v2583
      %v2879 = vunpack.c.l.b16 %v2584
      %v2880 = vunpack.c.l.b16 %v2585
      %v2881 = vunpack.c.l.b16 %v2586
      %v2882 = vunpack.c.l.b16 %v2587
      %v2883 = vunpack.c.l.b16 %v2588
      %v2884 = vunpack.c.l.b16 %v2589
      %v2885 = vunpack.c.l.b16 %v2590
      %v2886 = vunpack.c.l.b16 %v2591
      %v2887 = vunpack.c.l.b16 %v2592
      %v2888 = vunpack.c.l.b16 %v2593
      %v2889 = vunpack.c.l.b16 %v2594
      %v2890 = vunpack.c.l.b16 %v2595
      %v2891 = vunpack.c.l.b16 %v2596
      %v2892 = vunpack.c.l.b16 %v2597
      %v2893 = vunpack.c.l.b16 %v2598
      %v2894 = vunpack.c.l.b16 %v2599
      %v2895 = vunpack.c.l.b16 %v2600
      %v2896 = vunpack.c.l.b16 %v2601
      %v2897 = vunpack.c.l.b16 %v2602
      %v2898 = vunpack.c.l.b16 %v2603
      %v2899 = vunpack.c.l.b16 %v2604
      %v2900 = vunpack.c.l.b16 %v2605
      %v2901 = vunpack.c.l.b16 %v2606
      %v2902 = vunpack.c.l.b16 %v2607
      %v2903 = vunpack.c.l.b16 %v2608
      %v2904 = vunpack.c.l.b16 %v2609
      %v2905 = vunpack.c.l.b16 %v2610
      %v2906 = vunpack.c.l.b16 %v2611
      %v2907 = vunpack.c.l.b16 %v2612
      %v2908 = vunpack.c.l.b16 %v2613
      %v2909 = vunpack.c.l.b16 %v2614
      %v2910 = vunpack.c.l.b16 %v2615
      %v2911 = vunpack.c.l.b16 %v2616
      %v2912 = vunpack.c.l.b16 %v2617
      %v2913 = vunpack.c.l.b16 %v2618
      %v2914 = vunpack.c.l.b16 %v2619
      %v2915 = vunpack.c.l.b16 %v2620
      %v2916 = vunpack.c.l.b16 %v2621
      %v2917 = vunpack.c.l.b16 %v2622
      %v2918 = vunpack.c.l.b16 %v2623
      %v2919 = vunpack.c.l.b16 %v2624
      %v2920 = vunpack.c.l.b16 %v2625
      %v2921 = vunpack.c.l.b16 %v2626
      %v2922 = vunpack.c.l.b16 %v2627
      %v2923 = vunpack.c.l.b16 %v2628
      %v2924 = vunpack.c.l.b16 %v2629
      %v2925 = vunpack.c.l.b16 %v2630
      %v2926 = vunpack.c.l.b16 %v2631
      %v2927 = vunpack.c.l.b16 %v2632
      %v2928 = vunpack.c.l.b16 %v2633
      %v2929 = vunpack.c.l.b16 %v2634
      %v2930 = vunpack.c.l.b16 %v2635
      %v2931 = vunpack.c.l.b16 %v2636
      %v2932 = vunpack.c.l.b16 %v2637
      %v2933 = vunpack.c.l.b16 %v2638
      %v2934 = vunpack.c.l.b16 %v2639
      %v2935 = vunpack.c.l.b16 %v2640
      %v2936 = vunpack.c.l.b16 %v2641
      %v2937 = vunpack.c.l.b16 %v2642
      %v2938 = vunpack.c.l.b16 %v2643
      %v2939 = vunpack.c.l.b16 %v2644
      %v2940 = vunpack.c.l.b16 %v2645
      %v2941 = vunpack.c.l.b16 %v2646
      %v2942 = vpack.c.b16 %v2799, %v2798
      %v2943 = vpack.c.b16 %v2801, %v2800
      %v2944 = vpack.c.b16 %v2803, %v2802
      %v2945 = vpack.c.b16 %v2805, %v2804
      %v2946 = vpack.c.b16 %v2807, %v2806
      %v2947 = vpack.c.b16 %v2809, %v2808
      %v2948 = vpack.c.b16 %v2811, %v2810
      %v2949 = vpack.c.b16 %v2813, %v2812
      %v2950 = vpack.c.b16 %v2815, %v2814
      %v2951 = vpack.c.b16 %v2817, %v2816
      %v2952 = vpack.c.b16 %v2819, %v2818
      %v2953 = vpack.c.b16 %v2821, %v2820
      %v2954 = vpack.c.b16 %v2823, %v2822
      %v2955 = vpack.c.b16 %v2825, %v2824
      %v2956 = vpack.c.b16 %v2827, %v2826
      %v2957 = vpack.c.b16 %v2829, %v2828
      %v2958 = vpack.c.b16 %v2831, %v2830
      %v2959 = vpack.c.b16 %v2833, %v2832
      %v2960 = vpack.c.b16 %v2835, %v2834
      %v2961 = vpack.c.b16 %v2837, %v2836
      %v2962 = vpack.c.b16 %v2839, %v2838
      %v2963 = vpack.c.b16 %v2841, %v2840
      %v2964 = vpack.c.b16 %v2843, %v2842
      %v2965 = vpack.c.b16 %v2845, %v2844
      %v2966 = vpack.c.b16 %v2847, %v2846
      %v2967 = vpack.c.b16 %v2849, %v2848
      %v2968 = vpack.c.b16 %v2851, %v2850
      %v2969 = vpack.c.b16 %v2853, %v2852
      %v2970 = vpack.c.b16 %v2855, %v2854
      %v2971 = vpack.c.b16 %v2857, %v2856
      %v2972 = vpack.c.b16 %v2859, %v2858
      %v2973 = vpack.c.b16 %v2861, %v2860
      %v2974 = vpack.c.b16 %v2863, %v2862
      %v2975 = vpack.c.b16 %v2865, %v2864
      %v2976 = vpack.c.b16 %v2867, %v2866
      %v2977 = vpack.c.b16 %v2869, %v2868
      %v2978 = vpack.c.b16 %v2871, %v2870
      %v2979 = vpack.c.b16 %v2873, %v2872
      %v2980 = vpack.c.b16 %v2875, %v2874
      %v2981 = vpack.c.b16 %v2877, %v2876
      %v2982 = vpack.c.b16 %v2879, %v2878
      %v2983 = vpack.c.b16 %v2881, %v2880
      %v2984 = vpack.c.b16 %v2883, %v2882
      %v2985 = vpack.c.b16 %v2885, %v2884
      %v2986 = vpack.c.b16 %v2887, %v2886
      %v2987 = vpack.c.b16 %v2889, %v2888
      %v2988 = vpack.c.b16 %v2891, %v2890
      %v2989 = vpack.c.b16 %v2893, %v2892
      %v2990 = vpack.c.b16 %v2895, %v2894
      %v2991 = vpack.c.b16 %v2897, %v2896
      %v2992 = vpack.c.b16 %v2899, %v2898
      %v2993 = vpack.c.b16 %v2901, %v2900
      %v2994 = vpack.c.b16 %v2903, %v2902
      %v2995 = vpack.c.b16 %v2905, %v2904
      %v2996 = vpack.c.b16 %v2907, %v2906
      %v2997 = vpack.c.b16 %v2909, %v2908
      %v2998 = vpack.c.b16 %v2911, %v2910
      %v2999 = vpack.c.b16 %v2913, %v2912
      %v3000 = vpack.c.b16 %v2915, %v2914
      %v3001 = vpack.c.b16 %v2917, %v2916
      %v3002 = vpack.c.b16 %v2919, %v2918
      %v3003 = vpack.c.b16 %v2921, %v2920
      %v3004 = vpack.c.b16 %v2923, %v2922
      %v3005 = vpack.c.b16 %v2925, %v2924
      %v3006 = vpack.c.b16 %v2927, %v2926
      %v3007 = vpack.c.b16 %v2929, %v2928
      %v3008 = vpack.c.b16 %v2931, %v2930
      %v3009 = vpack.c.b16 %v2933, %v2932
      %v3010 = vpack.c.b16 %v2935, %v2934
      %v3011 = vpack.c.b16 %v2937, %v2936
      %v3012 = vpack.c.b16 %v2939, %v2938
      %v3013 = vpack.c.b16 %v2941, %v2940
      %3086 = vmatprep.subr.bf16.mxu0 0
      %3087 = vmatpush1.bf16.msra.mxu0 %v2942
      %3088 = vmatprep.subr.bf16.mxu0 0
      %3089 = vmatpush1.bf16.msra.mxu0 %v2943
      %3090 = vmatprep.subr.bf16.mxu0 0
      %3091 = vmatpush1.bf16.msra.mxu0 %v2944
      %3092 = vmatprep.subr.bf16.mxu0 0
      %3093 = vmatpush1.bf16.msra.mxu0 %v2945
      %3094 = vmatprep.subr.bf16.mxu0 0
      %3095 = vmatpush1.bf16.msra.mxu0 %v2946
      %3096 = vmatprep.subr.bf16.mxu0 0
      %3097 = vmatpush1.bf16.msra.mxu0 %v2947
      %3098 = vmatprep.subr.bf16.mxu0 0
      %3099 = vmatpush1.bf16.msra.mxu0 %v2948
      %3100 = vmatprep.subr.bf16.mxu0 0
      %3101 = vmatpush1.bf16.msra.mxu0 %v2949
      %3102 = vmatprep.subr.bf16.mxu0 0
      %3103 = vmatpush1.bf16.msra.mxu0 %v2950
      %3104 = vmatprep.subr.bf16.mxu0 0
      %3105 = vmatpush1.bf16.msra.mxu0 %v2951
      %3106 = vmatprep.subr.bf16.mxu0 0
      %3107 = vmatpush1.bf16.msra.mxu0 %v2952
      %3108 = vmatprep.subr.bf16.mxu0 0
      %3109 = vmatpush1.bf16.msra.mxu0 %v2953
      %3110 = vmatprep.subr.bf16.mxu0 0
      %3111 = vmatpush1.bf16.msra.mxu0 %v2954
      %3112 = vmatprep.subr.bf16.mxu0 0
      %3113 = vmatpush1.bf16.msra.mxu0 %v2955
      %3114 = vmatprep.subr.bf16.mxu0 0
      %3115 = vmatpush1.bf16.msra.mxu0 %v2956
      %3116 = vmatprep.subr.bf16.mxu0 0
      %3117 = vmatpush1.bf16.msra.mxu0 %v2957
      %3118 = vmatprep.mubr.bf16.mxu0 %v2495
      %3119 = vmatmul.mubr.bf16.gmra.mrb[0].mxu0 %v2494
      %v3120 = vpop.f32.mrb[0].mxu0
      %v3121 = vadd.f32 %v2652, %v3120
      %v3122 = vpop.f32.mrb[0].mxu0
      %v3123 = vpop.f32.mrb[0].mxu0
      %v3124 = vpop.f32.mrb[0].mxu0
      %3125 = vdwg.mxu0
      %3126 = vmatprep.subr.bf16.mxu0 0
      %3127 = vmatpush1.bf16.msra.mxu0 %v2958
      %3128 = vmatprep.subr.bf16.mxu0 0
      %3129 = vmatpush1.bf16.msra.mxu0 %v2959
      %3130 = vmatprep.subr.bf16.mxu0 0
      %3131 = vmatpush1.bf16.msra.mxu0 %v2960
      %3132 = vmatprep.subr.bf16.mxu0 0
      %3133 = vmatpush1.bf16.msra.mxu0 %v2961
      %3134 = vmatprep.subr.bf16.mxu0 0
      %3135 = vmatpush1.bf16.msra.mxu0 %v2962
      %3136 = vmatprep.subr.bf16.mxu0 0
      %3137 = vmatpush1.bf16.msra.mxu0 %v2963
      %3138 = vmatprep.subr.bf16.mxu0 0
      %3139 = vmatpush1.bf16.msra.mxu0 %v2964
      %3140 = vmatprep.subr.bf16.mxu0 0
      %3141 = vmatpush1.bf16.msra.mxu0 %v2965
      %3142 = vmatprep.subr.bf16.mxu0 0
      %3143 = vmatpush1.bf16.msra.mxu0 %v2966
      %3144 = vmatprep.subr.bf16.mxu0 0
      %3145 = vmatpush1.bf16.msra.mxu0 %v2967
      %3146 = vmatprep.subr.bf16.mxu0 0
      %3147 = vmatpush1.bf16.msra.mxu0 %v2968
      %3148 = vmatprep.subr.bf16.mxu0 0
      %3149 = vmatpush1.bf16.msra.mxu0 %v2969
      %3150 = vmatprep.subr.bf16.mxu0 0
      %3151 = vmatpush1.bf16.msra.mxu0 %v2970
      %3152 = vmatprep.subr.bf16.mxu0 0
      %3153 = vmatpush1.bf16.msra.mxu0 %v2971
      %3154 = vmatprep.subr.bf16.mxu0 0
      %3155 = vmatpush1.bf16.msra.mxu0 %v2972
      %3156 = vmatprep.subr.bf16.mxu0 0
      %3157 = vmatpush1.bf16.msra.mxu0 %v2973
      %3158 = vmatprep.mubr.bf16.mxu0 %v2497
      %3159 = vmatmul.mubr.bf16.gmra.mrb[0].mxu0 %v2496
      %v3160 = vpop.f32.mrb[0].mxu0
      %v3161 = vadd.f32 %v3121, %v3160
      %v3162 = vpop.f32.mrb[0].mxu0
      %v3163 = vpop.f32.mrb[0].mxu0
      %v3164 = vpop.f32.mrb[0].mxu0
      %3165 = vdwg.mxu0
      %3166 = vmatprep.subr.bf16.mxu0 0
      %3167 = vmatpush1.bf16.msra.mxu0 %v2974
      %3168 = vmatprep.subr.bf16.mxu0 0
      %3169 = vmatpush1.bf16.msra.mxu0 %v2975
      %3170 = vmatprep.subr.bf16.mxu0 0
      %3171 = vmatpush1.bf16.msra.mxu0 %v2976
      %3172 = vmatprep.subr.bf16.mxu0 0
      %3173 = vmatpush1.bf16.msra.mxu0 %v2977
      %3174 = vmatprep.subr.bf16.mxu0 0
      %3175 = vmatpush1.bf16.msra.mxu0 %v2978
      %3176 = vmatprep.subr.bf16.mxu0 0
      %3177 = vmatpush1.bf16.msra.mxu0 %v2979
      %3178 = vmatprep.subr.bf16.mxu0 0
      %3179 = vmatpush1.bf16.msra.mxu0 %v2980
      %3180 = vmatprep.subr.bf16.mxu0 0
      %3181 = vmatpush1.bf16.msra.mxu0 %v2981
      %3182 = vmatprep.subr.bf16.mxu0 0
      %3183 = vmatpush1.bf16.msra.mxu0 %v2982
      %3184 = vmatprep.subr.bf16.mxu0 0
      %3185 = vmatpush1.bf16.msra.mxu0 %v2983
      %3186 = vmatprep.subr.bf16.mxu0 0
      %3187 = vmatpush1.bf16.msra.mxu0 %v2984
      %3188 = vmatprep.subr.bf16.mxu0 0
      %3189 = vmatpush1.bf16.msra.mxu0 %v2985
      %3190 = vmatprep.subr.bf16.mxu0 0
      %3191 = vmatpush1.bf16.msra.mxu0 %v2986
      %3192 = vmatprep.subr.bf16.mxu0 0
      %3193 = vmatpush1.bf16.msra.mxu0 %v2987
      %3194 = vmatprep.subr.bf16.mxu0 0
      %3195 = vmatpush1.bf16.msra.mxu0 %v2988
      %3196 = vmatprep.subr.bf16.mxu0 0
      %3197 = vmatpush1.bf16.msra.mxu0 %v2989
      %3198 = vmatprep.mubr.bf16.mxu0 %v2499
      %3199 = vmatmul.mubr.bf16.gmra.mrb[0].mxu0 %v2498
      %v3200 = vpop.f32.mrb[0].mxu0
      %v3201 = vadd.f32 %v3161, %v3200
      %v3202 = vpop.f32.mrb[0].mxu0
      %v3203 = vpop.f32.mrb[0].mxu0
      %v3204 = vpop.f32.mrb[0].mxu0
      %3205 = vdwg.mxu0
      %3206 = vmatprep.subr.bf16.mxu0 0
      %3207 = vmatpush1.bf16.msra.mxu0 %v2990
      %3208 = vmatprep.subr.bf16.mxu0 0
      %3209 = vmatpush1.bf16.msra.mxu0 %v2991
      %3210 = vmatprep.subr.bf16.mxu0 0
      %3211 = vmatpush1.bf16.msra.mxu0 %v2992
      %3212 = vmatprep.subr.bf16.mxu0 0
      %3213 = vmatpush1.bf16.msra.mxu0 %v2993
      %3214 = vmatprep.subr.bf16.mxu0 0
      %3215 = vmatpush1.bf16.msra.mxu0 %v2994
      %3216 = vmatprep.subr.bf16.mxu0 0
      %3217 = vmatpush1.bf16.msra.mxu0 %v2995
      %3218 = vmatprep.subr.bf16.mxu0 0
      %3219 = vmatpush1.bf16.msra.mxu0 %v2996
      %3220 = vmatprep.subr.bf16.mxu0 0
      %3221 = vmatpush1.bf16.msra.mxu0 %v2997
      %3222 = vmatprep.subr.bf16.mxu0 0
      %3223 = vmatpush1.bf16.msra.mxu0 %v2998
      %3224 = vmatprep.subr.bf16.mxu0 0
      %3225 = vmatpush1.bf16.msra.mxu0 %v2999
      %3226 = vmatprep.subr.bf16.mxu0 0
      %3227 = vmatpush1.bf16.msra.mxu0 %v3000
      %3228 = vmatprep.subr.bf16.mxu0 0
      %3229 = vmatpush1.bf16.msra.mxu0 %v3001
      %3230 = vmatprep.subr.bf16.mxu0 0
      %3231 = vmatpush1.bf16.msra.mxu0 %v3002
      %3232 = vmatprep.subr.bf16.mxu0 0
      %3233 = vmatpush1.bf16.msra.mxu0 %v3003
      %3234 = vmatprep.subr.bf16.mxu0 0
      %3235 = vmatpush1.bf16.msra.mxu0 %v3004
      %3236 = vmatprep.subr.bf16.mxu0 0
      %3237 = vmatpush1.bf16.msra.mxu0 %v3005
      %3238 = vmatprep.mubr.bf16.mxu0 %v2501
      %3239 = vmatmul.mubr.bf16.gmra.mrb[0].mxu0 %v2500
      %v3240 = vpop.f32.mrb[0].mxu0
      %v3241 = vadd.f32 %v3201, %v3240
      %v3242 = vpop.f32.mrb[0].mxu0
      %v3243 = vpop.f32.mrb[0].mxu0
      %v3244 = vpop.f32.mrb[0].mxu0
      %3245 = vdwg.mxu0
      %3246 = vmatprep.subr.bf16.mxu0 0
      %3247 = vmatpush1.bf16.msra.mxu0 %v3006
      %3248 = vmatprep.subr.bf16.mxu0 0
      %3249 = vmatpush1.bf16.msra.mxu0 %v3007
      %3250 = vmatprep.subr.bf16.mxu0 0
      %3251 = vmatpush1.bf16.msra.mxu0 %v3008
      %3252 = vmatprep.subr.bf16.mxu0 0
      %3253 = vmatpush1.bf16.msra.mxu0 %v3009
      %3254 = vmatprep.subr.bf16.mxu0 0
      %3255 = vmatpush1.bf16.msra.mxu0 %v3010
      %3256 = vmatprep.subr.bf16.mxu0 0
      %3257 = vmatpush1.bf16.msra.mxu0 %v3011
      %3258 = vmatprep.subr.bf16.mxu0 0
      %3259 = vmatpush1.bf16.msra.mxu0 %v3012
      %3260 = vmatprep.subr.bf16.mxu0 0
      %3261 = vmatpush1.bf16.msra.mxu0 %v3013
      %3262 = vmatprep.subr.bf16.mxu0 0
      %3263 = vmatpush1.bf16.msra.mxu0 0
      %3264 = vmatprep.subr.bf16.mxu0 0
      %3265 = vmatpush1.bf16.msra.mxu0 0
      %3266 = vmatprep.subr.bf16.mxu0 0
      %3267 = vmatpush1.bf16.msra.mxu0 0
      %3268 = vmatprep.subr.bf16.mxu0 0
      %3269 = vmatpush1.bf16.msra.mxu0 0
      %3270 = vmatprep.subr.bf16.mxu0 0
      %3271 = vmatpush1.bf16.msra.mxu0 0
      %3272 = vmatprep.subr.bf16.mxu0 0
      %3273 = vmatpush1.bf16.msra.mxu0 0
      %3274 = vmatprep.subr.bf16.mxu0 0
      %3275 = vmatpush1.bf16.msra.mxu0 0
      %3276 = vmatprep.subr.bf16.mxu0 0
      %3277 = vmatpush1.bf16.msra.mxu0 0
      %3278 = vmatprep.mubr.bf16.mxu0 0
      %3279 = vmatmul.mubr.bf16.gmra.mrb[0].mxu0 %v2502
      %v3280 = vpop.f32.mrb[0].mxu0
      %v3281 = vadd.f32 %v3241, %v3280
      %v3282 = vpop.f32.mrb[0].mxu0
      %v3283 = vpop.f32.mrb[0].mxu0
      %v3284 = vpop.f32.mrb[0].mxu0
      %3285 = vdwg.mxu0
      %vm3286 = vcmp.gt.f32.partialorder %v3281, 0.0
      %v3287 = vmul.f32 %v3281, 0.01
      %v3288 = vsel %vm3286, %v3281, %v3287
      %v3289 = vpack.c.bf16 %v3288, %v3288
      %v3290 = vld [vmem:[%s5] sm:$0xf]
      %v3291 = vld [vmem:[%s5 + $0x4] sm:$0xf]
      %v3292 = vld [vmem:[%s5 + $0x8] sm:$0xf]
      %v3293 = vld [vmem:[%s5 + $0xc] sm:$0xf]
      %v3294 = vld [vmem:[%s5 + $0x10] sm:$0xf]
      %v3295 = vld [vmem:[%s5 + $0x14] sm:$0xf]
      %v3296 = vld [vmem:[%s5 + $0x18] sm:$0xf]
      %v3297 = vld [vmem:[%s5 + $0x1c] sm:$0xf]
      %v3298 = vld [vmem:[%s5 + $0x20] sm:$0xf]
      %v3299 = vld [vmem:[%s5 + $0x24] sm:$0xf]
      %v3300 = vld [vmem:[%s5 + $0x28] sm:$0xf]
      %v3301 = vld [vmem:[%s5 + $0x2c] sm:$0xf]
      %v3302 = vld [vmem:[%s5 + $0x30] sm:$0xf]
      %v3303 = vld [vmem:[%s5 + $0x34] sm:$0xf]
      %v3304 = vld [vmem:[%s5 + $0x38] sm:$0xf]
      %v3305 = vld [vmem:[%s5 + $0x3c] sm:$0xf]
      %v3306 = vld [vmem:[%s6] sm:$0x1]
      %v3308 = vlaneseq
      %v3309 = vshrl.u32 %v3308, 7
      %v3310 = vsub.s32 0, %v3309
      %v3311 = vrot.slane %v3306, %v3310
      %v3329 = vunpack.c.l.b16 %v3290
      %v3330 = vunpack.c.l.b16 %v3291
      %v3331 = vunpack.c.l.b16 %v3292
      %v3332 = vunpack.c.l.b16 %v3293
      %v3333 = vunpack.c.l.b16 %v3294
      %v3334 = vunpack.c.l.b16 %v3295
      %v3335 = vunpack.c.l.b16 %v3296
      %v3336 = vunpack.c.l.b16 %v3297
      %v3337 = vunpack.c.l.b16 %v3298
      %v3338 = vunpack.c.l.b16 %v3299
      %v3339 = vunpack.c.l.b16 %v3300
      %v3340 = vunpack.c.l.b16 %v3301
      %v3341 = vunpack.c.l.b16 %v3302
      %v3342 = vunpack.c.l.b16 %v3303
      %v3343 = vunpack.c.l.b16 %v3304
      %v3344 = vunpack.c.l.b16 %v3305
      %v3345 = vpack.c.b16 %v3330, %v3329
      %v3346 = vpack.c.b16 %v3332, %v3331
      %v3347 = vpack.c.b16 %v3334, %v3333
      %v3348 = vpack.c.b16 %v3336, %v3335
      %v3349 = vpack.c.b16 %v3338, %v3337
      %v3350 = vpack.c.b16 %v3340, %v3339
      %v3351 = vpack.c.b16 %v3342, %v3341
      %v3352 = vpack.c.b16 %v3344, %v3343
      %3361 = vmatprep.subr.bf16.mxu0 0
      %3362 = vmatpush1.bf16.msra.mxu0 %v3345
      %3363 = vmatprep.subr.bf16.mxu0 0
      %3364 = vmatpush1.bf16.msra.mxu0 %v3346
      %3365 = vmatprep.subr.bf16.mxu0 0
      %3366 = vmatpush1.bf16.msra.mxu0 %v3347
      %3367 = vmatprep.subr.bf16.mxu0 0
      %3368 = vmatpush1.bf16.msra.mxu0 %v3348
      %3369 = vmatprep.subr.bf16.mxu0 0
      %3370 = vmatpush1.bf16.msra.mxu0 %v3349
      %3371 = vmatprep.subr.bf16.mxu0 0
      %3372 = vmatpush1.bf16.msra.mxu0 %v3350
      %3373 = vmatprep.subr.bf16.mxu0 0
      %3374 = vmatpush1.bf16.msra.mxu0 %v3351
      %3375 = vmatprep.subr.bf16.mxu0 0
      %3376 = vmatpush1.bf16.msra.mxu0 %v3352
      %3377 = vmatprep.subr.bf16.mxu0 0
      %3378 = vmatpush1.bf16.msra.mxu0 0
      %3379 = vmatprep.subr.bf16.mxu0 0
      %3380 = vmatpush1.bf16.msra.mxu0 0
      %3381 = vmatprep.subr.bf16.mxu0 0
      %3382 = vmatpush1.bf16.msra.mxu0 0
      %3383 = vmatprep.subr.bf16.mxu0 0
      %3384 = vmatpush1.bf16.msra.mxu0 0
      %3385 = vmatprep.subr.bf16.mxu0 0
      %3386 = vmatpush1.bf16.msra.mxu0 0
      %3387 = vmatprep.subr.bf16.mxu0 0
      %3388 = vmatpush1.bf16.msra.mxu0 0
      %3389 = vmatprep.subr.bf16.mxu0 0
      %3390 = vmatpush1.bf16.msra.mxu0 0
      %3391 = vmatprep.subr.bf16.mxu0 0
      %3392 = vmatpush1.bf16.msra.mxu0 0
      %3393 = vmatprep.mubr.bf16.mxu0 0
      %3394 = vmatmul.mubr.bf16.gmra.mrb[0].mxu0 %v3289
      %v3395 = vpop.f32.mrb[0].mxu0
      %v3396 = vadd.f32 %v3311, %v3395
      %v3397 = vpop.f32.mrb[0].mxu0
      %v3398 = vpop.f32.mrb[0].mxu0
      %v3399 = vpop.f32.mrb[0].mxu0
      %3400 = vdwg.mxu0
      %s3401 = scalar_lea.vmem %s318, 8
      %3402 = vst [vmem:[%s3401] sm:$0xf] %v3396
      %v3403 = vld [vmem:[%s568] sm:$0xf]
      %v3404 = vld [vmem:[%s568 + $0x1] sm:$0xf]
      %v3405 = vld [vmem:[%s568 + $0x2] sm:$0xf]
      %v3406 = vld [vmem:[%s648] sm:$0xf]
      %v3407 = vld [vmem:[%s648 + $0x1] sm:$0xf]
      %v3408 = vld [vmem:[%s648 + $0x2] sm:$0xf]
      %v3409 = vld [vmem:[%s327] sm:$0xf]
      %v3410 = vld [vmem:[%s327 + $0x1] sm:$0xf]
      %v3411 = vld [vmem:[%s327 + $0x2] sm:$0xf]
      %v3412 = vpack.c.bf16 %v3403, %v3403
      %v3413 = vpack.c.bf16 %v3404, %v3404
      %v3414 = vpack.c.bf16 %v3405, %v3405
      %v3415 = vpack.c.bf16 %v3406, %v3406
      %v3416 = vpack.c.bf16 %v3407, %v3407
      %v3417 = vpack.c.bf16 %v3408, %v3408
      %v3418 = vpack.c.bf16 %v3409, %v3409
      %v3419 = vpack.c.bf16 %v3410, %v3410
      %v3420 = vpack.c.bf16 %v3411, %v3411
      %v3421 = vld [vmem:[%s3] sm:$0xf]
      %v3422 = vld [vmem:[%s3 + $0x4] sm:$0xf]
      %v3423 = vld [vmem:[%s3 + $0x8] sm:$0xf]
      %v3424 = vld [vmem:[%s3 + $0xc] sm:$0xf]
      %v3425 = vld [vmem:[%s3 + $0x10] sm:$0xf]
      %v3426 = vld [vmem:[%s3 + $0x14] sm:$0xf]
      %v3427 = vld [vmem:[%s3 + $0x18] sm:$0xf]
      %v3428 = vld [vmem:[%s3 + $0x1c] sm:$0xf]
      %v3429 = vld [vmem:[%s3 + $0x20] sm:$0xf]
      %v3430 = vld [vmem:[%s3 + $0x24] sm:$0xf]
      %v3431 = vld [vmem:[%s3 + $0x28] sm:$0xf]
      %v3432 = vld [vmem:[%s3 + $0x2c] sm:$0xf]
      %v3433 = vld [vmem:[%s3 + $0x30] sm:$0xf]
      %v3434 = vld [vmem:[%s3 + $0x34] sm:$0xf]
      %v3435 = vld [vmem:[%s3 + $0x38] sm:$0xf]
      %v3436 = vld [vmem:[%s3 + $0x3c] sm:$0xf]
      %v3437 = vld [vmem:[%s3 + $0x40] sm:$0xf]
      %v3438 = vld [vmem:[%s3 + $0x44] sm:$0xf]
      %v3439 = vld [vmem:[%s3 + $0x48] sm:$0xf]
      %v3440 = vld [vmem:[%s3 + $0x4c] sm:$0xf]
      %v3441 = vld [vmem:[%s3 + $0x50] sm:$0xf]
      %v3442 = vld [vmem:[%s3 + $0x54] sm:$0xf]
      %v3443 = vld [vmem:[%s3 + $0x58] sm:$0xf]
      %v3444 = vld [vmem:[%s3 + $0x5c] sm:$0xf]
      %v3445 = vld [vmem:[%s3 + $0x60] sm:$0xf]
      %v3446 = vld [vmem:[%s3 + $0x64] sm:$0xf]
      %v3447 = vld [vmem:[%s3 + $0x68] sm:$0xf]
      %v3448 = vld [vmem:[%s3 + $0x6c] sm:$0xf]
      %v3449 = vld [vmem:[%s3 + $0x70] sm:$0xf]
      %v3450 = vld [vmem:[%s3 + $0x74] sm:$0xf]
      %v3451 = vld [vmem:[%s3 + $0x78] sm:$0xf]
      %v3452 = vld [vmem:[%s3 + $0x7c] sm:$0xf]
      %v3453 = vld [vmem:[%s3 + $0x80] sm:$0xf]
      %v3454 = vld [vmem:[%s3 + $0x84] sm:$0xf]
      %v3455 = vld [vmem:[%s3 + $0x88] sm:$0xf]
      %v3456 = vld [vmem:[%s3 + $0x8c] sm:$0xf]
      %v3457 = vld [vmem:[%s3 + $0x90] sm:$0xf]
      %v3458 = vld [vmem:[%s3 + $0x94] sm:$0xf]
      %v3459 = vld [vmem:[%s3 + $0x98] sm:$0xf]
      %v3460 = vld [vmem:[%s3 + $0x9c] sm:$0xf]
      %v3461 = vld [vmem:[%s3 + $0xa0] sm:$0xf]
      %v3462 = vld [vmem:[%s3 + $0xa4] sm:$0xf]
      %v3463 = vld [vmem:[%s3 + $0xa8] sm:$0xf]
      %v3464 = vld [vmem:[%s3 + $0xac] sm:$0xf]
      %v3465 = vld [vmem:[%s3 + $0xb0] sm:$0xf]
      %v3466 = vld [vmem:[%s3 + $0xb4] sm:$0xf]
      %v3467 = vld [vmem:[%s3 + $0xb8] sm:$0xf]
      %v3468 = vld [vmem:[%s3 + $0xbc] sm:$0xf]
      %v3469 = vld [vmem:[%s3 + $0xc0] sm:$0xf]
      %v3470 = vld [vmem:[%s3 + $0xc4] sm:$0xf]
      %v3471 = vld [vmem:[%s3 + $0xc8] sm:$0xf]
      %v3472 = vld [vmem:[%s3 + $0xcc] sm:$0xf]
      %v3473 = vld [vmem:[%s3 + $0xd0] sm:$0xf]
      %v3474 = vld [vmem:[%s3 + $0xd4] sm:$0xf]
      %v3475 = vld [vmem:[%s3 + $0xd8] sm:$0xf]
      %v3476 = vld [vmem:[%s3 + $0xdc] sm:$0xf]
      %v3477 = vld [vmem:[%s3 + $0xe0] sm:$0xf]
      %v3478 = vld [vmem:[%s3 + $0xe4] sm:$0xf]
      %v3479 = vld [vmem:[%s3 + $0xe8] sm:$0xf]
      %v3480 = vld [vmem:[%s3 + $0xec] sm:$0xf]
      %v3481 = vld [vmem:[%s3 + $0xf0] sm:$0xf]
      %v3482 = vld [vmem:[%s3 + $0xf4] sm:$0xf]
      %v3483 = vld [vmem:[%s3 + $0xf8] sm:$0xf]
      %v3484 = vld [vmem:[%s3 + $0xfc] sm:$0xf]
      %v3485 = vld [vmem:[%s3 + $0x100] sm:$0xf]
      %v3486 = vld [vmem:[%s3 + $0x104] sm:$0xf]
      %v3487 = vld [vmem:[%s3 + $0x108] sm:$0xf]
      %v3488 = vld [vmem:[%s3 + $0x10c] sm:$0xf]
      %v3489 = vld [vmem:[%s3 + $0x110] sm:$0xf]
      %v3490 = vld [vmem:[%s3 + $0x114] sm:$0xf]
      %v3491 = vld [vmem:[%s3 + $0x118] sm:$0xf]
      %v3492 = vld [vmem:[%s3 + $0x11c] sm:$0xf]
      %v3493 = vld [vmem:[%s3 + $0x120] sm:$0xf]
      %v3494 = vld [vmem:[%s3 + $0x124] sm:$0xf]
      %v3495 = vld [vmem:[%s3 + $0x128] sm:$0xf]
      %v3496 = vld [vmem:[%s3 + $0x12c] sm:$0xf]
      %v3497 = vld [vmem:[%s3 + $0x130] sm:$0xf]
      %v3498 = vld [vmem:[%s3 + $0x134] sm:$0xf]
      %v3499 = vld [vmem:[%s3 + $0x138] sm:$0xf]
      %v3500 = vld [vmem:[%s3 + $0x13c] sm:$0xf]
      %v3501 = vld [vmem:[%s3 + $0x140] sm:$0xf]
      %v3502 = vld [vmem:[%s3 + $0x144] sm:$0xf]
      %v3503 = vld [vmem:[%s3 + $0x148] sm:$0xf]
      %v3504 = vld [vmem:[%s3 + $0x14c] sm:$0xf]
      %v3505 = vld [vmem:[%s3 + $0x150] sm:$0xf]
      %v3506 = vld [vmem:[%s3 + $0x154] sm:$0xf]
      %v3507 = vld [vmem:[%s3 + $0x158] sm:$0xf]
      %v3508 = vld [vmem:[%s3 + $0x15c] sm:$0xf]
      %v3509 = vld [vmem:[%s3 + $0x160] sm:$0xf]
      %v3510 = vld [vmem:[%s3 + $0x164] sm:$0xf]
      %v3511 = vld [vmem:[%s3 + $0x168] sm:$0xf]
      %v3512 = vld [vmem:[%s3 + $0x16c] sm:$0xf]
      %v3513 = vld [vmem:[%s3 + $0x170] sm:$0xf]
      %v3514 = vld [vmem:[%s3 + $0x174] sm:$0xf]
      %v3515 = vld [vmem:[%s3 + $0x178] sm:$0xf]
      %v3516 = vld [vmem:[%s3 + $0x17c] sm:$0xf]
      %v3517 = vld [vmem:[%s3 + $0x180] sm:$0xf]
      %v3518 = vld [vmem:[%s3 + $0x184] sm:$0xf]
      %v3519 = vld [vmem:[%s3 + $0x188] sm:$0xf]
      %v3520 = vld [vmem:[%s3 + $0x18c] sm:$0xf]
      %v3521 = vld [vmem:[%s3 + $0x190] sm:$0xf]
      %v3522 = vld [vmem:[%s3 + $0x194] sm:$0xf]
      %v3523 = vld [vmem:[%s3 + $0x198] sm:$0xf]
      %v3524 = vld [vmem:[%s3 + $0x19c] sm:$0xf]
      %v3525 = vld [vmem:[%s3 + $0x1a0] sm:$0xf]
      %v3526 = vld [vmem:[%s3 + $0x1a4] sm:$0xf]
      %v3527 = vld [vmem:[%s3 + $0x1a8] sm:$0xf]
      %v3528 = vld [vmem:[%s3 + $0x1ac] sm:$0xf]
      %v3529 = vld [vmem:[%s3 + $0x1b0] sm:$0xf]
      %v3530 = vld [vmem:[%s3 + $0x1b4] sm:$0xf]
      %v3531 = vld [vmem:[%s3 + $0x1b8] sm:$0xf]
      %v3532 = vld [vmem:[%s3 + $0x1bc] sm:$0xf]
      %v3533 = vld [vmem:[%s3 + $0x1c0] sm:$0xf]
      %v3534 = vld [vmem:[%s3 + $0x1c4] sm:$0xf]
      %v3535 = vld [vmem:[%s3 + $0x1c8] sm:$0xf]
      %v3536 = vld [vmem:[%s3 + $0x1cc] sm:$0xf]
      %v3537 = vld [vmem:[%s3 + $0x1d0] sm:$0xf]
      %v3538 = vld [vmem:[%s3 + $0x1d4] sm:$0xf]
      %v3539 = vld [vmem:[%s3 + $0x1d8] sm:$0xf]
      %v3540 = vld [vmem:[%s3 + $0x1dc] sm:$0xf]
      %v3541 = vld [vmem:[%s3 + $0x1e0] sm:$0xf]
      %v3542 = vld [vmem:[%s3 + $0x1e4] sm:$0xf]
      %v3543 = vld [vmem:[%s3 + $0x1e8] sm:$0xf]
      %v3544 = vld [vmem:[%s3 + $0x1ec] sm:$0xf]
      %v3545 = vld [vmem:[%s3 + $0x1f0] sm:$0xf]
      %v3546 = vld [vmem:[%s3 + $0x1f4] sm:$0xf]
      %v3547 = vld [vmem:[%s3 + $0x1f8] sm:$0xf]
      %v3548 = vld [vmem:[%s3 + $0x1fc] sm:$0xf]
      %v3549 = vld [vmem:[%s3 + $0x200] sm:$0xf]
      %v3550 = vld [vmem:[%s3 + $0x204] sm:$0xf]
      %v3551 = vld [vmem:[%s3 + $0x208] sm:$0xf]
      %v3552 = vld [vmem:[%s3 + $0x20c] sm:$0xf]
      %v3553 = vld [vmem:[%s3 + $0x210] sm:$0xf]
      %v3554 = vld [vmem:[%s3 + $0x214] sm:$0xf]
      %v3555 = vld [vmem:[%s3 + $0x218] sm:$0xf]
      %v3556 = vld [vmem:[%s3 + $0x21c] sm:$0xf]
      %v3557 = vld [vmem:[%s3 + $0x220] sm:$0xf]
      %v3558 = vld [vmem:[%s3 + $0x224] sm:$0xf]
      %v3559 = vld [vmem:[%s3 + $0x228] sm:$0xf]
      %v3560 = vld [vmem:[%s3 + $0x22c] sm:$0xf]
      %v3561 = vld [vmem:[%s3 + $0x230] sm:$0xf]
      %v3562 = vld [vmem:[%s3 + $0x234] sm:$0xf]
      %v3563 = vld [vmem:[%s3 + $0x238] sm:$0xf]
      %v3564 = vld [vmem:[%s3 + $0x23c] sm:$0xf]
      %v3565 = vld [vmem:[%s4] sm:$0x1]
      %v3567 = vlaneseq
      %v3568 = vshrl.u32 %v3567, 7
      %v3569 = vsub.s32 0, %v3568
      %v3570 = vrot.slane %v3565, %v3569
      %v3716 = vunpack.c.l.b16 %v3421
      %v3717 = vunpack.c.l.b16 %v3422
      %v3718 = vunpack.c.l.b16 %v3423
      %v3719 = vunpack.c.l.b16 %v3424
      %v3720 = vunpack.c.l.b16 %v3425
      %v3721 = vunpack.c.l.b16 %v3426
      %v3722 = vunpack.c.l.b16 %v3427
      %v3723 = vunpack.c.l.b16 %v3428
      %v3724 = vunpack.c.l.b16 %v3429
      %v3725 = vunpack.c.l.b16 %v3430
      %v3726 = vunpack.c.l.b16 %v3431
      %v3727 = vunpack.c.l.b16 %v3432
      %v3728 = vunpack.c.l.b16 %v3433
      %v3729 = vunpack.c.l.b16 %v3434
      %v3730 = vunpack.c.l.b16 %v3435
      %v3731 = vunpack.c.l.b16 %v3436
      %v3732 = vunpack.c.l.b16 %v3437
      %v3733 = vunpack.c.l.b16 %v3438
      %v3734 = vunpack.c.l.b16 %v3439
      %v3735 = vunpack.c.l.b16 %v3440
      %v3736 = vunpack.c.l.b16 %v3441
      %v3737 = vunpack.c.l.b16 %v3442
      %v3738 = vunpack.c.l.b16 %v3443
      %v3739 = vunpack.c.l.b16 %v3444
      %v3740 = vunpack.c.l.b16 %v3445
      %v3741 = vunpack.c.l.b16 %v3446
      %v3742 = vunpack.c.l.b16 %v3447
      %v3743 = vunpack.c.l.b16 %v3448
      %v3744 = vunpack.c.l.b16 %v3449
      %v3745 = vunpack.c.l.b16 %v3450
      %v3746 = vunpack.c.l.b16 %v3451
      %v3747 = vunpack.c.l.b16 %v3452
      %v3748 = vunpack.c.l.b16 %v3453
      %v3749 = vunpack.c.l.b16 %v3454
      %v3750 = vunpack.c.l.b16 %v3455
      %v3751 = vunpack.c.l.b16 %v3456
      %v3752 = vunpack.c.l.b16 %v3457
      %v3753 = vunpack.c.l.b16 %v3458
      %v3754 = vunpack.c.l.b16 %v3459
      %v3755 = vunpack.c.l.b16 %v3460
      %v3756 = vunpack.c.l.b16 %v3461
      %v3757 = vunpack.c.l.b16 %v3462
      %v3758 = vunpack.c.l.b16 %v3463
      %v3759 = vunpack.c.l.b16 %v3464
      %v3760 = vunpack.c.l.b16 %v3465
      %v3761 = vunpack.c.l.b16 %v3466
      %v3762 = vunpack.c.l.b16 %v3467
      %v3763 = vunpack.c.l.b16 %v3468
      %v3764 = vunpack.c.l.b16 %v3469
      %v3765 = vunpack.c.l.b16 %v3470
      %v3766 = vunpack.c.l.b16 %v3471
      %v3767 = vunpack.c.l.b16 %v3472
      %v3768 = vunpack.c.l.b16 %v3473
      %v3769 = vunpack.c.l.b16 %v3474
      %v3770 = vunpack.c.l.b16 %v3475
      %v3771 = vunpack.c.l.b16 %v3476
      %v3772 = vunpack.c.l.b16 %v3477
      %v3773 = vunpack.c.l.b16 %v3478
      %v3774 = vunpack.c.l.b16 %v3479
      %v3775 = vunpack.c.l.b16 %v3480
      %v3776 = vunpack.c.l.b16 %v3481
      %v3777 = vunpack.c.l.b16 %v3482
      %v3778 = vunpack.c.l.b16 %v3483
      %v3779 = vunpack.c.l.b16 %v3484
      %v3780 = vunpack.c.l.b16 %v3485
      %v3781 = vunpack.c.l.b16 %v3486
      %v3782 = vunpack.c.l.b16 %v3487
      %v3783 = vunpack.c.l.b16 %v3488
      %v3784 = vunpack.c.l.b16 %v3489
      %v3785 = vunpack.c.l.b16 %v3490
      %v3786 = vunpack.c.l.b16 %v3491
      %v3787 = vunpack.c.l.b16 %v3492
      %v3788 = vunpack.c.l.b16 %v3493
      %v3789 = vunpack.c.l.b16 %v3494
      %v3790 = vunpack.c.l.b16 %v3495
      %v3791 = vunpack.c.l.b16 %v3496
      %v3792 = vunpack.c.l.b16 %v3497
      %v3793 = vunpack.c.l.b16 %v3498
      %v3794 = vunpack.c.l.b16 %v3499
      %v3795 = vunpack.c.l.b16 %v3500
      %v3796 = vunpack.c.l.b16 %v3501
      %v3797 = vunpack.c.l.b16 %v3502
      %v3798 = vunpack.c.l.b16 %v3503
      %v3799 = vunpack.c.l.b16 %v3504
      %v3800 = vunpack.c.l.b16 %v3505
      %v3801 = vunpack.c.l.b16 %v3506
      %v3802 = vunpack.c.l.b16 %v3507
      %v3803 = vunpack.c.l.b16 %v3508
      %v3804 = vunpack.c.l.b16 %v3509
      %v3805 = vunpack.c.l.b16 %v3510
      %v3806 = vunpack.c.l.b16 %v3511
      %v3807 = vunpack.c.l.b16 %v3512
      %v3808 = vunpack.c.l.b16 %v3513
      %v3809 = vunpack.c.l.b16 %v3514
      %v3810 = vunpack.c.l.b16 %v3515
      %v3811 = vunpack.c.l.b16 %v3516
      %v3812 = vunpack.c.l.b16 %v3517
      %v3813 = vunpack.c.l.b16 %v3518
      %v3814 = vunpack.c.l.b16 %v3519
      %v3815 = vunpack.c.l.b16 %v3520
      %v3816 = vunpack.c.l.b16 %v3521
      %v3817 = vunpack.c.l.b16 %v3522
      %v3818 = vunpack.c.l.b16 %v3523
      %v3819 = vunpack.c.l.b16 %v3524
      %v3820 = vunpack.c.l.b16 %v3525
      %v3821 = vunpack.c.l.b16 %v3526
      %v3822 = vunpack.c.l.b16 %v3527
      %v3823 = vunpack.c.l.b16 %v3528
      %v3824 = vunpack.c.l.b16 %v3529
      %v3825 = vunpack.c.l.b16 %v3530
      %v3826 = vunpack.c.l.b16 %v3531
      %v3827 = vunpack.c.l.b16 %v3532
      %v3828 = vunpack.c.l.b16 %v3533
      %v3829 = vunpack.c.l.b16 %v3534
      %v3830 = vunpack.c.l.b16 %v3535
      %v3831 = vunpack.c.l.b16 %v3536
      %v3832 = vunpack.c.l.b16 %v3537
      %v3833 = vunpack.c.l.b16 %v3538
      %v3834 = vunpack.c.l.b16 %v3539
      %v3835 = vunpack.c.l.b16 %v3540
      %v3836 = vunpack.c.l.b16 %v3541
      %v3837 = vunpack.c.l.b16 %v3542
      %v3838 = vunpack.c.l.b16 %v3543
      %v3839 = vunpack.c.l.b16 %v3544
      %v3840 = vunpack.c.l.b16 %v3545
      %v3841 = vunpack.c.l.b16 %v3546
      %v3842 = vunpack.c.l.b16 %v3547
      %v3843 = vunpack.c.l.b16 %v3548
      %v3844 = vunpack.c.l.b16 %v3549
      %v3845 = vunpack.c.l.b16 %v3550
      %v3846 = vunpack.c.l.b16 %v3551
      %v3847 = vunpack.c.l.b16 %v3552
      %v3848 = vunpack.c.l.b16 %v3553
      %v3849 = vunpack.c.l.b16 %v3554
      %v3850 = vunpack.c.l.b16 %v3555
      %v3851 = vunpack.c.l.b16 %v3556
      %v3852 = vunpack.c.l.b16 %v3557
      %v3853 = vunpack.c.l.b16 %v3558
      %v3854 = vunpack.c.l.b16 %v3559
      %v3855 = vunpack.c.l.b16 %v3560
      %v3856 = vunpack.c.l.b16 %v3561
      %v3857 = vunpack.c.l.b16 %v3562
      %v3858 = vunpack.c.l.b16 %v3563
      %v3859 = vunpack.c.l.b16 %v3564
      %v3860 = vpack.c.b16 %v3717, %v3716
      %v3861 = vpack.c.b16 %v3719, %v3718
      %v3862 = vpack.c.b16 %v3721, %v3720
      %v3863 = vpack.c.b16 %v3723, %v3722
      %v3864 = vpack.c.b16 %v3725, %v3724
      %v3865 = vpack.c.b16 %v3727, %v3726
      %v3866 = vpack.c.b16 %v3729, %v3728
      %v3867 = vpack.c.b16 %v3731, %v3730
      %v3868 = vpack.c.b16 %v3733, %v3732
      %v3869 = vpack.c.b16 %v3735, %v3734
      %v3870 = vpack.c.b16 %v3737, %v3736
      %v3871 = vpack.c.b16 %v3739, %v3738
      %v3872 = vpack.c.b16 %v3741, %v3740
      %v3873 = vpack.c.b16 %v3743, %v3742
      %v3874 = vpack.c.b16 %v3745, %v3744
      %v3875 = vpack.c.b16 %v3747, %v3746
      %v3876 = vpack.c.b16 %v3749, %v3748
      %v3877 = vpack.c.b16 %v3751, %v3750
      %v3878 = vpack.c.b16 %v3753, %v3752
      %v3879 = vpack.c.b16 %v3755, %v3754
      %v3880 = vpack.c.b16 %v3757, %v3756
      %v3881 = vpack.c.b16 %v3759, %v3758
      %v3882 = vpack.c.b16 %v3761, %v3760
      %v3883 = vpack.c.b16 %v3763, %v3762
      %v3884 = vpack.c.b16 %v3765, %v3764
      %v3885 = vpack.c.b16 %v3767, %v3766
      %v3886 = vpack.c.b16 %v3769, %v3768
      %v3887 = vpack.c.b16 %v3771, %v3770
      %v3888 = vpack.c.b16 %v3773, %v3772
      %v3889 = vpack.c.b16 %v3775, %v3774
      %v3890 = vpack.c.b16 %v3777, %v3776
      %v3891 = vpack.c.b16 %v3779, %v3778
      %v3892 = vpack.c.b16 %v3781, %v3780
      %v3893 = vpack.c.b16 %v3783, %v3782
      %v3894 = vpack.c.b16 %v3785, %v3784
      %v3895 = vpack.c.b16 %v3787, %v3786
      %v3896 = vpack.c.b16 %v3789, %v3788
      %v3897 = vpack.c.b16 %v3791, %v3790
      %v3898 = vpack.c.b16 %v3793, %v3792
      %v3899 = vpack.c.b16 %v3795, %v3794
      %v3900 = vpack.c.b16 %v3797, %v3796
      %v3901 = vpack.c.b16 %v3799, %v3798
      %v3902 = vpack.c.b16 %v3801, %v3800
      %v3903 = vpack.c.b16 %v3803, %v3802
      %v3904 = vpack.c.b16 %v3805, %v3804
      %v3905 = vpack.c.b16 %v3807, %v3806
      %v3906 = vpack.c.b16 %v3809, %v3808
      %v3907 = vpack.c.b16 %v3811, %v3810
      %v3908 = vpack.c.b16 %v3813, %v3812
      %v3909 = vpack.c.b16 %v3815, %v3814
      %v3910 = vpack.c.b16 %v3817, %v3816
      %v3911 = vpack.c.b16 %v3819, %v3818
      %v3912 = vpack.c.b16 %v3821, %v3820
      %v3913 = vpack.c.b16 %v3823, %v3822
      %v3914 = vpack.c.b16 %v3825, %v3824
      %v3915 = vpack.c.b16 %v3827, %v3826
      %v3916 = vpack.c.b16 %v3829, %v3828
      %v3917 = vpack.c.b16 %v3831, %v3830
      %v3918 = vpack.c.b16 %v3833, %v3832
      %v3919 = vpack.c.b16 %v3835, %v3834
      %v3920 = vpack.c.b16 %v3837, %v3836
      %v3921 = vpack.c.b16 %v3839, %v3838
      %v3922 = vpack.c.b16 %v3841, %v3840
      %v3923 = vpack.c.b16 %v3843, %v3842
      %v3924 = vpack.c.b16 %v3845, %v3844
      %v3925 = vpack.c.b16 %v3847, %v3846
      %v3926 = vpack.c.b16 %v3849, %v3848
      %v3927 = vpack.c.b16 %v3851, %v3850
      %v3928 = vpack.c.b16 %v3853, %v3852
      %v3929 = vpack.c.b16 %v3855, %v3854
      %v3930 = vpack.c.b16 %v3857, %v3856
      %v3931 = vpack.c.b16 %v3859, %v3858
      %4004 = vmatprep.subr.bf16.mxu0 0
      %4005 = vmatpush1.bf16.msra.mxu0 %v3860
      %4006 = vmatprep.subr.bf16.mxu0 0
      %4007 = vmatpush1.bf16.msra.mxu0 %v3861
      %4008 = vmatprep.subr.bf16.mxu0 0
      %4009 = vmatpush1.bf16.msra.mxu0 %v3862
      %4010 = vmatprep.subr.bf16.mxu0 0
      %4011 = vmatpush1.bf16.msra.mxu0 %v3863
      %4012 = vmatprep.subr.bf16.mxu0 0
      %4013 = vmatpush1.bf16.msra.mxu0 %v3864
      %4014 = vmatprep.subr.bf16.mxu0 0
      %4015 = vmatpush1.bf16.msra.mxu0 %v3865
      %4016 = vmatprep.subr.bf16.mxu0 0
      %4017 = vmatpush1.bf16.msra.mxu0 %v3866
      %4018 = vmatprep.subr.bf16.mxu0 0
      %4019 = vmatpush1.bf16.msra.mxu0 %v3867
      %4020 = vmatprep.subr.bf16.mxu0 0
      %4021 = vmatpush1.bf16.msra.mxu0 %v3868
      %4022 = vmatprep.subr.bf16.mxu0 0
      %4023 = vmatpush1.bf16.msra.mxu0 %v3869
      %4024 = vmatprep.subr.bf16.mxu0 0
      %4025 = vmatpush1.bf16.msra.mxu0 %v3870
      %4026 = vmatprep.subr.bf16.mxu0 0
      %4027 = vmatpush1.bf16.msra.mxu0 %v3871
      %4028 = vmatprep.subr.bf16.mxu0 0
      %4029 = vmatpush1.bf16.msra.mxu0 %v3872
      %4030 = vmatprep.subr.bf16.mxu0 0
      %4031 = vmatpush1.bf16.msra.mxu0 %v3873
      %4032 = vmatprep.subr.bf16.mxu0 0
      %4033 = vmatpush1.bf16.msra.mxu0 %v3874
      %4034 = vmatprep.subr.bf16.mxu0 0
      %4035 = vmatpush1.bf16.msra.mxu0 %v3875
      %4036 = vmatprep.mubr.bf16.mxu0 %v3413
      %4037 = vmatmul.mubr.bf16.gmra.mrb[0].mxu0 %v3412
      %v4038 = vpop.f32.mrb[0].mxu0
      %v4039 = vadd.f32 %v3570, %v4038
      %v4040 = vpop.f32.mrb[0].mxu0
      %v4041 = vpop.f32.mrb[0].mxu0
      %v4042 = vpop.f32.mrb[0].mxu0
      %4043 = vdwg.mxu0
      %4044 = vmatprep.subr.bf16.mxu0 0
      %4045 = vmatpush1.bf16.msra.mxu0 %v3876
      %4046 = vmatprep.subr.bf16.mxu0 0
      %4047 = vmatpush1.bf16.msra.mxu0 %v3877
      %4048 = vmatprep.subr.bf16.mxu0 0
      %4049 = vmatpush1.bf16.msra.mxu0 %v3878
      %4050 = vmatprep.subr.bf16.mxu0 0
      %4051 = vmatpush1.bf16.msra.mxu0 %v3879
      %4052 = vmatprep.subr.bf16.mxu0 0
      %4053 = vmatpush1.bf16.msra.mxu0 %v3880
      %4054 = vmatprep.subr.bf16.mxu0 0
      %4055 = vmatpush1.bf16.msra.mxu0 %v3881
      %4056 = vmatprep.subr.bf16.mxu0 0
      %4057 = vmatpush1.bf16.msra.mxu0 %v3882
      %4058 = vmatprep.subr.bf16.mxu0 0
      %4059 = vmatpush1.bf16.msra.mxu0 %v3883
      %4060 = vmatprep.subr.bf16.mxu0 0
      %4061 = vmatpush1.bf16.msra.mxu0 %v3884
      %4062 = vmatprep.subr.bf16.mxu0 0
      %4063 = vmatpush1.bf16.msra.mxu0 %v3885
      %4064 = vmatprep.subr.bf16.mxu0 0
      %4065 = vmatpush1.bf16.msra.mxu0 %v3886
      %4066 = vmatprep.subr.bf16.mxu0 0
      %4067 = vmatpush1.bf16.msra.mxu0 %v3887
      %4068 = vmatprep.subr.bf16.mxu0 0
      %4069 = vmatpush1.bf16.msra.mxu0 %v3888
      %4070 = vmatprep.subr.bf16.mxu0 0
      %4071 = vmatpush1.bf16.msra.mxu0 %v3889
      %4072 = vmatprep.subr.bf16.mxu0 0
      %4073 = vmatpush1.bf16.msra.mxu0 %v3890
      %4074 = vmatprep.subr.bf16.mxu0 0
      %4075 = vmatpush1.bf16.msra.mxu0 %v3891
      %4076 = vmatprep.mubr.bf16.mxu0 %v3415
      %4077 = vmatmul.mubr.bf16.gmra.mrb[0].mxu0 %v3414
      %v4078 = vpop.f32.mrb[0].mxu0
      %v4079 = vadd.f32 %v4039, %v4078
      %v4080 = vpop.f32.mrb[0].mxu0
      %v4081 = vpop.f32.mrb[0].mxu0
      %v4082 = vpop.f32.mrb[0].mxu0
      %4083 = vdwg.mxu0
      %4084 = vmatprep.subr.bf16.mxu0 0
      %4085 = vmatpush1.bf16.msra.mxu0 %v3892
      %4086 = vmatprep.subr.bf16.mxu0 0
      %4087 = vmatpush1.bf16.msra.mxu0 %v3893
      %4088 = vmatprep.subr.bf16.mxu0 0
      %4089 = vmatpush1.bf16.msra.mxu0 %v3894
      %4090 = vmatprep.subr.bf16.mxu0 0
      %4091 = vmatpush1.bf16.msra.mxu0 %v3895
      %4092 = vmatprep.subr.bf16.mxu0 0
      %4093 = vmatpush1.bf16.msra.mxu0 %v3896
      %4094 = vmatprep.subr.bf16.mxu0 0
      %4095 = vmatpush1.bf16.msra.mxu0 %v3897
      %4096 = vmatprep.subr.bf16.mxu0 0
      %4097 = vmatpush1.bf16.msra.mxu0 %v3898
      %4098 = vmatprep.subr.bf16.mxu0 0
      %4099 = vmatpush1.bf16.msra.mxu0 %v3899
      %4100 = vmatprep.subr.bf16.mxu0 0
      %4101 = vmatpush1.bf16.msra.mxu0 %v3900
      %4102 = vmatprep.subr.bf16.mxu0 0
      %4103 = vmatpush1.bf16.msra.mxu0 %v3901
      %4104 = vmatprep.subr.bf16.mxu0 0
      %4105 = vmatpush1.bf16.msra.mxu0 %v3902
      %4106 = vmatprep.subr.bf16.mxu0 0
      %4107 = vmatpush1.bf16.msra.mxu0 %v3903
      %4108 = vmatprep.subr.bf16.mxu0 0
      %4109 = vmatpush1.bf16.msra.mxu0 %v3904
      %4110 = vmatprep.subr.bf16.mxu0 0
      %4111 = vmatpush1.bf16.msra.mxu0 %v3905
      %4112 = vmatprep.subr.bf16.mxu0 0
      %4113 = vmatpush1.bf16.msra.mxu0 %v3906
      %4114 = vmatprep.subr.bf16.mxu0 0
      %4115 = vmatpush1.bf16.msra.mxu0 %v3907
      %4116 = vmatprep.mubr.bf16.mxu0 %v3417
      %4117 = vmatmul.mubr.bf16.gmra.mrb[0].mxu0 %v3416
      %v4118 = vpop.f32.mrb[0].mxu0
      %v4119 = vadd.f32 %v4079, %v4118
      %v4120 = vpop.f32.mrb[0].mxu0
      %v4121 = vpop.f32.mrb[0].mxu0
      %v4122 = vpop.f32.mrb[0].mxu0
      %4123 = vdwg.mxu0
      %4124 = vmatprep.subr.bf16.mxu0 0
      %4125 = vmatpush1.bf16.msra.mxu0 %v3908
      %4126 = vmatprep.subr.bf16.mxu0 0
      %4127 = vmatpush1.bf16.msra.mxu0 %v3909
      %4128 = vmatprep.subr.bf16.mxu0 0
      %4129 = vmatpush1.bf16.msra.mxu0 %v3910
      %4130 = vmatprep.subr.bf16.mxu0 0
      %4131 = vmatpush1.bf16.msra.mxu0 %v3911
      %4132 = vmatprep.subr.bf16.mxu0 0
      %4133 = vmatpush1.bf16.msra.mxu0 %v3912
      %4134 = vmatprep.subr.bf16.mxu0 0
      %4135 = vmatpush1.bf16.msra.mxu0 %v3913
      %4136 = vmatprep.subr.bf16.mxu0 0
      %4137 = vmatpush1.bf16.msra.mxu0 %v3914
      %4138 = vmatprep.subr.bf16.mxu0 0
      %4139 = vmatpush1.bf16.msra.mxu0 %v3915
      %4140 = vmatprep.subr.bf16.mxu0 0
      %4141 = vmatpush1.bf16.msra.mxu0 %v3916
      %4142 = vmatprep.subr.bf16.mxu0 0
      %4143 = vmatpush1.bf16.msra.mxu0 %v3917
      %4144 = vmatprep.subr.bf16.mxu0 0
      %4145 = vmatpush1.bf16.msra.mxu0 %v3918
      %4146 = vmatprep.subr.bf16.mxu0 0
      %4147 = vmatpush1.bf16.msra.mxu0 %v3919
      %4148 = vmatprep.subr.bf16.mxu0 0
      %4149 = vmatpush1.bf16.msra.mxu0 %v3920
      %4150 = vmatprep.subr.bf16.mxu0 0
      %4151 = vmatpush1.bf16.msra.mxu0 %v3921
      %4152 = vmatprep.subr.bf16.mxu0 0
      %4153 = vmatpush1.bf16.msra.mxu0 %v3922
      %4154 = vmatprep.subr.bf16.mxu0 0
      %4155 = vmatpush1.bf16.msra.mxu0 %v3923
      %4156 = vmatprep.mubr.bf16.mxu0 %v3419
      %4157 = vmatmul.mubr.bf16.gmra.mrb[0].mxu0 %v3418
      %v4158 = vpop.f32.mrb[0].mxu0
      %v4159 = vadd.f32 %v4119, %v4158
      %v4160 = vpop.f32.mrb[0].mxu0
      %v4161 = vpop.f32.mrb[0].mxu0
      %v4162 = vpop.f32.mrb[0].mxu0
      %4163 = vdwg.mxu0
      %4164 = vmatprep.subr.bf16.mxu0 0
      %4165 = vmatpush1.bf16.msra.mxu0 %v3924
      %4166 = vmatprep.subr.bf16.mxu0 0
      %4167 = vmatpush1.bf16.msra.mxu0 %v3925
      %4168 = vmatprep.subr.bf16.mxu0 0
      %4169 = vmatpush1.bf16.msra.mxu0 %v3926
      %4170 = vmatprep.subr.bf16.mxu0 0
      %4171 = vmatpush1.bf16.msra.mxu0 %v3927
      %4172 = vmatprep.subr.bf16.mxu0 0
      %4173 = vmatpush1.bf16.msra.mxu0 %v3928
      %4174 = vmatprep.subr.bf16.mxu0 0
      %4175 = vmatpush1.bf16.msra.mxu0 %v3929
      %4176 = vmatprep.subr.bf16.mxu0 0
      %4177 = vmatpush1.bf16.msra.mxu0 %v3930
      %4178 = vmatprep.subr.bf16.mxu0 0
      %4179 = vmatpush1.bf16.msra.mxu0 %v3931
      %4180 = vmatprep.subr.bf16.mxu0 0
      %4181 = vmatpush1.bf16.msra.mxu0 0
      %4182 = vmatprep.subr.bf16.mxu0 0
      %4183 = vmatpush1.bf16.msra.mxu0 0
      %4184 = vmatprep.subr.bf16.mxu0 0
      %4185 = vmatpush1.bf16.msra.mxu0 0
      %4186 = vmatprep.subr.bf16.mxu0 0
      %4187 = vmatpush1.bf16.msra.mxu0 0
      %4188 = vmatprep.subr.bf16.mxu0 0
      %4189 = vmatpush1.bf16.msra.mxu0 0
      %4190 = vmatprep.subr.bf16.mxu0 0
      %4191 = vmatpush1.bf16.msra.mxu0 0
      %4192 = vmatprep.subr.bf16.mxu0 0
      %4193 = vmatpush1.bf16.msra.mxu0 0
      %4194 = vmatprep.subr.bf16.mxu0 0
      %4195 = vmatpush1.bf16.msra.mxu0 0
      %4196 = vmatprep.mubr.bf16.mxu0 0
      %4197 = vmatmul.mubr.bf16.gmra.mrb[0].mxu0 %v3420
      %v4198 = vpop.f32.mrb[0].mxu0
      %v4199 = vadd.f32 %v4159, %v4198
      %v4200 = vpop.f32.mrb[0].mxu0
      %v4201 = vpop.f32.mrb[0].mxu0
      %v4202 = vpop.f32.mrb[0].mxu0
      %4203 = vdwg.mxu0
      %vm4204 = vcmp.gt.f32.partialorder %v4199, 0.0
      %v4205 = vmul.f32 %v4199, 0.01
      %v4206 = vsel %vm4204, %v4199, %v4205
      %v4207 = vpack.c.bf16 %v4206, %v4206
      %v4208 = vld [vmem:[%s5] sm:$0xf]
      %v4209 = vld [vmem:[%s5 + $0x4] sm:$0xf]
      %v4210 = vld [vmem:[%s5 + $0x8] sm:$0xf]
      %v4211 = vld [vmem:[%s5 + $0xc] sm:$0xf]
      %v4212 = vld [vmem:[%s5 + $0x10] sm:$0xf]
      %v4213 = vld [vmem:[%s5 + $0x14] sm:$0xf]
      %v4214 = vld [vmem:[%s5 + $0x18] sm:$0xf]
      %v4215 = vld [vmem:[%s5 + $0x1c] sm:$0xf]
      %v4216 = vld [vmem:[%s5 + $0x20] sm:$0xf]
      %v4217 = vld [vmem:[%s5 + $0x24] sm:$0xf]
      %v4218 = vld [vmem:[%s5 + $0x28] sm:$0xf]
      %v4219 = vld [vmem:[%s5 + $0x2c] sm:$0xf]
      %v4220 = vld [vmem:[%s5 + $0x30] sm:$0xf]
      %v4221 = vld [vmem:[%s5 + $0x34] sm:$0xf]
      %v4222 = vld [vmem:[%s5 + $0x38] sm:$0xf]
      %v4223 = vld [vmem:[%s5 + $0x3c] sm:$0xf]
      %v4224 = vld [vmem:[%s6] sm:$0x1]
      %v4226 = vlaneseq
      %v4227 = vshrl.u32 %v4226, 7
      %v4228 = vsub.s32 0, %v4227
      %v4229 = vrot.slane %v4224, %v4228
      %v4247 = vunpack.c.l.b16 %v4208
      %v4248 = vunpack.c.l.b16 %v4209
      %v4249 = vunpack.c.l.b16 %v4210
      %v4250 = vunpack.c.l.b16 %v4211
      %v4251 = vunpack.c.l.b16 %v4212
      %v4252 = vunpack.c.l.b16 %v4213
      %v4253 = vunpack.c.l.b16 %v4214
      %v4254 = vunpack.c.l.b16 %v4215
      %v4255 = vunpack.c.l.b16 %v4216
      %v4256 = vunpack.c.l.b16 %v4217
      %v4257 = vunpack.c.l.b16 %v4218
      %v4258 = vunpack.c.l.b16 %v4219
      %v4259 = vunpack.c.l.b16 %v4220
      %v4260 = vunpack.c.l.b16 %v4221
      %v4261 = vunpack.c.l.b16 %v4222
      %v4262 = vunpack.c.l.b16 %v4223
      %v4263 = vpack.c.b16 %v4248, %v4247
      %v4264 = vpack.c.b16 %v4250, %v4249
      %v4265 = vpack.c.b16 %v4252, %v4251
      %v4266 = vpack.c.b16 %v4254, %v4253
      %v4267 = vpack.c.b16 %v4256, %v4255
      %v4268 = vpack.c.b16 %v4258, %v4257
      %v4269 = vpack.c.b16 %v4260, %v4259
      %v4270 = vpack.c.b16 %v4262, %v4261
      %4279 = vmatprep.subr.bf16.mxu0 0
      %4280 = vmatpush1.bf16.msra.mxu0 %v4263
      %4281 = vmatprep.subr.bf16.mxu0 0
      %4282 = vmatpush1.bf16.msra.mxu0 %v4264
      %4283 = vmatprep.subr.bf16.mxu0 0
      %4284 = vmatpush1.bf16.msra.mxu0 %v4265
      %4285 = vmatprep.subr.bf16.mxu0 0
      %4286 = vmatpush1.bf16.msra.mxu0 %v4266
      %4287 = vmatprep.subr.bf16.mxu0 0
      %4288 = vmatpush1.bf16.msra.mxu0 %v4267
      %4289 = vmatprep.subr.bf16.mxu0 0
      %4290 = vmatpush1.bf16.msra.mxu0 %v4268
      %4291 = vmatprep.subr.bf16.mxu0 0
      %4292 = vmatpush1.bf16.msra.mxu0 %v4269
      %4293 = vmatprep.subr.bf16.mxu0 0
      %4294 = vmatpush1.bf16.msra.mxu0 %v4270
      %4295 = vmatprep.subr.bf16.mxu0 0
      %4296 = vmatpush1.bf16.msra.mxu0 0
      %4297 = vmatprep.subr.bf16.mxu0 0
      %4298 = vmatpush1.bf16.msra.mxu0 0
      %4299 = vmatprep.subr.bf16.mxu0 0
      %4300 = vmatpush1.bf16.msra.mxu0 0
      %4301 = vmatprep.subr.bf16.mxu0 0
      %4302 = vmatpush1.bf16.msra.mxu0 0
      %4303 = vmatprep.subr.bf16.mxu0 0
      %4304 = vmatpush1.bf16.msra.mxu0 0
      %4305 = vmatprep.subr.bf16.mxu0 0
      %4306 = vmatpush1.bf16.msra.mxu0 0
      %4307 = vmatprep.subr.bf16.mxu0 0
      %4308 = vmatpush1.bf16.msra.mxu0 0
      %4309 = vmatprep.subr.bf16.mxu0 0
      %4310 = vmatpush1.bf16.msra.mxu0 0
      %4311 = vmatprep.mubr.bf16.mxu0 0
      %4312 = vmatmul.mubr.bf16.gmra.mrb[0].mxu0 %v4207
      %v4313 = vpop.f32.mrb[0].mxu0
      %v4314 = vadd.f32 %v4229, %v4313
      %v4315 = vpop.f32.mrb[0].mxu0
      %v4316 = vpop.f32.mrb[0].mxu0
      %v4317 = vpop.f32.mrb[0].mxu0
      %4318 = vdwg.mxu0
      %s4319 = scalar_lea.vmem %s318, 12
      %4320 = vst [vmem:[%s4319] sm:$0xf] %v4314
      %p4321 = scmp.lt.s32.totalorder %s20, 1
      %s4322 = scalar_select %p4321, %s20, 1
      %s4323 = smul.addr %s4322, 6
      %s4324 = smul.addr %s4323, 8
      %s4325 = scalar_lea.vmem %s7, %s4324
      %p4326 = scmp.lt.s32.totalorder %s20, 1
      %s4327 = scalar_select %p4326, %s20, 1
      %s4328 = smul.addr %s4327, 4
      %s4329 = smul.addr %s4328, 4
      %s4330 = scalar_lea.vmem %s8, %s4329
      // Predicated region
      $region49: #{two_stage_detector_forward.2} parent=47 // pred_check
        %p4331 = pneg %p190
      $region50: #{two_stage_detector_forward.2} parent=47 // pred_check_branch
        %4333 = sbr.rel (%p4331) target = $region52
      $region51: #{two_stage_detector_forward.2} parent=47 // pred_region
        _
      $region52: #{two_stage_detector_forward.2} parent=47 // pred_fallthru
        _
      // Predicated region
      $region53: #{two_stage_detector_forward.2} parent=47 // pred_check
        %p4334 = pneg %p216
      $region54: #{two_stage_detector_forward.2} parent=47 // pred_check_branch
        %4336 = sbr.rel (%p4334) target = $region56
      $region55: #{two_stage_detector_forward.2} parent=47 // pred_region
        _
      $region56: #{two_stage_detector_forward.2} parent=47 // pred_fallthru
        _
    $region48: #{two_stage_detector_forward.2} parent=5 // pred_fallthru
      _
    %p4337 = scmp.le.s32.totalorder 2, %s15
    // Predicated region
    $region57: #{two_stage_detector_forward.2} parent=5 // pred_check
      %p4338 = pneg %p4337
    $region58: #{two_stage_detector_forward.2} parent=5 // pred_check_branch
      %4340 = sbr.rel (%p4338) target = $region60
    $region59: #{two_stage_detector_forward.2} parent=5 // pred_region
      %s4341 = ssub.s32 %s15, 2
      // Predicated region
      $region61: #{two_stage_detector_forward.2} parent=59 // pred_check
        %p4342 = pneg %p196
      $region62: #{two_stage_detector_forward.2} parent=59 // pred_check_branch
        %4344 = sbr.rel (%p4342) target = $region64
      $region63: #{two_stage_detector_forward.2} parent=59 // pred_region
        %p4345 = scmp.lt.s32.totalorder %s21, 1
        %s4346 = scalar_select %p4345, %s21, 1
        %s4347 = smul.addr %s4346, 6
        %s4348 = smul.addr %s4347, 8
        %s4349 = scalar_lea.vmem %s7, %s4348
      $region64: #{two_stage_detector_forward.2} parent=59 // pred_fallthru
        _
      // Predicated region
      $region65: #{two_stage_detector_forward.2} parent=59 // pred_check
        %p4350 = pneg %p222
      $region66: #{two_stage_detector_forward.2} parent=59 // pred_check_branch
        %4352 = sbr.rel (%p4350) target = $region68
      $region67: #{two_stage_detector_forward.2} parent=59 // pred_region
        %p4353 = scmp.lt.s32.totalorder %s21, 1
        %s4354 = scalar_select %p4353, %s21, 1
        %s4355 = smul.addr %s4354, 4
        %s4356 = smul.addr %s4355, 4
        %s4357 = scalar_lea.vmem %s8, %s4356
      $region68: #{two_stage_detector_forward.2} parent=59 // pred_fallthru
        _
    $region60: #{two_stage_detector_forward.2} parent=5 // pred_fallthru
      _
  $region6: #{two_stage_detector_forward.2} parent=0 // loop_footer
    %s19 = sadd.s32 1, %s15
  $region7: #{two_stage_detector_forward.2} parent=0 // loop_footer_branch
    %14 = sbr.rel target = $region3
  $region8: #{two_stage_detector_forward.2} parent=0 // loop_exit
    _

</llo_original>
